<compile_context>
chip_gen: v7x
topology: tpu7x:2x2x1
jax: 0.10.0
libtpu: 0.0.40
codegen_flags: <defaults>
</compile_context>

<pallas_src>
import functools

import jax
import jax.numpy as jnp
from jax.experimental import pallas as pl
from jax.experimental.pallas import tpu as pltpu


def _sq_tanh_half(g):
    """(sigmoid(g) * 2 - 1)**2 == tanh(g / 2)**2; squared once, reused."""
    t = jnp.tanh(0.5 * g)
    return t * t


def _pair_matrix(sq1, sq2, sq1_b=None, sq2_b=None):
    """3x3 matrix of pair-product sums: M[i, j] = sum(sq1[j] * sq2[i])."""
    ii = jax.lax.broadcasted_iota(jnp.int32, (3, 3), 0)
    jj = jax.lax.broadcasted_iota(jnp.int32, (3, 3), 1)
    mat = jnp.zeros((3, 3), jnp.float32)
    for i in range(3):
        for j in range(3):
            s = jnp.sum(sq1[j] * sq2[i])
            if sq1_b is not None:
                s = s + jnp.sum(sq1_b[j] * sq2_b[i])   # cross-tile boundary row
            mat = mat + jnp.where(jnp.logical_and(ii == i, jj == j), s, 0.0)
    return mat


def _exclusion_level_kernel(img1_ref, img2_ref, *rest, tile_h, has_halo,
                            n_row_tiles):
    """Partial pair-product sums for one (batch, row-tile) grid cell.

    img blocks: (1, 3, tile_h, W).  halo blocks (only when the level is row
    tiled): (1, 3, 8, W), whose row 0 is the first image row of the *next*
    row tile.  out block: (1, 1, 2, 3, 3) with
      out[0, 0, 0, i, j] = sum tanh(gx1_j/2)^2 * tanh(gx2_i/2)^2   (H direction)
      out[0, 0, 1, i, j] = same for the W direction.
    """
    if has_halo:
        halo1_ref, halo2_ref, out_ref = rest
        # The cross-tile H gradient exists for every row tile except the last.
        flag = (pl.program_id(1) < n_row_tiles - 1).astype(jnp.float32)
    else:
        (out_ref,) = rest

    # ---- x direction (gradient along H, the sublane axis) ------------------
    sq1, sq2 = [], []                                 # interior: (tile_h-1, W)
    sq1_b, sq2_b = ([], []) if has_halo else (None, None)
    for c in range(3):
        a = img1_ref[0, c].astype(jnp.float32)        # (tile_h, W)
        b = img2_ref[0, c].astype(jnp.float32)
        sq1.append(_sq_tanh_half(a[1:, :] - a[:-1, :]))
        sq2.append(_sq_tanh_half(b[1:, :] - b[:-1, :]))
        if has_halo:
            ha = halo1_ref[0, c, 0:1, :].astype(jnp.float32)   # (1, W)
            hb = halo2_ref[0, c, 0:1, :].astype(jnp.float32)
            # Boundary gradient row between this tile and the next; multiplied
            # by 0 on the last tile so it contributes exactly nothing there.
            sq1_b.append(_sq_tanh_half((ha - a[tile_h - 1:tile_h, :]) * flag))
            sq2_b.append(_sq_tanh_half((hb - b[tile_h - 1:tile_h, :]) * flag))
    out_ref[0, 0, 0] = _pair_matrix(sq1, sq2, sq1_b, sq2_b)

    # ---- y direction (gradient along W, the lane axis) ---------------------
    sq1, sq2 = [], []                                 # (tile_h, W-1)
    for c in range(3):
        a = img1_ref[0, c].astype(jnp.float32)
        b = img2_ref[0, c].astype(jnp.float32)
        sq1.append(_sq_tanh_half(a[:, 1:] - a[:, :-1]))
        sq2.append(_sq_tanh_half(b[:, 1:] - b[:, :-1]))
    out_ref[0, 0, 1] = _pair_matrix(sq1, sq2)


_VMEM_BUDGET = 40 * 1024 * 1024   # tile-selection budget, fits every chip gen


def _tile_vmem_bytes(tile_h, width, itemsize):
    # Two images, double-buffered input blocks + ~8 live f32 (tile_h, W) planes.
    return 4 * 3 * tile_h * width * itemsize + 8 * tile_h * width * 4


def _choose_row_tile(height, width, itemsize, row_block):
    """Largest H tile that is a multiple of 8, divides H, <= row_block, and
    fits the VMEM budget; otherwise the whole H (untiled)."""
    if height <= row_block or height % 8 != 0:
        return height
    cands = [t for t in range(8, row_block + 1, 8) if height % t == 0]
    if not cands:
        return height
    fitting = [t for t in cands
               if _tile_vmem_bytes(t, width, itemsize) <= _VMEM_BUDGET]
    return max(fitting) if fitting else min(cands)


def _level_partial_sums(img1, img2, row_block):
    """Per (batch, row-tile) pair-product sums for one level: (N, nH, 2, 3, 3)."""
    N, C, H, W = img1.shape
    assert C == 3, "ExclusionLoss assumes 3-channel (RGB) images"
    assert H >= 2 and W >= 2, "spatial dims too small for gradients"

    itemsize = jnp.dtype(img1.dtype).itemsize
    tile_h = _choose_row_tile(H, W, itemsize, row_block)
    n_row_tiles = H // tile_h
    has_halo = n_row_tiles > 1

    img_spec = pl.BlockSpec((1, C, tile_h, W), lambda n, h: (n, 0, h, 0))
    out_spec = pl.BlockSpec((1, 1, 2, 3, 3), lambda n, h: (n, h, 0, 0, 0))

    in_specs = [img_spec, img_spec]
    operands = (img1, img2)
    if has_halo:
        halo_step = tile_h // 8          # halo blocks are 8 rows tall
        halo_spec = pl.BlockSpec(
            (1, C, 8, W),
            lambda n, h: (n, 0,
                          jnp.minimum(h + 1, n_row_tiles - 1) * halo_step, 0))
        in_specs += [halo_spec, halo_spec]
        operands += (img1, img2)

    kernel = functools.partial(_exclusion_level_kernel, tile_h=tile_h,
                               has_halo=has_halo, n_row_tiles=n_row_tiles)

    n_px = N * C * H * W
    cost = pl.CostEstimate(
        flops=int(60 * n_px),             # grads, squares, 9+9 pair mul-adds
        transcendentals=int(4 * n_px),    # tanh: 2 images x 2 directions
        bytes_accessed=int(2 * n_px * itemsize) + N * n_row_tiles * 2 * 9 * 4,
    )
    vmem_limit = int(min(48 * 1024 * 1024,
                         max(32 * 1024 * 1024,
                             int(1.5 * _tile_vmem_bytes(tile_h, W, itemsize)))))

    return pl.pallas_call(
        kernel,
        out_shape=jax.ShapeDtypeStruct((N, n_row_tiles, 2, 3, 3), jnp.float32),
        grid=(N, n_row_tiles),
        in_specs=in_specs,
        out_specs=out_spec,
        compiler_params=pltpu.CompilerParams(
            dimension_semantics=("parallel", "parallel"),
            vmem_limit_bytes=vmem_limit),
        cost_estimate=cost,
    )(*operands)


def _avg_pool_2x2(x):
    """AvgPool2d(kernel=2, stride=2), NCHW; matches PyTorch (floor, no pad)."""
    N, C, H, W = x.shape
    H2, W2 = H // 2, W // 2
    x = x[:, :, : 2 * H2, : 2 * W2]
    x = x.reshape(N, C, H2, 2, W2, 2)
    return x.mean(axis=(3, 5))


@functools.partial(jax.jit, static_argnames=("level", "row_block"))
def exclusion_loss(img1, img2, level=3, row_block=256):
    """JAX/Pallas equivalent of ExclusionLoss(level).forward(img1, img2)."""
    assert img1.shape == img2.shape
    N = img1.shape[0]

    gradx_terms, grady_terms = [], []
    for l in range(level):
        _, _, Hl, Wl = img1.shape
        partial = _level_partial_sums(img1, img2, row_block)   # (N, nH, 2, 3, 3)
        sums = jnp.sum(partial, axis=(0, 1))                   # (2, 3, 3)
        mean_x = sums[0] / jnp.float32(N * (Hl - 1) * Wl)
        mean_y = sums[1] / jnp.float32(N * Hl * (Wl - 1))
        gradx_terms.append(jnp.sum(mean_x ** 0.25))
        grady_terms.append(jnp.sum(mean_y ** 0.25))
        if l + 1 < level:
            img1 = _avg_pool_2x2(img1)
            img2 = _avg_pool_2x2(img2)

    loss_gradxy = (sum(gradx_terms) + sum(grady_terms)) / (level * 9)
    return loss_gradxy / 2.0


def _ref_exclusion_loss(img1, img2, level=3):
    """Pure-JAX reference mirroring the PyTorch module exactly."""
    def compute_gradient(img):
        gradx = img[:, :, 1:, :] - img[:, :, :-1, :]
        grady = img[:, :, :, 1:] - img[:, :, :, :-1]
        return gradx, grady

    def all_comb(g1, g2):
        v = []
        for i in range(3):
            for j in range(3):
                v.append(jnp.mean(g1[:, j] ** 2 * g2[:, i] ** 2) ** 0.25)
        return v

    gradx_loss, grady_loss = [], []
    for _ in range(level):
        gx1, gy1 = compute_gradient(img1)
        gx2, gy2 = compute_gradient(img2)
        gx1s = jax.nn.sigmoid(gx1) * 2 - 1
        gy1s = jax.nn.sigmoid(gy1) * 2 - 1
        gx2s = jax.nn.sigmoid(gx2) * 2 - 1
        gy2s = jax.nn.sigmoid(gy2) * 2 - 1
        gradx_loss += all_comb(gx1s, gx2s)
        grady_loss += all_comb(gy1s, gy2s)
        img1 = _avg_pool_2x2(img1)
        img2 = _avg_pool_2x2(img2)

    loss_gradxy = (sum(gradx_loss) / (level * 9)
                   + sum(grady_loss) / (level * 9))
    return loss_gradxy / 2.0


if __name__ == "__main__":
    key = jax.random.PRNGKey(0)
    k1, k2 = jax.random.split(key)

    N, C, H, W = 2, 3, 16, 16
    img1 = jax.random.uniform(k1, (N, C, H, W), dtype=jnp.float32)
    img2 = jax.random.uniform(k2, (N, C, H, W), dtype=jnp.float32)

    ref = _ref_exclusion_loss(img1, img2, level=3)

    # Default path: every pyramid level fits in a single row tile (nH = 1).
    out = jax.block_until_ready(exclusion_loss(img1, img2, level=3))
    assert bool(jnp.isfinite(out)), out
    assert jnp.allclose(out, ref, rtol=1e-4, atol=1e-5), (out, ref)

    # Force the H-tiled + halo path at level 0 (tile_h=8, nH=2) to exercise
    # the cross-tile boundary handling used for large images.
    out_tiled = jax.block_until_ready(
        exclusion_loss(img1, img2, level=3, row_block=8))
    assert jnp.allclose(out_tiled, ref, rtol=1e-4, atol=1e-5), (out_tiled, ref)

    print("KERNEL_OK")
</pallas_src>

<mosaic_0001>
module attributes {stable_mosaic.version = 11 : i64} {
  func.func @_exclusion_level_kernel(%arg0: i32, %arg1: i32, %arg2: memref<1x3x8x8xf32, #tpu.memory_space<vmem>>, %arg3: memref<1x3x8x8xf32, #tpu.memory_space<vmem>>, %arg4: memref<1x1x2x3x3xf32, #tpu.memory_space<vmem>>) attributes {dimension_semantics = [#tpu.dimension_semantics<parallel>, #tpu.dimension_semantics<parallel>], iteration_bounds = array<i64: 2, 1>, scalar_prefetch = 0 : i64, scratch_operands = 0 : i64, tpu.core_type = #tpu.core_type<tc>, window_params = [{transform_indices = @transform_0, window_bounds = array<i64: 1, 3, 8, 8>}, {transform_indices = @transform_1, window_bounds = array<i64: 1, 3, 8, 8>}, {transform_indices = @transform_2, window_bounds = array<i64: 1, 1, 2, 3, 3>}]} {
    %c0 = arith.constant 0 : index
    %c0_0 = arith.constant 0 : index
    %c0_1 = arith.constant 0 : index
    %c0_2 = arith.constant 0 : index
    %0 = vector.load %arg2[%c0, %c0_0, %c0_1, %c0_2] : memref<1x3x8x8xf32, #tpu.memory_space<vmem>>, vector<1x1x8x8xf32>
    %1 = vector.shape_cast %0 : vector<1x1x8x8xf32> to vector<8x8xf32>
    %c0_3 = arith.constant 0 : index
    %c0_4 = arith.constant 0 : index
    %c0_5 = arith.constant 0 : index
    %c0_6 = arith.constant 0 : index
    %2 = vector.load %arg3[%c0_3, %c0_4, %c0_5, %c0_6] : memref<1x3x8x8xf32, #tpu.memory_space<vmem>>, vector<1x1x8x8xf32>
    %3 = vector.shape_cast %2 : vector<1x1x8x8xf32> to vector<8x8xf32>
    %4 = vector.extract_strided_slice %1 {offsets = [1, 0], sizes = [7, 8], strides = [1, 1]} : vector<8x8xf32> to vector<7x8xf32>
    %5 = vector.extract_strided_slice %1 {offsets = [0, 0], sizes = [7, 8], strides = [1, 1]} : vector<8x8xf32> to vector<7x8xf32>
    %6 = arith.subf %4, %5 : vector<7x8xf32>
    %cst = arith.constant 5.000000e-01 : f32
    %7 = vector.broadcast %cst : f32 to vector<7x8xf32>
    %8 = arith.mulf %7, %6 : vector<7x8xf32>
    %9 = math.tanh %8 : vector<7x8xf32>
    %10 = arith.mulf %9, %9 : vector<7x8xf32>
    %11 = vector.extract_strided_slice %3 {offsets = [1, 0], sizes = [7, 8], strides = [1, 1]} : vector<8x8xf32> to vector<7x8xf32>
    %12 = vector.extract_strided_slice %3 {offsets = [0, 0], sizes = [7, 8], strides = [1, 1]} : vector<8x8xf32> to vector<7x8xf32>
    %13 = arith.subf %11, %12 : vector<7x8xf32>
    %cst_7 = arith.constant 5.000000e-01 : f32
    %14 = vector.broadcast %cst_7 : f32 to vector<7x8xf32>
    %15 = arith.mulf %14, %13 : vector<7x8xf32>
    %16 = math.tanh %15 : vector<7x8xf32>
    %17 = arith.mulf %16, %16 : vector<7x8xf32>
    %c0_8 = arith.constant 0 : index
    %c1 = arith.constant 1 : index
    %c0_9 = arith.constant 0 : index
    %c0_10 = arith.constant 0 : index
    %18 = vector.load %arg2[%c0_8, %c1, %c0_9, %c0_10] : memref<1x3x8x8xf32, #tpu.memory_space<vmem>>, vector<1x1x8x8xf32>
    %19 = vector.shape_cast %18 : vector<1x1x8x8xf32> to vector<8x8xf32>
    %c0_11 = arith.constant 0 : index
    %c1_12 = arith.constant 1 : index
    %c0_13 = arith.constant 0 : index
    %c0_14 = arith.constant 0 : index
    %20 = vector.load %arg3[%c0_11, %c1_12, %c0_13, %c0_14] : memref<1x3x8x8xf32, #tpu.memory_space<vmem>>, vector<1x1x8x8xf32>
    %21 = vector.shape_cast %20 : vector<1x1x8x8xf32> to vector<8x8xf32>
    %22 = vector.extract_strided_slice %19 {offsets = [1, 0], sizes = [7, 8], strides = [1, 1]} : vector<8x8xf32> to vector<7x8xf32>
    %23 = vector.extract_strided_slice %19 {offsets = [0, 0], sizes = [7, 8], strides = [1, 1]} : vector<8x8xf32> to vector<7x8xf32>
    %24 = arith.subf %22, %23 : vector<7x8xf32>
    %cst_15 = arith.constant 5.000000e-01 : f32
    %25 = vector.broadcast %cst_15 : f32 to vector<7x8xf32>
    %26 = arith.mulf %25, %24 : vector<7x8xf32>
    %27 = math.tanh %26 : vector<7x8xf32>
    %28 = arith.mulf %27, %27 : vector<7x8xf32>
    %29 = vector.extract_strided_slice %21 {offsets = [1, 0], sizes = [7, 8], strides = [1, 1]} : vector<8x8xf32> to vector<7x8xf32>
    %30 = vector.extract_strided_slice %21 {offsets = [0, 0], sizes = [7, 8], strides = [1, 1]} : vector<8x8xf32> to vector<7x8xf32>
    %31 = arith.subf %29, %30 : vector<7x8xf32>
    %cst_16 = arith.constant 5.000000e-01 : f32
    %32 = vector.broadcast %cst_16 : f32 to vector<7x8xf32>
    %33 = arith.mulf %32, %31 : vector<7x8xf32>
    %34 = math.tanh %33 : vector<7x8xf32>
    %35 = arith.mulf %34, %34 : vector<7x8xf32>
    %c0_17 = arith.constant 0 : index
    %c2 = arith.constant 2 : index
    %c0_18 = arith.constant 0 : index
    %c0_19 = arith.constant 0 : index
    %36 = vector.load %arg2[%c0_17, %c2, %c0_18, %c0_19] : memref<1x3x8x8xf32, #tpu.memory_space<vmem>>, vector<1x1x8x8xf32>
    %37 = vector.shape_cast %36 : vector<1x1x8x8xf32> to vector<8x8xf32>
    %c0_20 = arith.constant 0 : index
    %c2_21 = arith.constant 2 : index
    %c0_22 = arith.constant 0 : index
    %c0_23 = arith.constant 0 : index
    %38 = vector.load %arg3[%c0_20, %c2_21, %c0_22, %c0_23] : memref<1x3x8x8xf32, #tpu.memory_space<vmem>>, vector<1x1x8x8xf32>
    %39 = vector.shape_cast %38 : vector<1x1x8x8xf32> to vector<8x8xf32>
    %40 = vector.extract_strided_slice %37 {offsets = [1, 0], sizes = [7, 8], strides = [1, 1]} : vector<8x8xf32> to vector<7x8xf32>
    %41 = vector.extract_strided_slice %37 {offsets = [0, 0], sizes = [7, 8], strides = [1, 1]} : vector<8x8xf32> to vector<7x8xf32>
    %42 = arith.subf %40, %41 : vector<7x8xf32>
    %cst_24 = arith.constant 5.000000e-01 : f32
    %43 = vector.broadcast %cst_24 : f32 to vector<7x8xf32>
    %44 = arith.mulf %43, %42 : vector<7x8xf32>
    %45 = math.tanh %44 : vector<7x8xf32>
    %46 = arith.mulf %45, %45 : vector<7x8xf32>
    %47 = vector.extract_strided_slice %39 {offsets = [1, 0], sizes = [7, 8], strides = [1, 1]} : vector<8x8xf32> to vector<7x8xf32>
    %48 = vector.extract_strided_slice %39 {offsets = [0, 0], sizes = [7, 8], strides = [1, 1]} : vector<8x8xf32> to vector<7x8xf32>
    %49 = arith.subf %47, %48 : vector<7x8xf32>
    %cst_25 = arith.constant 5.000000e-01 : f32
    %50 = vector.broadcast %cst_25 : f32 to vector<7x8xf32>
    %51 = arith.mulf %50, %49 : vector<7x8xf32>
    %52 = math.tanh %51 : vector<7x8xf32>
    %53 = arith.mulf %52, %52 : vector<7x8xf32>
    %54 = tpu.iota {dimensions = array<i32: 0>} : vector<3x3xi32>
    %55 = tpu.iota {dimensions = array<i32: 1>} : vector<3x3xi32>
    %cst_26 = arith.constant 0.000000e+00 : f32
    %56 = vector.broadcast %cst_26 : f32 to vector<3x3xf32>
    %57 = arith.mulf %10, %17 : vector<7x8xf32>
    %58 = vector.shape_cast %57 : vector<7x8xf32> to vector<1x7x8xf32>
    %cst_27 = arith.constant dense<0.000000e+00> : vector<1xf32>
    %59 = vector.multi_reduction <add>, %58, %cst_27 [1, 2] : vector<1x7x8xf32> to vector<1xf32>
    %60 = vector.shape_cast %59 : vector<1xf32> to vector<1x1x1xf32>
    %61 = vector.extract %60[0, 0, 0] : f32 from vector<1x1x1xf32>
    %c0_i32 = arith.constant 0 : i32
    %62 = vector.broadcast %c0_i32 : i32 to vector<3x3xi32>
    %63 = arith.cmpi eq, %54, %62 : vector<3x3xi32>
    %c0_i32_28 = arith.constant 0 : i32
    %64 = vector.broadcast %c0_i32_28 : i32 to vector<3x3xi32>
    %65 = arith.cmpi eq, %55, %64 : vector<3x3xi32>
    %66 = arith.andi %63, %65 : vector<3x3xi1>
    %cst_29 = arith.constant 0.000000e+00 : f32
    %67 = vector.broadcast %61 : f32 to vector<3x3xf32>
    %68 = vector.broadcast %cst_29 : f32 to vector<3x3xf32>
    %69 = arith.select %66, %67, %68 : vector<3x3xi1>, vector<3x3xf32>
    %70 = arith.addf %56, %69 : vector<3x3xf32>
    %71 = arith.mulf %28, %17 : vector<7x8xf32>
    %72 = vector.shape_cast %71 : vector<7x8xf32> to vector<1x7x8xf32>
    %cst_30 = arith.constant dense<0.000000e+00> : vector<1xf32>
    %73 = vector.multi_reduction <add>, %72, %cst_30 [1, 2] : vector<1x7x8xf32> to vector<1xf32>
    %74 = vector.shape_cast %73 : vector<1xf32> to vector<1x1x1xf32>
    %75 = vector.extract %74[0, 0, 0] : f32 from vector<1x1x1xf32>
    %c0_i32_31 = arith.constant 0 : i32
    %76 = vector.broadcast %c0_i32_31 : i32 to vector<3x3xi32>
    %77 = arith.cmpi eq, %54, %76 : vector<3x3xi32>
    %c1_i32 = arith.constant 1 : i32
    %78 = vector.broadcast %c1_i32 : i32 to vector<3x3xi32>
    %79 = arith.cmpi eq, %55, %78 : vector<3x3xi32>
    %80 = arith.andi %77, %79 : vector<3x3xi1>
    %cst_32 = arith.constant 0.000000e+00 : f32
    %81 = vector.broadcast %75 : f32 to vector<3x3xf32>
    %82 = vector.broadcast %cst_32 : f32 to vector<3x3xf32>
    %83 = arith.select %80, %81, %82 : vector<3x3xi1>, vector<3x3xf32>
    %84 = arith.addf %70, %83 : vector<3x3xf32>
    %85 = arith.mulf %46, %17 : vector<7x8xf32>
    %86 = vector.shape_cast %85 : vector<7x8xf32> to vector<1x7x8xf32>
    %cst_33 = arith.constant dense<0.000000e+00> : vector<1xf32>
    %87 = vector.multi_reduction <add>, %86, %cst_33 [1, 2] : vector<1x7x8xf32> to vector<1xf32>
    %88 = vector.shape_cast %87 : vector<1xf32> to vector<1x1x1xf32>
    %89 = vector.extract %88[0, 0, 0] : f32 from vector<1x1x1xf32>
    %c0_i32_34 = arith.constant 0 : i32
    %90 = vector.broadcast %c0_i32_34 : i32 to vector<3x3xi32>
    %91 = arith.cmpi eq, %54, %90 : vector<3x3xi32>
    %c2_i32 = arith.constant 2 : i32
    %92 = vector.broadcast %c2_i32 : i32 to vector<3x3xi32>
    %93 = arith.cmpi eq, %55, %92 : vector<3x3xi32>
    %94 = arith.andi %91, %93 : vector<3x3xi1>
    %cst_35 = arith.constant 0.000000e+00 : f32
    %95 = vector.broadcast %89 : f32 to vector<3x3xf32>
    %96 = vector.broadcast %cst_35 : f32 to vector<3x3xf32>
    %97 = arith.select %94, %95, %96 : vector<3x3xi1>, vector<3x3xf32>
    %98 = arith.addf %84, %97 : vector<3x3xf32>
    %99 = arith.mulf %10, %35 : vector<7x8xf32>
    %100 = vector.shape_cast %99 : vector<7x8xf32> to vector<1x7x8xf32>
    %cst_36 = arith.constant dense<0.000000e+00> : vector<1xf32>
    %101 = vector.multi_reduction <add>, %100, %cst_36 [1, 2] : vector<1x7x8xf32> to vector<1xf32>
    %102 = vector.shape_cast %101 : vector<1xf32> to vector<1x1x1xf32>
    %103 = vector.extract %102[0, 0, 0] : f32 from vector<1x1x1xf32>
    %c1_i32_37 = arith.constant 1 : i32
    %104 = vector.broadcast %c1_i32_37 : i32 to vector<3x3xi32>
    %105 = arith.cmpi eq, %54, %104 : vector<3x3xi32>
    %c0_i32_38 = arith.constant 0 : i32
    %106 = vector.broadcast %c0_i32_38 : i32 to vector<3x3xi32>
    %107 = arith.cmpi eq, %55, %106 : vector<3x3xi32>
    %108 = arith.andi %105, %107 : vector<3x3xi1>
    %cst_39 = arith.constant 0.000000e+00 : f32
    %109 = vector.broadcast %103 : f32 to vector<3x3xf32>
    %110 = vector.broadcast %cst_39 : f32 to vector<3x3xf32>
    %111 = arith.select %108, %109, %110 : vector<3x3xi1>, vector<3x3xf32>
    %112 = arith.addf %98, %111 : vector<3x3xf32>
    %113 = arith.mulf %28, %35 : vector<7x8xf32>
    %114 = vector.shape_cast %113 : vector<7x8xf32> to vector<1x7x8xf32>
    %cst_40 = arith.constant dense<0.000000e+00> : vector<1xf32>
    %115 = vector.multi_reduction <add>, %114, %cst_40 [1, 2] : vector<1x7x8xf32> to vector<1xf32>
    %116 = vector.shape_cast %115 : vector<1xf32> to vector<1x1x1xf32>
    %117 = vector.extract %116[0, 0, 0] : f32 from vector<1x1x1xf32>
    %c1_i32_41 = arith.constant 1 : i32
    %118 = vector.broadcast %c1_i32_41 : i32 to vector<3x3xi32>
    %119 = arith.cmpi eq, %54, %118 : vector<3x3xi32>
    %c1_i32_42 = arith.constant 1 : i32
    %120 = vector.broadcast %c1_i32_42 : i32 to vector<3x3xi32>
    %121 = arith.cmpi eq, %55, %120 : vector<3x3xi32>
    %122 = arith.andi %119, %121 : vector<3x3xi1>
    %cst_43 = arith.constant 0.000000e+00 : f32
    %123 = vector.broadcast %117 : f32 to vector<3x3xf32>
    %124 = vector.broadcast %cst_43 : f32 to vector<3x3xf32>
    %125 = arith.select %122, %123, %124 : vector<3x3xi1>, vector<3x3xf32>
    %126 = arith.addf %112, %125 : vector<3x3xf32>
    %127 = arith.mulf %46, %35 : vector<7x8xf32>
    %128 = vector.shape_cast %127 : vector<7x8xf32> to vector<1x7x8xf32>
    %cst_44 = arith.constant dense<0.000000e+00> : vector<1xf32>
    %129 = vector.multi_reduction <add>, %128, %cst_44 [1, 2] : vector<1x7x8xf32> to vector<1xf32>
    %130 = vector.shape_cast %129 : vector<1xf32> to vector<1x1x1xf32>
    %131 = vector.extract %130[0, 0, 0] : f32 from vector<1x1x1xf32>
    %c1_i32_45 = arith.constant 1 : i32
    %132 = vector.broadcast %c1_i32_45 : i32 to vector<3x3xi32>
    %133 = arith.cmpi eq, %54, %132 : vector<3x3xi32>
    %c2_i32_46 = arith.constant 2 : i32
    %134 = vector.broadcast %c2_i32_46 : i32 to vector<3x3xi32>
    %135 = arith.cmpi eq, %55, %134 : vector<3x3xi32>
    %136 = arith.andi %133, %135 : vector<3x3xi1>
    %cst_47 = arith.constant 0.000000e+00 : f32
    %137 = vector.broadcast %131 : f32 to vector<3x3xf32>
    %138 = vector.broadcast %cst_47 : f32 to vector<3x3xf32>
    %139 = arith.select %136, %137, %138 : vector<3x3xi1>, vector<3x3xf32>
    %140 = arith.addf %126, %139 : vector<3x3xf32>
    %141 = arith.mulf %10, %53 : vector<7x8xf32>
    %142 = vector.shape_cast %141 : vector<7x8xf32> to vector<1x7x8xf32>
    %cst_48 = arith.constant dense<0.000000e+00> : vector<1xf32>
    %143 = vector.multi_reduction <add>, %142, %cst_48 [1, 2] : vector<1x7x8xf32> to vector<1xf32>
    %144 = vector.shape_cast %143 : vector<1xf32> to vector<1x1x1xf32>
    %145 = vector.extract %144[0, 0, 0] : f32 from vector<1x1x1xf32>
    %c2_i32_49 = arith.constant 2 : i32
    %146 = vector.broadcast %c2_i32_49 : i32 to vector<3x3xi32>
    %147 = arith.cmpi eq, %54, %146 : vector<3x3xi32>
    %c0_i32_50 = arith.constant 0 : i32
    %148 = vector.broadcast %c0_i32_50 : i32 to vector<3x3xi32>
    %149 = arith.cmpi eq, %55, %148 : vector<3x3xi32>
    %150 = arith.andi %147, %149 : vector<3x3xi1>
    %cst_51 = arith.constant 0.000000e+00 : f32
    %151 = vector.broadcast %145 : f32 to vector<3x3xf32>
    %152 = vector.broadcast %cst_51 : f32 to vector<3x3xf32>
    %153 = arith.select %150, %151, %152 : vector<3x3xi1>, vector<3x3xf32>
    %154 = arith.addf %140, %153 : vector<3x3xf32>
    %155 = arith.mulf %28, %53 : vector<7x8xf32>
    %156 = vector.shape_cast %155 : vector<7x8xf32> to vector<1x7x8xf32>
    %cst_52 = arith.constant dense<0.000000e+00> : vector<1xf32>
    %157 = vector.multi_reduction <add>, %156, %cst_52 [1, 2] : vector<1x7x8xf32> to vector<1xf32>
    %158 = vector.shape_cast %157 : vector<1xf32> to vector<1x1x1xf32>
    %159 = vector.extract %158[0, 0, 0] : f32 from vector<1x1x1xf32>
    %c2_i32_53 = arith.constant 2 : i32
    %160 = vector.broadcast %c2_i32_53 : i32 to vector<3x3xi32>
    %161 = arith.cmpi eq, %54, %160 : vector<3x3xi32>
    %c1_i32_54 = arith.constant 1 : i32
    %162 = vector.broadcast %c1_i32_54 : i32 to vector<3x3xi32>
    %163 = arith.cmpi eq, %55, %162 : vector<3x3xi32>
    %164 = arith.andi %161, %163 : vector<3x3xi1>
    %cst_55 = arith.constant 0.000000e+00 : f32
    %165 = vector.broadcast %159 : f32 to vector<3x3xf32>
    %166 = vector.broadcast %cst_55 : f32 to vector<3x3xf32>
    %167 = arith.select %164, %165, %166 : vector<3x3xi1>, vector<3x3xf32>
    %168 = arith.addf %154, %167 : vector<3x3xf32>
    %169 = arith.mulf %46, %53 : vector<7x8xf32>
    %170 = vector.shape_cast %169 : vector<7x8xf32> to vector<1x7x8xf32>
    %cst_56 = arith.constant dense<0.000000e+00> : vector<1xf32>
    %171 = vector.multi_reduction <add>, %170, %cst_56 [1, 2] : vector<1x7x8xf32> to vector<1xf32>
    %172 = vector.shape_cast %171 : vector<1xf32> to vector<1x1x1xf32>
    %173 = vector.extract %172[0, 0, 0] : f32 from vector<1x1x1xf32>
    %c2_i32_57 = arith.constant 2 : i32
    %174 = vector.broadcast %c2_i32_57 : i32 to vector<3x3xi32>
    %175 = arith.cmpi eq, %54, %174 : vector<3x3xi32>
    %c2_i32_58 = arith.constant 2 : i32
    %176 = vector.broadcast %c2_i32_58 : i32 to vector<3x3xi32>
    %177 = arith.cmpi eq, %55, %176 : vector<3x3xi32>
    %178 = arith.andi %175, %177 : vector<3x3xi1>
    %cst_59 = arith.constant 0.000000e+00 : f32
    %179 = vector.broadcast %173 : f32 to vector<3x3xf32>
    %180 = vector.broadcast %cst_59 : f32 to vector<3x3xf32>
    %181 = arith.select %178, %179, %180 : vector<3x3xi1>, vector<3x3xf32>
    %182 = arith.addf %168, %181 : vector<3x3xf32>
    %c0_60 = arith.constant 0 : index
    %c0_61 = arith.constant 0 : index
    %c0_62 = arith.constant 0 : index
    %c0_63 = arith.constant 0 : index
    %c0_64 = arith.constant 0 : index
    %183 = vector.load %arg4[%c0_60, %c0_61, %c0_62, %c0_63, %c0_64] : memref<1x1x2x3x3xf32, #tpu.memory_space<vmem>>, vector<1x1x1x3x3xf32>
    %184 = vector.shape_cast %183 : vector<1x1x1x3x3xf32> to vector<3x3xf32>
    %185 = vector.shape_cast %182 : vector<3x3xf32> to vector<1x1x1x3x3xf32>
    tpu.vector_store %arg4[%c0_60, %c0_61, %c0_62, %c0_63, %c0_64], %185 {strides = array<i32>} : memref<1x1x2x3x3xf32, #tpu.memory_space<vmem>>, vector<1x1x1x3x3xf32>,
    %c0_65 = arith.constant 0 : index
    %c0_66 = arith.constant 0 : index
    %c0_67 = arith.constant 0 : index
    %c0_68 = arith.constant 0 : index
    %186 = vector.load %arg2[%c0_65, %c0_66, %c0_67, %c0_68] : memref<1x3x8x8xf32, #tpu.memory_space<vmem>>, vector<1x1x8x8xf32>
    %187 = vector.shape_cast %186 : vector<1x1x8x8xf32> to vector<8x8xf32>
    %c0_69 = arith.constant 0 : index
    %c0_70 = arith.constant 0 : index
    %c0_71 = arith.constant 0 : index
    %c0_72 = arith.constant 0 : index
    %188 = vector.load %arg3[%c0_69, %c0_70, %c0_71, %c0_72] : memref<1x3x8x8xf32, #tpu.memory_space<vmem>>, vector<1x1x8x8xf32>
    %189 = vector.shape_cast %188 : vector<1x1x8x8xf32> to vector<8x8xf32>
    %190 = vector.extract_strided_slice %187 {offsets = [0, 1], sizes = [8, 7], strides = [1, 1]} : vector<8x8xf32> to vector<8x7xf32>
    %191 = vector.extract_strided_slice %187 {offsets = [0, 0], sizes = [8, 7], strides = [1, 1]} : vector<8x8xf32> to vector<8x7xf32>
    %192 = arith.subf %190, %191 : vector<8x7xf32>
    %cst_73 = arith.constant 5.000000e-01 : f32
    %193 = vector.broadcast %cst_73 : f32 to vector<8x7xf32>
    %194 = arith.mulf %193, %192 : vector<8x7xf32>
    %195 = math.tanh %194 : vector<8x7xf32>
    %196 = arith.mulf %195, %195 : vector<8x7xf32>
    %197 = vector.extract_strided_slice %189 {offsets = [0, 1], sizes = [8, 7], strides = [1, 1]} : vector<8x8xf32> to vector<8x7xf32>
    %198 = vector.extract_strided_slice %189 {offsets = [0, 0], sizes = [8, 7], strides = [1, 1]} : vector<8x8xf32> to vector<8x7xf32>
    %199 = arith.subf %197, %198 : vector<8x7xf32>
    %cst_74 = arith.constant 5.000000e-01 : f32
    %200 = vector.broadcast %cst_74 : f32 to vector<8x7xf32>
    %201 = arith.mulf %200, %199 : vector<8x7xf32>
    %202 = math.tanh %201 : vector<8x7xf32>
    %203 = arith.mulf %202, %202 : vector<8x7xf32>
    %c0_75 = arith.constant 0 : index
    %c1_76 = arith.constant 1 : index
    %c0_77 = arith.constant 0 : index
    %c0_78 = arith.constant 0 : index
    %204 = vector.load %arg2[%c0_75, %c1_76, %c0_77, %c0_78] : memref<1x3x8x8xf32, #tpu.memory_space<vmem>>, vector<1x1x8x8xf32>
    %205 = vector.shape_cast %204 : vector<1x1x8x8xf32> to vector<8x8xf32>
    %c0_79 = arith.constant 0 : index
    %c1_80 = arith.constant 1 : index
    %c0_81 = arith.constant 0 : index
    %c0_82 = arith.constant 0 : index
    %206 = vector.load %arg3[%c0_79, %c1_80, %c0_81, %c0_82] : memref<1x3x8x8xf32, #tpu.memory_space<vmem>>, vector<1x1x8x8xf32>
    %207 = vector.shape_cast %206 : vector<1x1x8x8xf32> to vector<8x8xf32>
    %208 = vector.extract_strided_slice %205 {offsets = [0, 1], sizes = [8, 7], strides = [1, 1]} : vector<8x8xf32> to vector<8x7xf32>
    %209 = vector.extract_strided_slice %205 {offsets = [0, 0], sizes = [8, 7], strides = [1, 1]} : vector<8x8xf32> to vector<8x7xf32>
    %210 = arith.subf %208, %209 : vector<8x7xf32>
    %cst_83 = arith.constant 5.000000e-01 : f32
    %211 = vector.broadcast %cst_83 : f32 to vector<8x7xf32>
    %212 = arith.mulf %211, %210 : vector<8x7xf32>
    %213 = math.tanh %212 : vector<8x7xf32>
    %214 = arith.mulf %213, %213 : vector<8x7xf32>
    %215 = vector.extract_strided_slice %207 {offsets = [0, 1], sizes = [8, 7], strides = [1, 1]} : vector<8x8xf32> to vector<8x7xf32>
    %216 = vector.extract_strided_slice %207 {offsets = [0, 0], sizes = [8, 7], strides = [1, 1]} : vector<8x8xf32> to vector<8x7xf32>
    %217 = arith.subf %215, %216 : vector<8x7xf32>
    %cst_84 = arith.constant 5.000000e-01 : f32
    %218 = vector.broadcast %cst_84 : f32 to vector<8x7xf32>
    %219 = arith.mulf %218, %217 : vector<8x7xf32>
    %220 = math.tanh %219 : vector<8x7xf32>
    %221 = arith.mulf %220, %220 : vector<8x7xf32>
    %c0_85 = arith.constant 0 : index
    %c2_86 = arith.constant 2 : index
    %c0_87 = arith.constant 0 : index
    %c0_88 = arith.constant 0 : index
    %222 = vector.load %arg2[%c0_85, %c2_86, %c0_87, %c0_88] : memref<1x3x8x8xf32, #tpu.memory_space<vmem>>, vector<1x1x8x8xf32>
    %223 = vector.shape_cast %222 : vector<1x1x8x8xf32> to vector<8x8xf32>
    %c0_89 = arith.constant 0 : index
    %c2_90 = arith.constant 2 : index
    %c0_91 = arith.constant 0 : index
    %c0_92 = arith.constant 0 : index
    %224 = vector.load %arg3[%c0_89, %c2_90, %c0_91, %c0_92] : memref<1x3x8x8xf32, #tpu.memory_space<vmem>>, vector<1x1x8x8xf32>
    %225 = vector.shape_cast %224 : vector<1x1x8x8xf32> to vector<8x8xf32>
    %226 = vector.extract_strided_slice %223 {offsets = [0, 1], sizes = [8, 7], strides = [1, 1]} : vector<8x8xf32> to vector<8x7xf32>
    %227 = vector.extract_strided_slice %223 {offsets = [0, 0], sizes = [8, 7], strides = [1, 1]} : vector<8x8xf32> to vector<8x7xf32>
    %228 = arith.subf %226, %227 : vector<8x7xf32>
    %cst_93 = arith.constant 5.000000e-01 : f32
    %229 = vector.broadcast %cst_93 : f32 to vector<8x7xf32>
    %230 = arith.mulf %229, %228 : vector<8x7xf32>
    %231 = math.tanh %230 : vector<8x7xf32>
    %232 = arith.mulf %231, %231 : vector<8x7xf32>
    %233 = vector.extract_strided_slice %225 {offsets = [0, 1], sizes = [8, 7], strides = [1, 1]} : vector<8x8xf32> to vector<8x7xf32>
    %234 = vector.extract_strided_slice %225 {offsets = [0, 0], sizes = [8, 7], strides = [1, 1]} : vector<8x8xf32> to vector<8x7xf32>
    %235 = arith.subf %233, %234 : vector<8x7xf32>
    %cst_94 = arith.constant 5.000000e-01 : f32
    %236 = vector.broadcast %cst_94 : f32 to vector<8x7xf32>
    %237 = arith.mulf %236, %235 : vector<8x7xf32>
    %238 = math.tanh %237 : vector<8x7xf32>
    %239 = arith.mulf %238, %238 : vector<8x7xf32>
    %240 = tpu.iota {dimensions = array<i32: 0>} : vector<3x3xi32>
    %241 = tpu.iota {dimensions = array<i32: 1>} : vector<3x3xi32>
    %cst_95 = arith.constant 0.000000e+00 : f32
    %242 = vector.broadcast %cst_95 : f32 to vector<3x3xf32>
    %243 = arith.mulf %196, %203 : vector<8x7xf32>
    %244 = vector.shape_cast %243 : vector<8x7xf32> to vector<1x8x7xf32>
    %cst_96 = arith.constant dense<0.000000e+00> : vector<1xf32>
    %245 = vector.multi_reduction <add>, %244, %cst_96 [1, 2] : vector<1x8x7xf32> to vector<1xf32>
    %246 = vector.shape_cast %245 : vector<1xf32> to vector<1x1x1xf32>
    %247 = vector.extract %246[0, 0, 0] : f32 from vector<1x1x1xf32>
    %c0_i32_97 = arith.constant 0 : i32
    %248 = vector.broadcast %c0_i32_97 : i32 to vector<3x3xi32>
    %249 = arith.cmpi eq, %240, %248 : vector<3x3xi32>
    %c0_i32_98 = arith.constant 0 : i32
    %250 = vector.broadcast %c0_i32_98 : i32 to vector<3x3xi32>
    %251 = arith.cmpi eq, %241, %250 : vector<3x3xi32>
    %252 = arith.andi %249, %251 : vector<3x3xi1>
    %cst_99 = arith.constant 0.000000e+00 : f32
    %253 = vector.broadcast %247 : f32 to vector<3x3xf32>
    %254 = vector.broadcast %cst_99 : f32 to vector<3x3xf32>
    %255 = arith.select %252, %253, %254 : vector<3x3xi1>, vector<3x3xf32>
    %256 = arith.addf %242, %255 : vector<3x3xf32>
    %257 = arith.mulf %214, %203 : vector<8x7xf32>
    %258 = vector.shape_cast %257 : vector<8x7xf32> to vector<1x8x7xf32>
    %cst_100 = arith.constant dense<0.000000e+00> : vector<1xf32>
    %259 = vector.multi_reduction <add>, %258, %cst_100 [1, 2] : vector<1x8x7xf32> to vector<1xf32>
    %260 = vector.shape_cast %259 : vector<1xf32> to vector<1x1x1xf32>
    %261 = vector.extract %260[0, 0, 0] : f32 from vector<1x1x1xf32>
    %c0_i32_101 = arith.constant 0 : i32
    %262 = vector.broadcast %c0_i32_101 : i32 to vector<3x3xi32>
    %263 = arith.cmpi eq, %240, %262 : vector<3x3xi32>
    %c1_i32_102 = arith.constant 1 : i32
    %264 = vector.broadcast %c1_i32_102 : i32 to vector<3x3xi32>
    %265 = arith.cmpi eq, %241, %264 : vector<3x3xi32>
    %266 = arith.andi %263, %265 : vector<3x3xi1>
    %cst_103 = arith.constant 0.000000e+00 : f32
    %267 = vector.broadcast %261 : f32 to vector<3x3xf32>
    %268 = vector.broadcast %cst_103 : f32 to vector<3x3xf32>
    %269 = arith.select %266, %267, %268 : vector<3x3xi1>, vector<3x3xf32>
    %270 = arith.addf %256, %269 : vector<3x3xf32>
    %271 = arith.mulf %232, %203 : vector<8x7xf32>
    %272 = vector.shape_cast %271 : vector<8x7xf32> to vector<1x8x7xf32>
    %cst_104 = arith.constant dense<0.000000e+00> : vector<1xf32>
    %273 = vector.multi_reduction <add>, %272, %cst_104 [1, 2] : vector<1x8x7xf32> to vector<1xf32>
    %274 = vector.shape_cast %273 : vector<1xf32> to vector<1x1x1xf32>
    %275 = vector.extract %274[0, 0, 0] : f32 from vector<1x1x1xf32>
    %c0_i32_105 = arith.constant 0 : i32
    %276 = vector.broadcast %c0_i32_105 : i32 to vector<3x3xi32>
    %277 = arith.cmpi eq, %240, %276 : vector<3x3xi32>
    %c2_i32_106 = arith.constant 2 : i32
    %278 = vector.broadcast %c2_i32_106 : i32 to vector<3x3xi32>
    %279 = arith.cmpi eq, %241, %278 : vector<3x3xi32>
    %280 = arith.andi %277, %279 : vector<3x3xi1>
    %cst_107 = arith.constant 0.000000e+00 : f32
    %281 = vector.broadcast %275 : f32 to vector<3x3xf32>
    %282 = vector.broadcast %cst_107 : f32 to vector<3x3xf32>
    %283 = arith.select %280, %281, %282 : vector<3x3xi1>, vector<3x3xf32>
    %284 = arith.addf %270, %283 : vector<3x3xf32>
    %285 = arith.mulf %196, %221 : vector<8x7xf32>
    %286 = vector.shape_cast %285 : vector<8x7xf32> to vector<1x8x7xf32>
    %cst_108 = arith.constant dense<0.000000e+00> : vector<1xf32>
    %287 = vector.multi_reduction <add>, %286, %cst_108 [1, 2] : vector<1x8x7xf32> to vector<1xf32>
    %288 = vector.shape_cast %287 : vector<1xf32> to vector<1x1x1xf32>
    %289 = vector.extract %288[0, 0, 0] : f32 from vector<1x1x1xf32>
    %c1_i32_109 = arith.constant 1 : i32
    %290 = vector.broadcast %c1_i32_109 : i32 to vector<3x3xi32>
    %291 = arith.cmpi eq, %240, %290 : vector<3x3xi32>
    %c0_i32_110 = arith.constant 0 : i32
    %292 = vector.broadcast %c0_i32_110 : i32 to vector<3x3xi32>
    %293 = arith.cmpi eq, %241, %292 : vector<3x3xi32>
    %294 = arith.andi %291, %293 : vector<3x3xi1>
    %cst_111 = arith.constant 0.000000e+00 : f32
    %295 = vector.broadcast %289 : f32 to vector<3x3xf32>
    %296 = vector.broadcast %cst_111 : f32 to vector<3x3xf32>
    %297 = arith.select %294, %295, %296 : vector<3x3xi1>, vector<3x3xf32>
    %298 = arith.addf %284, %297 : vector<3x3xf32>
    %299 = arith.mulf %214, %221 : vector<8x7xf32>
    %300 = vector.shape_cast %299 : vector<8x7xf32> to vector<1x8x7xf32>
    %cst_112 = arith.constant dense<0.000000e+00> : vector<1xf32>
    %301 = vector.multi_reduction <add>, %300, %cst_112 [1, 2] : vector<1x8x7xf32> to vector<1xf32>
    %302 = vector.shape_cast %301 : vector<1xf32> to vector<1x1x1xf32>
    %303 = vector.extract %302[0, 0, 0] : f32 from vector<1x1x1xf32>
    %c1_i32_113 = arith.constant 1 : i32
    %304 = vector.broadcast %c1_i32_113 : i32 to vector<3x3xi32>
    %305 = arith.cmpi eq, %240, %304 : vector<3x3xi32>
    %c1_i32_114 = arith.constant 1 : i32
    %306 = vector.broadcast %c1_i32_114 : i32 to vector<3x3xi32>
    %307 = arith.cmpi eq, %241, %306 : vector<3x3xi32>
    %308 = arith.andi %305, %307 : vector<3x3xi1>
    %cst_115 = arith.constant 0.000000e+00 : f32
    %309 = vector.broadcast %303 : f32 to vector<3x3xf32>
    %310 = vector.broadcast %cst_115 : f32 to vector<3x3xf32>
    %311 = arith.select %308, %309, %310 : vector<3x3xi1>, vector<3x3xf32>
    %312 = arith.addf %298, %311 : vector<3x3xf32>
    %313 = arith.mulf %232, %221 : vector<8x7xf32>
    %314 = vector.shape_cast %313 : vector<8x7xf32> to vector<1x8x7xf32>
    %cst_116 = arith.constant dense<0.000000e+00> : vector<1xf32>
    %315 = vector.multi_reduction <add>, %314, %cst_116 [1, 2] : vector<1x8x7xf32> to vector<1xf32>
    %316 = vector.shape_cast %315 : vector<1xf32> to vector<1x1x1xf32>
    %317 = vector.extract %316[0, 0, 0] : f32 from vector<1x1x1xf32>
    %c1_i32_117 = arith.constant 1 : i32
    %318 = vector.broadcast %c1_i32_117 : i32 to vector<3x3xi32>
    %319 = arith.cmpi eq, %240, %318 : vector<3x3xi32>
    %c2_i32_118 = arith.constant 2 : i32
    %320 = vector.broadcast %c2_i32_118 : i32 to vector<3x3xi32>
    %321 = arith.cmpi eq, %241, %320 : vector<3x3xi32>
    %322 = arith.andi %319, %321 : vector<3x3xi1>
    %cst_119 = arith.constant 0.000000e+00 : f32
    %323 = vector.broadcast %317 : f32 to vector<3x3xf32>
    %324 = vector.broadcast %cst_119 : f32 to vector<3x3xf32>
    %325 = arith.select %322, %323, %324 : vector<3x3xi1>, vector<3x3xf32>
    %326 = arith.addf %312, %325 : vector<3x3xf32>
    %327 = arith.mulf %196, %239 : vector<8x7xf32>
    %328 = vector.shape_cast %327 : vector<8x7xf32> to vector<1x8x7xf32>
    %cst_120 = arith.constant dense<0.000000e+00> : vector<1xf32>
    %329 = vector.multi_reduction <add>, %328, %cst_120 [1, 2] : vector<1x8x7xf32> to vector<1xf32>
    %330 = vector.shape_cast %329 : vector<1xf32> to vector<1x1x1xf32>
    %331 = vector.extract %330[0, 0, 0] : f32 from vector<1x1x1xf32>
    %c2_i32_121 = arith.constant 2 : i32
    %332 = vector.broadcast %c2_i32_121 : i32 to vector<3x3xi32>
    %333 = arith.cmpi eq, %240, %332 : vector<3x3xi32>
    %c0_i32_122 = arith.constant 0 : i32
    %334 = vector.broadcast %c0_i32_122 : i32 to vector<3x3xi32>
    %335 = arith.cmpi eq, %241, %334 : vector<3x3xi32>
    %336 = arith.andi %333, %335 : vector<3x3xi1>
    %cst_123 = arith.constant 0.000000e+00 : f32
    %337 = vector.broadcast %331 : f32 to vector<3x3xf32>
    %338 = vector.broadcast %cst_123 : f32 to vector<3x3xf32>
    %339 = arith.select %336, %337, %338 : vector<3x3xi1>, vector<3x3xf32>
    %340 = arith.addf %326, %339 : vector<3x3xf32>
    %341 = arith.mulf %214, %239 : vector<8x7xf32>
    %342 = vector.shape_cast %341 : vector<8x7xf32> to vector<1x8x7xf32>
    %cst_124 = arith.constant dense<0.000000e+00> : vector<1xf32>
    %343 = vector.multi_reduction <add>, %342, %cst_124 [1, 2] : vector<1x8x7xf32> to vector<1xf32>
    %344 = vector.shape_cast %343 : vector<1xf32> to vector<1x1x1xf32>
    %345 = vector.extract %344[0, 0, 0] : f32 from vector<1x1x1xf32>
    %c2_i32_125 = arith.constant 2 : i32
    %346 = vector.broadcast %c2_i32_125 : i32 to vector<3x3xi32>
    %347 = arith.cmpi eq, %240, %346 : vector<3x3xi32>
    %c1_i32_126 = arith.constant 1 : i32
    %348 = vector.broadcast %c1_i32_126 : i32 to vector<3x3xi32>
    %349 = arith.cmpi eq, %241, %348 : vector<3x3xi32>
    %350 = arith.andi %347, %349 : vector<3x3xi1>
    %cst_127 = arith.constant 0.000000e+00 : f32
    %351 = vector.broadcast %345 : f32 to vector<3x3xf32>
    %352 = vector.broadcast %cst_127 : f32 to vector<3x3xf32>
    %353 = arith.select %350, %351, %352 : vector<3x3xi1>, vector<3x3xf32>
    %354 = arith.addf %340, %353 : vector<3x3xf32>
    %355 = arith.mulf %232, %239 : vector<8x7xf32>
    %356 = vector.shape_cast %355 : vector<8x7xf32> to vector<1x8x7xf32>
    %cst_128 = arith.constant dense<0.000000e+00> : vector<1xf32>
    %357 = vector.multi_reduction <add>, %356, %cst_128 [1, 2] : vector<1x8x7xf32> to vector<1xf32>
    %358 = vector.shape_cast %357 : vector<1xf32> to vector<1x1x1xf32>
    %359 = vector.extract %358[0, 0, 0] : f32 from vector<1x1x1xf32>
    %c2_i32_129 = arith.constant 2 : i32
    %360 = vector.broadcast %c2_i32_129 : i32 to vector<3x3xi32>
    %361 = arith.cmpi eq, %240, %360 : vector<3x3xi32>
    %c2_i32_130 = arith.constant 2 : i32
    %362 = vector.broadcast %c2_i32_130 : i32 to vector<3x3xi32>
    %363 = arith.cmpi eq, %241, %362 : vector<3x3xi32>
    %364 = arith.andi %361, %363 : vector<3x3xi1>
    %cst_131 = arith.constant 0.000000e+00 : f32
    %365 = vector.broadcast %359 : f32 to vector<3x3xf32>
    %366 = vector.broadcast %cst_131 : f32 to vector<3x3xf32>
    %367 = arith.select %364, %365, %366 : vector<3x3xi1>, vector<3x3xf32>
    %368 = arith.addf %354, %367 : vector<3x3xf32>
    %c0_132 = arith.constant 0 : index
    %c0_133 = arith.constant 0 : index
    %c1_134 = arith.constant 1 : index
    %c0_135 = arith.constant 0 : index
    %c0_136 = arith.constant 0 : index
    %369 = vector.load %arg4[%c0_132, %c0_133, %c1_134, %c0_135, %c0_136] : memref<1x1x2x3x3xf32, #tpu.memory_space<vmem>>, vector<1x1x1x3x3xf32>
    %370 = vector.shape_cast %369 : vector<1x1x1x3x3xf32> to vector<3x3xf32>
    %371 = vector.shape_cast %368 : vector<3x3xf32> to vector<1x1x1x3x3xf32>
    tpu.vector_store %arg4[%c0_132, %c0_133, %c1_134, %c0_135, %c0_136], %371 {strides = array<i32>} : memref<1x1x2x3x3xf32, #tpu.memory_space<vmem>>, vector<1x1x1x3x3xf32>,
    return
  }
  func.func @transform_0(%arg0: i32, %arg1: i32) -> (i32, i32, i32, i32) {
    %c0_i32 = arith.constant 0 : i32
    %c0_i32_0 = arith.constant 0 : i32
    %c0_i32_1 = arith.constant 0 : i32
    return %arg0, %c0_i32, %arg1, %c0_i32_0 : i32, i32, i32, i32
  }
  func.func @transform_1(%arg0: i32, %arg1: i32) -> (i32, i32, i32, i32) {
    %c0_i32 = arith.constant 0 : i32
    %c0_i32_0 = arith.constant 0 : i32
    %c0_i32_1 = arith.constant 0 : i32
    return %arg0, %c0_i32, %arg1, %c0_i32_0 : i32, i32, i32, i32
  }
  func.func @transform_2(%arg0: i32, %arg1: i32) -> (i32, i32, i32, i32, i32) {
    %c0_i32 = arith.constant 0 : i32
    %c0_i32_0 = arith.constant 0 : i32
    %c0_i32_1 = arith.constant 0 : i32
    %c0_i32_2 = arith.constant 0 : i32
    return %arg0, %arg1, %c0_i32, %c0_i32_0, %c0_i32_1 : i32, i32, i32, i32, i32
  }
}

module attributes {stable_mosaic.version = 11 : i64} {
  func.func @_exclusion_level_kernel(%arg0: i32, %arg1: i32, %arg2: memref<1x3x16x16xf32, #tpu.memory_space<vmem>>, %arg3: memref<1x3x16x16xf32, #tpu.memory_space<vmem>>, %arg4: memref<1x1x2x3x3xf32, #tpu.memory_space<vmem>>) attributes {dimension_semantics = [#tpu.dimension_semantics<parallel>, #tpu.dimension_semantics<parallel>], iteration_bounds = array<i64: 2, 1>, scalar_prefetch = 0 : i64, scratch_operands = 0 : i64, tpu.core_type = #tpu.core_type<tc>, window_params = [{transform_indices = @transform_0, window_bounds = array<i64: 1, 3, 16, 16>}, {transform_indices = @transform_1, window_bounds = array<i64: 1, 3, 16, 16>}, {transform_indices = @transform_2, window_bounds = array<i64: 1, 1, 2, 3, 3>}]} {
    %c0 = arith.constant 0 : index
    %c0_0 = arith.constant 0 : index
    %c0_1 = arith.constant 0 : index
    %c0_2 = arith.constant 0 : index
    %0 = vector.load %arg2[%c0, %c0_0, %c0_1, %c0_2] : memref<1x3x16x16xf32, #tpu.memory_space<vmem>>, vector<1x1x16x16xf32>
    %1 = vector.shape_cast %0 : vector<1x1x16x16xf32> to vector<16x16xf32>
    %c0_3 = arith.constant 0 : index
    %c0_4 = arith.constant 0 : index
    %c0_5 = arith.constant 0 : index
    %c0_6 = arith.constant 0 : index
    %2 = vector.load %arg3[%c0_3, %c0_4, %c0_5, %c0_6] : memref<1x3x16x16xf32, #tpu.memory_space<vmem>>, vector<1x1x16x16xf32>
    %3 = vector.shape_cast %2 : vector<1x1x16x16xf32> to vector<16x16xf32>
    %4 = vector.extract_strided_slice %1 {offsets = [1, 0], sizes = [15, 16], strides = [1, 1]} : vector<16x16xf32> to vector<15x16xf32>
    %5 = vector.extract_strided_slice %1 {offsets = [0, 0], sizes = [15, 16], strides = [1, 1]} : vector<16x16xf32> to vector<15x16xf32>
    %6 = arith.subf %4, %5 : vector<15x16xf32>
    %cst = arith.constant 5.000000e-01 : f32
    %7 = vector.broadcast %cst : f32 to vector<15x16xf32>
    %8 = arith.mulf %7, %6 : vector<15x16xf32>
    %9 = math.tanh %8 : vector<15x16xf32>
    %10 = arith.mulf %9, %9 : vector<15x16xf32>
    %11 = vector.extract_strided_slice %3 {offsets = [1, 0], sizes = [15, 16], strides = [1, 1]} : vector<16x16xf32> to vector<15x16xf32>
    %12 = vector.extract_strided_slice %3 {offsets = [0, 0], sizes = [15, 16], strides = [1, 1]} : vector<16x16xf32> to vector<15x16xf32>
    %13 = arith.subf %11, %12 : vector<15x16xf32>
    %cst_7 = arith.constant 5.000000e-01 : f32
    %14 = vector.broadcast %cst_7 : f32 to vector<15x16xf32>
    %15 = arith.mulf %14, %13 : vector<15x16xf32>
    %16 = math.tanh %15 : vector<15x16xf32>
    %17 = arith.mulf %16, %16 : vector<15x16xf32>
    %c0_8 = arith.constant 0 : index
    %c1 = arith.constant 1 : index
    %c0_9 = arith.constant 0 : index
    %c0_10 = arith.constant 0 : index
    %18 = vector.load %arg2[%c0_8, %c1, %c0_9, %c0_10] : memref<1x3x16x16xf32, #tpu.memory_space<vmem>>, vector<1x1x16x16xf32>
    %19 = vector.shape_cast %18 : vector<1x1x16x16xf32> to vector<16x16xf32>
    %c0_11 = arith.constant 0 : index
    %c1_12 = arith.constant 1 : index
    %c0_13 = arith.constant 0 : index
    %c0_14 = arith.constant 0 : index
    %20 = vector.load %arg3[%c0_11, %c1_12, %c0_13, %c0_14] : memref<1x3x16x16xf32, #tpu.memory_space<vmem>>, vector<1x1x16x16xf32>
    %21 = vector.shape_cast %20 : vector<1x1x16x16xf32> to vector<16x16xf32>
    %22 = vector.extract_strided_slice %19 {offsets = [1, 0], sizes = [15, 16], strides = [1, 1]} : vector<16x16xf32> to vector<15x16xf32>
    %23 = vector.extract_strided_slice %19 {offsets = [0, 0], sizes = [15, 16], strides = [1, 1]} : vector<16x16xf32> to vector<15x16xf32>
    %24 = arith.subf %22, %23 : vector<15x16xf32>
    %cst_15 = arith.constant 5.000000e-01 : f32
    %25 = vector.broadcast %cst_15 : f32 to vector<15x16xf32>
    %26 = arith.mulf %25, %24 : vector<15x16xf32>
    %27 = math.tanh %26 : vector<15x16xf32>
    %28 = arith.mulf %27, %27 : vector<15x16xf32>
    %29 = vector.extract_strided_slice %21 {offsets = [1, 0], sizes = [15, 16], strides = [1, 1]} : vector<16x16xf32> to vector<15x16xf32>
    %30 = vector.extract_strided_slice %21 {offsets = [0, 0], sizes = [15, 16], strides = [1, 1]} : vector<16x16xf32> to vector<15x16xf32>
    %31 = arith.subf %29, %30 : vector<15x16xf32>
    %cst_16 = arith.constant 5.000000e-01 : f32
    %32 = vector.broadcast %cst_16 : f32 to vector<15x16xf32>
    %33 = arith.mulf %32, %31 : vector<15x16xf32>
    %34 = math.tanh %33 : vector<15x16xf32>
    %35 = arith.mulf %34, %34 : vector<15x16xf32>
    %c0_17 = arith.constant 0 : index
    %c2 = arith.constant 2 : index
    %c0_18 = arith.constant 0 : index
    %c0_19 = arith.constant 0 : index
    %36 = vector.load %arg2[%c0_17, %c2, %c0_18, %c0_19] : memref<1x3x16x16xf32, #tpu.memory_space<vmem>>, vector<1x1x16x16xf32>
    %37 = vector.shape_cast %36 : vector<1x1x16x16xf32> to vector<16x16xf32>
    %c0_20 = arith.constant 0 : index
    %c2_21 = arith.constant 2 : index
    %c0_22 = arith.constant 0 : index
    %c0_23 = arith.constant 0 : index
    %38 = vector.load %arg3[%c0_20, %c2_21, %c0_22, %c0_23] : memref<1x3x16x16xf32, #tpu.memory_space<vmem>>, vector<1x1x16x16xf32>
    %39 = vector.shape_cast %38 : vector<1x1x16x16xf32> to vector<16x16xf32>
    %40 = vector.extract_strided_slice %37 {offsets = [1, 0], sizes = [15, 16], strides = [1, 1]} : vector<16x16xf32> to vector<15x16xf32>
    %41 = vector.extract_strided_slice %37 {offsets = [0, 0], sizes = [15, 16], strides = [1, 1]} : vector<16x16xf32> to vector<15x16xf32>
    %42 = arith.subf %40, %41 : vector<15x16xf32>
    %cst_24 = arith.constant 5.000000e-01 : f32
    %43 = vector.broadcast %cst_24 : f32 to vector<15x16xf32>
    %44 = arith.mulf %43, %42 : vector<15x16xf32>
    %45 = math.tanh %44 : vector<15x16xf32>
    %46 = arith.mulf %45, %45 : vector<15x16xf32>
    %47 = vector.extract_strided_slice %39 {offsets = [1, 0], sizes = [15, 16], strides = [1, 1]} : vector<16x16xf32> to vector<15x16xf32>
    %48 = vector.extract_strided_slice %39 {offsets = [0, 0], sizes = [15, 16], strides = [1, 1]} : vector<16x16xf32> to vector<15x16xf32>
    %49 = arith.subf %47, %48 : vector<15x16xf32>
    %cst_25 = arith.constant 5.000000e-01 : f32
    %50 = vector.broadcast %cst_25 : f32 to vector<15x16xf32>
    %51 = arith.mulf %50, %49 : vector<15x16xf32>
    %52 = math.tanh %51 : vector<15x16xf32>
    %53 = arith.mulf %52, %52 : vector<15x16xf32>
    %54 = tpu.iota {dimensions = array<i32: 0>} : vector<3x3xi32>
    %55 = tpu.iota {dimensions = array<i32: 1>} : vector<3x3xi32>
    %cst_26 = arith.constant 0.000000e+00 : f32
    %56 = vector.broadcast %cst_26 : f32 to vector<3x3xf32>
    %57 = arith.mulf %10, %17 : vector<15x16xf32>
    %58 = vector.shape_cast %57 : vector<15x16xf32> to vector<1x15x16xf32>
    %cst_27 = arith.constant dense<0.000000e+00> : vector<1xf32>
    %59 = vector.multi_reduction <add>, %58, %cst_27 [1, 2] : vector<1x15x16xf32> to vector<1xf32>
    %60 = vector.shape_cast %59 : vector<1xf32> to vector<1x1x1xf32>
    %61 = vector.extract %60[0, 0, 0] : f32 from vector<1x1x1xf32>
    %c0_i32 = arith.constant 0 : i32
    %62 = vector.broadcast %c0_i32 : i32 to vector<3x3xi32>
    %63 = arith.cmpi eq, %54, %62 : vector<3x3xi32>
    %c0_i32_28 = arith.constant 0 : i32
    %64 = vector.broadcast %c0_i32_28 : i32 to vector<3x3xi32>
    %65 = arith.cmpi eq, %55, %64 : vector<3x3xi32>
    %66 = arith.andi %63, %65 : vector<3x3xi1>
    %cst_29 = arith.constant 0.000000e+00 : f32
    %67 = vector.broadcast %61 : f32 to vector<3x3xf32>
    %68 = vector.broadcast %cst_29 : f32 to vector<3x3xf32>
    %69 = arith.select %66, %67, %68 : vector<3x3xi1>, vector<3x3xf32>
    %70 = arith.addf %56, %69 : vector<3x3xf32>
    %71 = arith.mulf %28, %17 : vector<15x16xf32>
    %72 = vector.shape_cast %71 : vector<15x16xf32> to vector<1x15x16xf32>
    %cst_30 = arith.constant dense<0.000000e+00> : vector<1xf32>
    %73 = vector.multi_reduction <add>, %72, %cst_30 [1, 2] : vector<1x15x16xf32> to vector<1xf32>
    %74 = vector.shape_cast %73 : vector<1xf32> to vector<1x1x1xf32>
    %75 = vector.extract %74[0, 0, 0] : f32 from vector<1x1x1xf32>
    %c0_i32_31 = arith.constant 0 : i32
    %76 = vector.broadcast %c0_i32_31 : i32 to vector<3x3xi32>
    %77 = arith.cmpi eq, %54, %76 : vector<3x3xi32>
    %c1_i32 = arith.constant 1 : i32
    %78 = vector.broadcast %c1_i32 : i32 to vector<3x3xi32>
    %79 = arith.cmpi eq, %55, %78 : vector<3x3xi32>
    %80 = arith.andi %77, %79 : vector<3x3xi1>
    %cst_32 = arith.constant 0.000000e+00 : f32
    %81 = vector.broadcast %75 : f32 to vector<3x3xf32>
    %82 = vector.broadcast %cst_32 : f32 to vector<3x3xf32>
    %83 = arith.select %80, %81, %82 : vector<3x3xi1>, vector<3x3xf32>
    %84 = arith.addf %70, %83 : vector<3x3xf32>
    %85 = arith.mulf %46, %17 : vector<15x16xf32>
    %86 = vector.shape_cast %85 : vector<15x16xf32> to vector<1x15x16xf32>
    %cst_33 = arith.constant dense<0.000000e+00> : vector<1xf32>
    %87 = vector.multi_reduction <add>, %86, %cst_33 [1, 2] : vector<1x15x16xf32> to vector<1xf32>
    %88 = vector.shape_cast %87 : vector<1xf32> to vector<1x1x1xf32>
    %89 = vector.extract %88[0, 0, 0] : f32 from vector<1x1x1xf32>
    %c0_i32_34 = arith.constant 0 : i32
    %90 = vector.broadcast %c0_i32_34 : i32 to vector<3x3xi32>
    %91 = arith.cmpi eq, %54, %90 : vector<3x3xi32>
    %c2_i32 = arith.constant 2 : i32
    %92 = vector.broadcast %c2_i32 : i32 to vector<3x3xi32>
    %93 = arith.cmpi eq, %55, %92 : vector<3x3xi32>
    %94 = arith.andi %91, %93 : vector<3x3xi1>
    %cst_35 = arith.constant 0.000000e+00 : f32
    %95 = vector.broadcast %89 : f32 to vector<3x3xf32>
    %96 = vector.broadcast %cst_35 : f32 to vector<3x3xf32>
    %97 = arith.select %94, %95, %96 : vector<3x3xi1>, vector<3x3xf32>
    %98 = arith.addf %84, %97 : vector<3x3xf32>
    %99 = arith.mulf %10, %35 : vector<15x16xf32>
    %100 = vector.shape_cast %99 : vector<15x16xf32> to vector<1x15x16xf32>
    %cst_36 = arith.constant dense<0.000000e+00> : vector<1xf32>
    %101 = vector.multi_reduction <add>, %100, %cst_36 [1, 2] : vector<1x15x16xf32> to vector<1xf32>
    %102 = vector.shape_cast %101 : vector<1xf32> to vector<1x1x1xf32>
    %103 = vector.extract %102[0, 0, 0] : f32 from vector<1x1x1xf32>
    %c1_i32_37 = arith.constant 1 : i32
    %104 = vector.broadcast %c1_i32_37 : i32 to vector<3x3xi32>
    %105 = arith.cmpi eq, %54, %104 : vector<3x3xi32>
    %c0_i32_38 = arith.constant 0 : i32
    %106 = vector.broadcast %c0_i32_38 : i32 to vector<3x3xi32>
    %107 = arith.cmpi eq, %55, %106 : vector<3x3xi32>
    %108 = arith.andi %105, %107 : vector<3x3xi1>
    %cst_39 = arith.constant 0.000000e+00 : f32
    %109 = vector.broadcast %103 : f32 to vector<3x3xf32>
    %110 = vector.broadcast %cst_39 : f32 to vector<3x3xf32>
    %111 = arith.select %108, %109, %110 : vector<3x3xi1>, vector<3x3xf32>
    %112 = arith.addf %98, %111 : vector<3x3xf32>
    %113 = arith.mulf %28, %35 : vector<15x16xf32>
    %114 = vector.shape_cast %113 : vector<15x16xf32> to vector<1x15x16xf32>
    %cst_40 = arith.constant dense<0.000000e+00> : vector<1xf32>
    %115 = vector.multi_reduction <add>, %114, %cst_40 [1, 2] : vector<1x15x16xf32> to vector<1xf32>
    %116 = vector.shape_cast %115 : vector<1xf32> to vector<1x1x1xf32>
    %117 = vector.extract %116[0, 0, 0] : f32 from vector<1x1x1xf32>
    %c1_i32_41 = arith.constant 1 : i32
    %118 = vector.broadcast %c1_i32_41 : i32 to vector<3x3xi32>
    %119 = arith.cmpi eq, %54, %118 : vector<3x3xi32>
    %c1_i32_42 = arith.constant 1 : i32
    %120 = vector.broadcast %c1_i32_42 : i32 to vector<3x3xi32>
    %121 = arith.cmpi eq, %55, %120 : vector<3x3xi32>
    %122 = arith.andi %119, %121 : vector<3x3xi1>
    %cst_43 = arith.constant 0.000000e+00 : f32
    %123 = vector.broadcast %117 : f32 to vector<3x3xf32>
    %124 = vector.broadcast %cst_43 : f32 to vector<3x3xf32>
    %125 = arith.select %122, %123, %124 : vector<3x3xi1>, vector<3x3xf32>
    %126 = arith.addf %112, %125 : vector<3x3xf32>
    %127 = arith.mulf %46, %35 : vector<15x16xf32>
    %128 = vector.shape_cast %127 : vector<15x16xf32> to vector<1x15x16xf32>
    %cst_44 = arith.constant dense<0.000000e+00> : vector<1xf32>
    %129 = vector.multi_reduction <add>, %128, %cst_44 [1, 2] : vector<1x15x16xf32> to vector<1xf32>
    %130 = vector.shape_cast %129 : vector<1xf32> to vector<1x1x1xf32>
    %131 = vector.extract %130[0, 0, 0] : f32 from vector<1x1x1xf32>
    %c1_i32_45 = arith.constant 1 : i32
    %132 = vector.broadcast %c1_i32_45 : i32 to vector<3x3xi32>
    %133 = arith.cmpi eq, %54, %132 : vector<3x3xi32>
    %c2_i32_46 = arith.constant 2 : i32
    %134 = vector.broadcast %c2_i32_46 : i32 to vector<3x3xi32>
    %135 = arith.cmpi eq, %55, %134 : vector<3x3xi32>
    %136 = arith.andi %133, %135 : vector<3x3xi1>
    %cst_47 = arith.constant 0.000000e+00 : f32
    %137 = vector.broadcast %131 : f32 to vector<3x3xf32>
    %138 = vector.broadcast %cst_47 : f32 to vector<3x3xf32>
    %139 = arith.select %136, %137, %138 : vector<3x3xi1>, vector<3x3xf32>
    %140 = arith.addf %126, %139 : vector<3x3xf32>
    %141 = arith.mulf %10, %53 : vector<15x16xf32>
    %142 = vector.shape_cast %141 : vector<15x16xf32> to vector<1x15x16xf32>
    %cst_48 = arith.constant dense<0.000000e+00> : vector<1xf32>
    %143 = vector.multi_reduction <add>, %142, %cst_48 [1, 2] : vector<1x15x16xf32> to vector<1xf32>
    %144 = vector.shape_cast %143 : vector<1xf32> to vector<1x1x1xf32>
    %145 = vector.extract %144[0, 0, 0] : f32 from vector<1x1x1xf32>
    %c2_i32_49 = arith.constant 2 : i32
    %146 = vector.broadcast %c2_i32_49 : i32 to vector<3x3xi32>
    %147 = arith.cmpi eq, %54, %146 : vector<3x3xi32>
    %c0_i32_50 = arith.constant 0 : i32
    %148 = vector.broadcast %c0_i32_50 : i32 to vector<3x3xi32>
    %149 = arith.cmpi eq, %55, %148 : vector<3x3xi32>
    %150 = arith.andi %147, %149 : vector<3x3xi1>
    %cst_51 = arith.constant 0.000000e+00 : f32
    %151 = vector.broadcast %145 : f32 to vector<3x3xf32>
    %152 = vector.broadcast %cst_51 : f32 to vector<3x3xf32>
    %153 = arith.select %150, %151, %152 : vector<3x3xi1>, vector<3x3xf32>
    %154 = arith.addf %140, %153 : vector<3x3xf32>
    %155 = arith.mulf %28, %53 : vector<15x16xf32>
    %156 = vector.shape_cast %155 : vector<15x16xf32> to vector<1x15x16xf32>
    %cst_52 = arith.constant dense<0.000000e+00> : vector<1xf32>
    %157 = vector.multi_reduction <add>, %156, %cst_52 [1, 2] : vector<1x15x16xf32> to vector<1xf32>
    %158 = vector.shape_cast %157 : vector<1xf32> to vector<1x1x1xf32>
    %159 = vector.extract %158[0, 0, 0] : f32 from vector<1x1x1xf32>
    %c2_i32_53 = arith.constant 2 : i32
    %160 = vector.broadcast %c2_i32_53 : i32 to vector<3x3xi32>
    %161 = arith.cmpi eq, %54, %160 : vector<3x3xi32>
    %c1_i32_54 = arith.constant 1 : i32
    %162 = vector.broadcast %c1_i32_54 : i32 to vector<3x3xi32>
    %163 = arith.cmpi eq, %55, %162 : vector<3x3xi32>
    %164 = arith.andi %161, %163 : vector<3x3xi1>
    %cst_55 = arith.constant 0.000000e+00 : f32
    %165 = vector.broadcast %159 : f32 to vector<3x3xf32>
    %166 = vector.broadcast %cst_55 : f32 to vector<3x3xf32>
    %167 = arith.select %164, %165, %166 : vector<3x3xi1>, vector<3x3xf32>
    %168 = arith.addf %154, %167 : vector<3x3xf32>
    %169 = arith.mulf %46, %53 : vector<15x16xf32>
    %170 = vector.shape_cast %169 : vector<15x16xf32> to vector<1x15x16xf32>
    %cst_56 = arith.constant dense<0.000000e+00> : vector<1xf32>
    %171 = vector.multi_reduction <add>, %170, %cst_56 [1, 2] : vector<1x15x16xf32> to vector<1xf32>
    %172 = vector.shape_cast %171 : vector<1xf32> to vector<1x1x1xf32>
    %173 = vector.extract %172[0, 0, 0] : f32 from vector<1x1x1xf32>
    %c2_i32_57 = arith.constant 2 : i32
    %174 = vector.broadcast %c2_i32_57 : i32 to vector<3x3xi32>
    %175 = arith.cmpi eq, %54, %174 : vector<3x3xi32>
    %c2_i32_58 = arith.constant 2 : i32
    %176 = vector.broadcast %c2_i32_58 : i32 to vector<3x3xi32>
    %177 = arith.cmpi eq, %55, %176 : vector<3x3xi32>
    %178 = arith.andi %175, %177 : vector<3x3xi1>
    %cst_59 = arith.constant 0.000000e+00 : f32
    %179 = vector.broadcast %173 : f32 to vector<3x3xf32>
    %180 = vector.broadcast %cst_59 : f32 to vector<3x3xf32>
    %181 = arith.select %178, %179, %180 : vector<3x3xi1>, vector<3x3xf32>
    %182 = arith.addf %168, %181 : vector<3x3xf32>
    %c0_60 = arith.constant 0 : index
    %c0_61 = arith.constant 0 : index
    %c0_62 = arith.constant 0 : index
    %c0_63 = arith.constant 0 : index
    %c0_64 = arith.constant 0 : index
    %183 = vector.load %arg4[%c0_60, %c0_61, %c0_62, %c0_63, %c0_64] : memref<1x1x2x3x3xf32, #tpu.memory_space<vmem>>, vector<1x1x1x3x3xf32>
    %184 = vector.shape_cast %183 : vector<1x1x1x3x3xf32> to vector<3x3xf32>
    %185 = vector.shape_cast %182 : vector<3x3xf32> to vector<1x1x1x3x3xf32>
    tpu.vector_store %arg4[%c0_60, %c0_61, %c0_62, %c0_63, %c0_64], %185 {strides = array<i32>} : memref<1x1x2x3x3xf32, #tpu.memory_space<vmem>>, vector<1x1x1x3x3xf32>,
    %c0_65 = arith.constant 0 : index
    %c0_66 = arith.constant 0 : index
    %c0_67 = arith.constant 0 : index
    %c0_68 = arith.constant 0 : index
    %186 = vector.load %arg2[%c0_65, %c0_66, %c0_67, %c0_68] : memref<1x3x16x16xf32, #tpu.memory_space<vmem>>, vector<1x1x16x16xf32>
    %187 = vector.shape_cast %186 : vector<1x1x16x16xf32> to vector<16x16xf32>
    %c0_69 = arith.constant 0 : index
    %c0_70 = arith.constant 0 : index
    %c0_71 = arith.constant 0 : index
    %c0_72 = arith.constant 0 : index
    %188 = vector.load %arg3[%c0_69, %c0_70, %c0_71, %c0_72] : memref<1x3x16x16xf32, #tpu.memory_space<vmem>>, vector<1x1x16x16xf32>
    %189 = vector.shape_cast %188 : vector<1x1x16x16xf32> to vector<16x16xf32>
    %190 = vector.extract_strided_slice %187 {offsets = [0, 1], sizes = [16, 15], strides = [1, 1]} : vector<16x16xf32> to vector<16x15xf32>
    %191 = vector.extract_strided_slice %187 {offsets = [0, 0], sizes = [16, 15], strides = [1, 1]} : vector<16x16xf32> to vector<16x15xf32>
    %192 = arith.subf %190, %191 : vector<16x15xf32>
    %cst_73 = arith.constant 5.000000e-01 : f32
    %193 = vector.broadcast %cst_73 : f32 to vector<16x15xf32>
    %194 = arith.mulf %193, %192 : vector<16x15xf32>
    %195 = math.tanh %194 : vector<16x15xf32>
    %196 = arith.mulf %195, %195 : vector<16x15xf32>
    %197 = vector.extract_strided_slice %189 {offsets = [0, 1], sizes = [16, 15], strides = [1, 1]} : vector<16x16xf32> to vector<16x15xf32>
    %198 = vector.extract_strided_slice %189 {offsets = [0, 0], sizes = [16, 15], strides = [1, 1]} : vector<16x16xf32> to vector<16x15xf32>
    %199 = arith.subf %197, %198 : vector<16x15xf32>
    %cst_74 = arith.constant 5.000000e-01 : f32
    %200 = vector.broadcast %cst_74 : f32 to vector<16x15xf32>
    %201 = arith.mulf %200, %199 : vector<16x15xf32>
    %202 = math.tanh %201 : vector<16x15xf32>
    %203 = arith.mulf %202, %202 : vector<16x15xf32>
    %c0_75 = arith.constant 0 : index
    %c1_76 = arith.constant 1 : index
    %c0_77 = arith.constant 0 : index
    %c0_78 = arith.constant 0 : index
    %204 = vector.load %arg2[%c0_75, %c1_76, %c0_77, %c0_78] : memref<1x3x16x16xf32, #tpu.memory_space<vmem>>, vector<1x1x16x16xf32>
    %205 = vector.shape_cast %204 : vector<1x1x16x16xf32> to vector<16x16xf32>
    %c0_79 = arith.constant 0 : index
    %c1_80 = arith.constant 1 : index
    %c0_81 = arith.constant 0 : index
    %c0_82 = arith.constant 0 : index
    %206 = vector.load %arg3[%c0_79, %c1_80, %c0_81, %c0_82] : memref<1x3x16x16xf32, #tpu.memory_space<vmem>>, vector<1x1x16x16xf32>
    %207 = vector.shape_cast %206 : vector<1x1x16x16xf32> to vector<16x16xf32>
    %208 = vector.extract_strided_slice %205 {offsets = [0, 1], sizes = [16, 15], strides = [1, 1]} : vector<16x16xf32> to vector<16x15xf32>
    %209 = vector.extract_strided_slice %205 {offsets = [0, 0], sizes = [16, 15], strides = [1, 1]} : vector<16x16xf32> to vector<16x15xf32>
    %210 = arith.subf %208, %209 : vector<16x15xf32>
    %cst_83 = arith.constant 5.000000e-01 : f32
    %211 = vector.broadcast %cst_83 : f32 to vector<16x15xf32>
    %212 = arith.mulf %211, %210 : vector<16x15xf32>
    %213 = math.tanh %212 : vector<16x15xf32>
    %214 = arith.mulf %213, %213 : vector<16x15xf32>
    %215 = vector.extract_strided_slice %207 {offsets = [0, 1], sizes = [16, 15], strides = [1, 1]} : vector<16x16xf32> to vector<16x15xf32>
    %216 = vector.extract_strided_slice %207 {offsets = [0, 0], sizes = [16, 15], strides = [1, 1]} : vector<16x16xf32> to vector<16x15xf32>
    %217 = arith.subf %215, %216 : vector<16x15xf32>
    %cst_84 = arith.constant 5.000000e-01 : f32
    %218 = vector.broadcast %cst_84 : f32 to vector<16x15xf32>
    %219 = arith.mulf %218, %217 : vector<16x15xf32>
    %220 = math.tanh %219 : vector<16x15xf32>
    %221 = arith.mulf %220, %220 : vector<16x15xf32>
    %c0_85 = arith.constant 0 : index
    %c2_86 = arith.constant 2 : index
    %c0_87 = arith.constant 0 : index
    %c0_88 = arith.constant 0 : index
    %222 = vector.load %arg2[%c0_85, %c2_86, %c0_87, %c0_88] : memref<1x3x16x16xf32, #tpu.memory_space<vmem>>, vector<1x1x16x16xf32>
    %223 = vector.shape_cast %222 : vector<1x1x16x16xf32> to vector<16x16xf32>
    %c0_89 = arith.constant 0 : index
    %c2_90 = arith.constant 2 : index
    %c0_91 = arith.constant 0 : index
    %c0_92 = arith.constant 0 : index
    %224 = vector.load %arg3[%c0_89, %c2_90, %c0_91, %c0_92] : memref<1x3x16x16xf32, #tpu.memory_space<vmem>>, vector<1x1x16x16xf32>
    %225 = vector.shape_cast %224 : vector<1x1x16x16xf32> to vector<16x16xf32>
    %226 = vector.extract_strided_slice %223 {offsets = [0, 1], sizes = [16, 15], strides = [1, 1]} : vector<16x16xf32> to vector<16x15xf32>
    %227 = vector.extract_strided_slice %223 {offsets = [0, 0], sizes = [16, 15], strides = [1, 1]} : vector<16x16xf32> to vector<16x15xf32>
    %228 = arith.subf %226, %227 : vector<16x15xf32>
    %cst_93 = arith.constant 5.000000e-01 : f32
    %229 = vector.broadcast %cst_93 : f32 to vector<16x15xf32>
    %230 = arith.mulf %229, %228 : vector<16x15xf32>
    %231 = math.tanh %230 : vector<16x15xf32>
    %232 = arith.mulf %231, %231 : vector<16x15xf32>
    %233 = vector.extract_strided_slice %225 {offsets = [0, 1], sizes = [16, 15], strides = [1, 1]} : vector<16x16xf32> to vector<16x15xf32>
    %234 = vector.extract_strided_slice %225 {offsets = [0, 0], sizes = [16, 15], strides = [1, 1]} : vector<16x16xf32> to vector<16x15xf32>
    %235 = arith.subf %233, %234 : vector<16x15xf32>
    %cst_94 = arith.constant 5.000000e-01 : f32
    %236 = vector.broadcast %cst_94 : f32 to vector<16x15xf32>
    %237 = arith.mulf %236, %235 : vector<16x15xf32>
    %238 = math.tanh %237 : vector<16x15xf32>
    %239 = arith.mulf %238, %238 : vector<16x15xf32>
    %240 = tpu.iota {dimensions = array<i32: 0>} : vector<3x3xi32>
    %241 = tpu.iota {dimensions = array<i32: 1>} : vector<3x3xi32>
    %cst_95 = arith.constant 0.000000e+00 : f32
    %242 = vector.broadcast %cst_95 : f32 to vector<3x3xf32>
    %243 = arith.mulf %196, %203 : vector<16x15xf32>
    %244 = vector.shape_cast %243 : vector<16x15xf32> to vector<1x16x15xf32>
    %cst_96 = arith.constant dense<0.000000e+00> : vector<1xf32>
    %245 = vector.multi_reduction <add>, %244, %cst_96 [1, 2] : vector<1x16x15xf32> to vector<1xf32>
    %246 = vector.shape_cast %245 : vector<1xf32> to vector<1x1x1xf32>
    %247 = vector.extract %246[0, 0, 0] : f32 from vector<1x1x1xf32>
    %c0_i32_97 = arith.constant 0 : i32
    %248 = vector.broadcast %c0_i32_97 : i32 to vector<3x3xi32>
    %249 = arith.cmpi eq, %240, %248 : vector<3x3xi32>
    %c0_i32_98 = arith.constant 0 : i32
    %250 = vector.broadcast %c0_i32_98 : i32 to vector<3x3xi32>
    %251 = arith.cmpi eq, %241, %250 : vector<3x3xi32>
    %252 = arith.andi %249, %251 : vector<3x3xi1>
    %cst_99 = arith.constant 0.000000e+00 : f32
    %253 = vector.broadcast %247 : f32 to vector<3x3xf32>
    %254 = vector.broadcast %cst_99 : f32 to vector<3x3xf32>
    %255 = arith.select %252, %253, %254 : vector<3x3xi1>, vector<3x3xf32>
    %256 = arith.addf %242, %255 : vector<3x3xf32>
    %257 = arith.mulf %214, %203 : vector<16x15xf32>
    %258 = vector.shape_cast %257 : vector<16x15xf32> to vector<1x16x15xf32>
    %cst_100 = arith.constant dense<0.000000e+00> : vector<1xf32>
    %259 = vector.multi_reduction <add>, %258, %cst_100 [1, 2] : vector<1x16x15xf32> to vector<1xf32>
    %260 = vector.shape_cast %259 : vector<1xf32> to vector<1x1x1xf32>
    %261 = vector.extract %260[0, 0, 0] : f32 from vector<1x1x1xf32>
    %c0_i32_101 = arith.constant 0 : i32
    %262 = vector.broadcast %c0_i32_101 : i32 to vector<3x3xi32>
    %263 = arith.cmpi eq, %240, %262 : vector<3x3xi32>
    %c1_i32_102 = arith.constant 1 : i32
    %264 = vector.broadcast %c1_i32_102 : i32 to vector<3x3xi32>
    %265 = arith.cmpi eq, %241, %264 : vector<3x3xi32>
    %266 = arith.andi %263, %265 : vector<3x3xi1>
    %cst_103 = arith.constant 0.000000e+00 : f32
    %267 = vector.broadcast %261 : f32 to vector<3x3xf32>
    %268 = vector.broadcast %cst_103 : f32 to vector<3x3xf32>
    %269 = arith.select %266, %267, %268 : vector<3x3xi1>, vector<3x3xf32>
    %270 = arith.addf %256, %269 : vector<3x3xf32>
    %271 = arith.mulf %232, %203 : vector<16x15xf32>
    %272 = vector.shape_cast %271 : vector<16x15xf32> to vector<1x16x15xf32>
    %cst_104 = arith.constant dense<0.000000e+00> : vector<1xf32>
    %273 = vector.multi_reduction <add>, %272, %cst_104 [1, 2] : vector<1x16x15xf32> to vector<1xf32>
    %274 = vector.shape_cast %273 : vector<1xf32> to vector<1x1x1xf32>
    %275 = vector.extract %274[0, 0, 0] : f32 from vector<1x1x1xf32>
    %c0_i32_105 = arith.constant 0 : i32
    %276 = vector.broadcast %c0_i32_105 : i32 to vector<3x3xi32>
    %277 = arith.cmpi eq, %240, %276 : vector<3x3xi32>
    %c2_i32_106 = arith.constant 2 : i32
    %278 = vector.broadcast %c2_i32_106 : i32 to vector<3x3xi32>
    %279 = arith.cmpi eq, %241, %278 : vector<3x3xi32>
    %280 = arith.andi %277, %279 : vector<3x3xi1>
    %cst_107 = arith.constant 0.000000e+00 : f32
    %281 = vector.broadcast %275 : f32 to vector<3x3xf32>
    %282 = vector.broadcast %cst_107 : f32 to vector<3x3xf32>
    %283 = arith.select %280, %281, %282 : vector<3x3xi1>, vector<3x3xf32>
    %284 = arith.addf %270, %283 : vector<3x3xf32>
    %285 = arith.mulf %196, %221 : vector<16x15xf32>
    %286 = vector.shape_cast %285 : vector<16x15xf32> to vector<1x16x15xf32>
    %cst_108 = arith.constant dense<0.000000e+00> : vector<1xf32>
    %287 = vector.multi_reduction <add>, %286, %cst_108 [1, 2] : vector<1x16x15xf32> to vector<1xf32>
    %288 = vector.shape_cast %287 : vector<1xf32> to vector<1x1x1xf32>
    %289 = vector.extract %288[0, 0, 0] : f32 from vector<1x1x1xf32>
    %c1_i32_109 = arith.constant 1 : i32
    %290 = vector.broadcast %c1_i32_109 : i32 to vector<3x3xi32>
    %291 = arith.cmpi eq, %240, %290 : vector<3x3xi32>
    %c0_i32_110 = arith.constant 0 : i32
    %292 = vector.broadcast %c0_i32_110 : i32 to vector<3x3xi32>
    %293 = arith.cmpi eq, %241, %292 : vector<3x3xi32>
    %294 = arith.andi %291, %293 : vector<3x3xi1>
    %cst_111 = arith.constant 0.000000e+00 : f32
    %295 = vector.broadcast %289 : f32 to vector<3x3xf32>
    %296 = vector.broadcast %cst_111 : f32 to vector<3x3xf32>
    %297 = arith.select %294, %295, %296 : vector<3x3xi1>, vector<3x3xf32>
    %298 = arith.addf %284, %297 : vector<3x3xf32>
    %299 = arith.mulf %214, %221 : vector<16x15xf32>
    %300 = vector.shape_cast %299 : vector<16x15xf32> to vector<1x16x15xf32>
    %cst_112 = arith.constant dense<0.000000e+00> : vector<1xf32>
    %301 = vector.multi_reduction <add>, %300, %cst_112 [1, 2] : vector<1x16x15xf32> to vector<1xf32>
    %302 = vector.shape_cast %301 : vector<1xf32> to vector<1x1x1xf32>
    %303 = vector.extract %302[0, 0, 0] : f32 from vector<1x1x1xf32>
    %c1_i32_113 = arith.constant 1 : i32
    %304 = vector.broadcast %c1_i32_113 : i32 to vector<3x3xi32>
    %305 = arith.cmpi eq, %240, %304 : vector<3x3xi32>
    %c1_i32_114 = arith.constant 1 : i32
    %306 = vector.broadcast %c1_i32_114 : i32 to vector<3x3xi32>
    %307 = arith.cmpi eq, %241, %306 : vector<3x3xi32>
    %308 = arith.andi %305, %307 : vector<3x3xi1>
    %cst_115 = arith.constant 0.000000e+00 : f32
    %309 = vector.broadcast %303 : f32 to vector<3x3xf32>
    %310 = vector.broadcast %cst_115 : f32 to vector<3x3xf32>
    %311 = arith.select %308, %309, %310 : vector<3x3xi1>, vector<3x3xf32>
    %312 = arith.addf %298, %311 : vector<3x3xf32>
    %313 = arith.mulf %232, %221 : vector<16x15xf32>
    %314 = vector.shape_cast %313 : vector<16x15xf32> to vector<1x16x15xf32>
    %cst_116 = arith.constant dense<0.000000e+00> : vector<1xf32>
    %315 = vector.multi_reduction <add>, %314, %cst_116 [1, 2] : vector<1x16x15xf32> to vector<1xf32>
    %316 = vector.shape_cast %315 : vector<1xf32> to vector<1x1x1xf32>
    %317 = vector.extract %316[0, 0, 0] : f32 from vector<1x1x1xf32>
    %c1_i32_117 = arith.constant 1 : i32
    %318 = vector.broadcast %c1_i32_117 : i32 to vector<3x3xi32>
    %319 = arith.cmpi eq, %240, %318 : vector<3x3xi32>
    %c2_i32_118 = arith.constant 2 : i32
    %320 = vector.broadcast %c2_i32_118 : i32 to vector<3x3xi32>
    %321 = arith.cmpi eq, %241, %320 : vector<3x3xi32>
    %322 = arith.andi %319, %321 : vector<3x3xi1>
    %cst_119 = arith.constant 0.000000e+00 : f32
    %323 = vector.broadcast %317 : f32 to vector<3x3xf32>
    %324 = vector.broadcast %cst_119 : f32 to vector<3x3xf32>
    %325 = arith.select %322, %323, %324 : vector<3x3xi1>, vector<3x3xf32>
    %326 = arith.addf %312, %325 : vector<3x3xf32>
    %327 = arith.mulf %196, %239 : vector<16x15xf32>
    %328 = vector.shape_cast %327 : vector<16x15xf32> to vector<1x16x15xf32>
    %cst_120 = arith.constant dense<0.000000e+00> : vector<1xf32>
    %329 = vector.multi_reduction <add>, %328, %cst_120 [1, 2] : vector<1x16x15xf32> to vector<1xf32>
    %330 = vector.shape_cast %329 : vector<1xf32> to vector<1x1x1xf32>
    %331 = vector.extract %330[0, 0, 0] : f32 from vector<1x1x1xf32>
    %c2_i32_121 = arith.constant 2 : i32
    %332 = vector.broadcast %c2_i32_121 : i32 to vector<3x3xi32>
    %333 = arith.cmpi eq, %240, %332 : vector<3x3xi32>
    %c0_i32_122 = arith.constant 0 : i32
    %334 = vector.broadcast %c0_i32_122 : i32 to vector<3x3xi32>
    %335 = arith.cmpi eq, %241, %334 : vector<3x3xi32>
    %336 = arith.andi %333, %335 : vector<3x3xi1>
    %cst_123 = arith.constant 0.000000e+00 : f32
    %337 = vector.broadcast %331 : f32 to vector<3x3xf32>
    %338 = vector.broadcast %cst_123 : f32 to vector<3x3xf32>
    %339 = arith.select %336, %337, %338 : vector<3x3xi1>, vector<3x3xf32>
    %340 = arith.addf %326, %339 : vector<3x3xf32>
    %341 = arith.mulf %214, %239 : vector<16x15xf32>
    %342 = vector.shape_cast %341 : vector<16x15xf32> to vector<1x16x15xf32>
    %cst_124 = arith.constant dense<0.000000e+00> : vector<1xf32>
    %343 = vector.multi_reduction <add>, %342, %cst_124 [1, 2] : vector<1x16x15xf32> to vector<1xf32>
    %344 = vector.shape_cast %343 : vector<1xf32> to vector<1x1x1xf32>
    %345 = vector.extract %344[0, 0, 0] : f32 from vector<1x1x1xf32>
    %c2_i32_125 = arith.constant 2 : i32
    %346 = vector.broadcast %c2_i32_125 : i32 to vector<3x3xi32>
    %347 = arith.cmpi eq, %240, %346 : vector<3x3xi32>
    %c1_i32_126 = arith.constant 1 : i32
    %348 = vector.broadcast %c1_i32_126 : i32 to vector<3x3xi32>
    %349 = arith.cmpi eq, %241, %348 : vector<3x3xi32>
    %350 = arith.andi %347, %349 : vector<3x3xi1>
    %cst_127 = arith.constant 0.000000e+00 : f32
    %351 = vector.broadcast %345 : f32 to vector<3x3xf32>
    %352 = vector.broadcast %cst_127 : f32 to vector<3x3xf32>
    %353 = arith.select %350, %351, %352 : vector<3x3xi1>, vector<3x3xf32>
    %354 = arith.addf %340, %353 : vector<3x3xf32>
    %355 = arith.mulf %232, %239 : vector<16x15xf32>
    %356 = vector.shape_cast %355 : vector<16x15xf32> to vector<1x16x15xf32>
    %cst_128 = arith.constant dense<0.000000e+00> : vector<1xf32>
    %357 = vector.multi_reduction <add>, %356, %cst_128 [1, 2] : vector<1x16x15xf32> to vector<1xf32>
    %358 = vector.shape_cast %357 : vector<1xf32> to vector<1x1x1xf32>
    %359 = vector.extract %358[0, 0, 0] : f32 from vector<1x1x1xf32>
    %c2_i32_129 = arith.constant 2 : i32
    %360 = vector.broadcast %c2_i32_129 : i32 to vector<3x3xi32>
    %361 = arith.cmpi eq, %240, %360 : vector<3x3xi32>
    %c2_i32_130 = arith.constant 2 : i32
    %362 = vector.broadcast %c2_i32_130 : i32 to vector<3x3xi32>
    %363 = arith.cmpi eq, %241, %362 : vector<3x3xi32>
    %364 = arith.andi %361, %363 : vector<3x3xi1>
    %cst_131 = arith.constant 0.000000e+00 : f32
    %365 = vector.broadcast %359 : f32 to vector<3x3xf32>
    %366 = vector.broadcast %cst_131 : f32 to vector<3x3xf32>
    %367 = arith.select %364, %365, %366 : vector<3x3xi1>, vector<3x3xf32>
    %368 = arith.addf %354, %367 : vector<3x3xf32>
    %c0_132 = arith.constant 0 : index
    %c0_133 = arith.constant 0 : index
    %c1_134 = arith.constant 1 : index
    %c0_135 = arith.constant 0 : index
    %c0_136 = arith.constant 0 : index
    %369 = vector.load %arg4[%c0_132, %c0_133, %c1_134, %c0_135, %c0_136] : memref<1x1x2x3x3xf32, #tpu.memory_space<vmem>>, vector<1x1x1x3x3xf32>
    %370 = vector.shape_cast %369 : vector<1x1x1x3x3xf32> to vector<3x3xf32>
    %371 = vector.shape_cast %368 : vector<3x3xf32> to vector<1x1x1x3x3xf32>
    tpu.vector_store %arg4[%c0_132, %c0_133, %c1_134, %c0_135, %c0_136], %371 {strides = array<i32>} : memref<1x1x2x3x3xf32, #tpu.memory_space<vmem>>, vector<1x1x1x3x3xf32>,
    return
  }
  func.func @transform_0(%arg0: i32, %arg1: i32) -> (i32, i32, i32, i32) {
    %c0_i32 = arith.constant 0 : i32
    %c0_i32_0 = arith.constant 0 : i32
    %c0_i32_1 = arith.constant 0 : i32
    return %arg0, %c0_i32, %arg1, %c0_i32_0 : i32, i32, i32, i32
  }
  func.func @transform_1(%arg0: i32, %arg1: i32) -> (i32, i32, i32, i32) {
    %c0_i32 = arith.constant 0 : i32
    %c0_i32_0 = arith.constant 0 : i32
    %c0_i32_1 = arith.constant 0 : i32
    return %arg0, %c0_i32, %arg1, %c0_i32_0 : i32, i32, i32, i32
  }
  func.func @transform_2(%arg0: i32, %arg1: i32) -> (i32, i32, i32, i32, i32) {
    %c0_i32 = arith.constant 0 : i32
    %c0_i32_0 = arith.constant 0 : i32
    %c0_i32_1 = arith.constant 0 : i32
    %c0_i32_2 = arith.constant 0 : i32
    return %arg0, %arg1, %c0_i32, %c0_i32_0, %c0_i32_1 : i32, i32, i32, i32, i32
  }
}

module attributes {stable_mosaic.version = 11 : i64} {
  func.func @_exclusion_level_kernel(%arg0: i32, %arg1: i32, %arg2: memref<1x3x4x4xf32, #tpu.memory_space<vmem>>, %arg3: memref<1x3x4x4xf32, #tpu.memory_space<vmem>>, %arg4: memref<1x1x2x3x3xf32, #tpu.memory_space<vmem>>) attributes {dimension_semantics = [#tpu.dimension_semantics<parallel>, #tpu.dimension_semantics<parallel>], iteration_bounds = array<i64: 2, 1>, scalar_prefetch = 0 : i64, scratch_operands = 0 : i64, tpu.core_type = #tpu.core_type<tc>, window_params = [{transform_indices = @transform_0, window_bounds = array<i64: 1, 3, 4, 4>}, {transform_indices = @transform_1, window_bounds = array<i64: 1, 3, 4, 4>}, {transform_indices = @transform_2, window_bounds = array<i64: 1, 1, 2, 3, 3>}]} {
    %c0 = arith.constant 0 : index
    %c0_0 = arith.constant 0 : index
    %c0_1 = arith.constant 0 : index
    %c0_2 = arith.constant 0 : index
    %0 = vector.load %arg2[%c0, %c0_0, %c0_1, %c0_2] : memref<1x3x4x4xf32, #tpu.memory_space<vmem>>, vector<1x1x4x4xf32>
    %1 = vector.shape_cast %0 : vector<1x1x4x4xf32> to vector<4x4xf32>
    %c0_3 = arith.constant 0 : index
    %c0_4 = arith.constant 0 : index
    %c0_5 = arith.constant 0 : index
    %c0_6 = arith.constant 0 : index
    %2 = vector.load %arg3[%c0_3, %c0_4, %c0_5, %c0_6] : memref<1x3x4x4xf32, #tpu.memory_space<vmem>>, vector<1x1x4x4xf32>
    %3 = vector.shape_cast %2 : vector<1x1x4x4xf32> to vector<4x4xf32>
    %4 = vector.extract_strided_slice %1 {offsets = [1, 0], sizes = [3, 4], strides = [1, 1]} : vector<4x4xf32> to vector<3x4xf32>
    %5 = vector.extract_strided_slice %1 {offsets = [0, 0], sizes = [3, 4], strides = [1, 1]} : vector<4x4xf32> to vector<3x4xf32>
    %6 = arith.subf %4, %5 : vector<3x4xf32>
    %cst = arith.constant 5.000000e-01 : f32
    %7 = vector.broadcast %cst : f32 to vector<3x4xf32>
    %8 = arith.mulf %7, %6 : vector<3x4xf32>
    %9 = math.tanh %8 : vector<3x4xf32>
    %10 = arith.mulf %9, %9 : vector<3x4xf32>
    %11 = vector.extract_strided_slice %3 {offsets = [1, 0], sizes = [3, 4], strides = [1, 1]} : vector<4x4xf32> to vector<3x4xf32>
    %12 = vector.extract_strided_slice %3 {offsets = [0, 0], sizes = [3, 4], strides = [1, 1]} : vector<4x4xf32> to vector<3x4xf32>
    %13 = arith.subf %11, %12 : vector<3x4xf32>
    %cst_7 = arith.constant 5.000000e-01 : f32
    %14 = vector.broadcast %cst_7 : f32 to vector<3x4xf32>
    %15 = arith.mulf %14, %13 : vector<3x4xf32>
    %16 = math.tanh %15 : vector<3x4xf32>
    %17 = arith.mulf %16, %16 : vector<3x4xf32>
    %c0_8 = arith.constant 0 : index
    %c1 = arith.constant 1 : index
    %c0_9 = arith.constant 0 : index
    %c0_10 = arith.constant 0 : index
    %18 = vector.load %arg2[%c0_8, %c1, %c0_9, %c0_10] : memref<1x3x4x4xf32, #tpu.memory_space<vmem>>, vector<1x1x4x4xf32>
    %19 = vector.shape_cast %18 : vector<1x1x4x4xf32> to vector<4x4xf32>
    %c0_11 = arith.constant 0 : index
    %c1_12 = arith.constant 1 : index
    %c0_13 = arith.constant 0 : index
    %c0_14 = arith.constant 0 : index
    %20 = vector.load %arg3[%c0_11, %c1_12, %c0_13, %c0_14] : memref<1x3x4x4xf32, #tpu.memory_space<vmem>>, vector<1x1x4x4xf32>
    %21 = vector.shape_cast %20 : vector<1x1x4x4xf32> to vector<4x4xf32>
    %22 = vector.extract_strided_slice %19 {offsets = [1, 0], sizes = [3, 4], strides = [1, 1]} : vector<4x4xf32> to vector<3x4xf32>
    %23 = vector.extract_strided_slice %19 {offsets = [0, 0], sizes = [3, 4], strides = [1, 1]} : vector<4x4xf32> to vector<3x4xf32>
    %24 = arith.subf %22, %23 : vector<3x4xf32>
    %cst_15 = arith.constant 5.000000e-01 : f32
    %25 = vector.broadcast %cst_15 : f32 to vector<3x4xf32>
    %26 = arith.mulf %25, %24 : vector<3x4xf32>
    %27 = math.tanh %26 : vector<3x4xf32>
    %28 = arith.mulf %27, %27 : vector<3x4xf32>
    %29 = vector.extract_strided_slice %21 {offsets = [1, 0], sizes = [3, 4], strides = [1, 1]} : vector<4x4xf32> to vector<3x4xf32>
    %30 = vector.extract_strided_slice %21 {offsets = [0, 0], sizes = [3, 4], strides = [1, 1]} : vector<4x4xf32> to vector<3x4xf32>
    %31 = arith.subf %29, %30 : vector<3x4xf32>
    %cst_16 = arith.constant 5.000000e-01 : f32
    %32 = vector.broadcast %cst_16 : f32 to vector<3x4xf32>
    %33 = arith.mulf %32, %31 : vector<3x4xf32>
    %34 = math.tanh %33 : vector<3x4xf32>
    %35 = arith.mulf %34, %34 : vector<3x4xf32>
    %c0_17 = arith.constant 0 : index
    %c2 = arith.constant 2 : index
    %c0_18 = arith.constant 0 : index
    %c0_19 = arith.constant 0 : index
    %36 = vector.load %arg2[%c0_17, %c2, %c0_18, %c0_19] : memref<1x3x4x4xf32, #tpu.memory_space<vmem>>, vector<1x1x4x4xf32>
    %37 = vector.shape_cast %36 : vector<1x1x4x4xf32> to vector<4x4xf32>
    %c0_20 = arith.constant 0 : index
    %c2_21 = arith.constant 2 : index
    %c0_22 = arith.constant 0 : index
    %c0_23 = arith.constant 0 : index
    %38 = vector.load %arg3[%c0_20, %c2_21, %c0_22, %c0_23] : memref<1x3x4x4xf32, #tpu.memory_space<vmem>>, vector<1x1x4x4xf32>
    %39 = vector.shape_cast %38 : vector<1x1x4x4xf32> to vector<4x4xf32>
    %40 = vector.extract_strided_slice %37 {offsets = [1, 0], sizes = [3, 4], strides = [1, 1]} : vector<4x4xf32> to vector<3x4xf32>
    %41 = vector.extract_strided_slice %37 {offsets = [0, 0], sizes = [3, 4], strides = [1, 1]} : vector<4x4xf32> to vector<3x4xf32>
    %42 = arith.subf %40, %41 : vector<3x4xf32>
    %cst_24 = arith.constant 5.000000e-01 : f32
    %43 = vector.broadcast %cst_24 : f32 to vector<3x4xf32>
    %44 = arith.mulf %43, %42 : vector<3x4xf32>
    %45 = math.tanh %44 : vector<3x4xf32>
    %46 = arith.mulf %45, %45 : vector<3x4xf32>
    %47 = vector.extract_strided_slice %39 {offsets = [1, 0], sizes = [3, 4], strides = [1, 1]} : vector<4x4xf32> to vector<3x4xf32>
    %48 = vector.extract_strided_slice %39 {offsets = [0, 0], sizes = [3, 4], strides = [1, 1]} : vector<4x4xf32> to vector<3x4xf32>
    %49 = arith.subf %47, %48 : vector<3x4xf32>
    %cst_25 = arith.constant 5.000000e-01 : f32
    %50 = vector.broadcast %cst_25 : f32 to vector<3x4xf32>
    %51 = arith.mulf %50, %49 : vector<3x4xf32>
    %52 = math.tanh %51 : vector<3x4xf32>
    %53 = arith.mulf %52, %52 : vector<3x4xf32>
    %54 = tpu.iota {dimensions = array<i32: 0>} : vector<3x3xi32>
    %55 = tpu.iota {dimensions = array<i32: 1>} : vector<3x3xi32>
    %cst_26 = arith.constant 0.000000e+00 : f32
    %56 = vector.broadcast %cst_26 : f32 to vector<3x3xf32>
    %57 = arith.mulf %10, %17 : vector<3x4xf32>
    %58 = vector.shape_cast %57 : vector<3x4xf32> to vector<1x3x4xf32>
    %cst_27 = arith.constant dense<0.000000e+00> : vector<1xf32>
    %59 = vector.multi_reduction <add>, %58, %cst_27 [1, 2] : vector<1x3x4xf32> to vector<1xf32>
    %60 = vector.shape_cast %59 : vector<1xf32> to vector<1x1x1xf32>
    %61 = vector.extract %60[0, 0, 0] : f32 from vector<1x1x1xf32>
    %c0_i32 = arith.constant 0 : i32
    %62 = vector.broadcast %c0_i32 : i32 to vector<3x3xi32>
    %63 = arith.cmpi eq, %54, %62 : vector<3x3xi32>
    %c0_i32_28 = arith.constant 0 : i32
    %64 = vector.broadcast %c0_i32_28 : i32 to vector<3x3xi32>
    %65 = arith.cmpi eq, %55, %64 : vector<3x3xi32>
    %66 = arith.andi %63, %65 : vector<3x3xi1>
    %cst_29 = arith.constant 0.000000e+00 : f32
    %67 = vector.broadcast %61 : f32 to vector<3x3xf32>
    %68 = vector.broadcast %cst_29 : f32 to vector<3x3xf32>
    %69 = arith.select %66, %67, %68 : vector<3x3xi1>, vector<3x3xf32>
    %70 = arith.addf %56, %69 : vector<3x3xf32>
    %71 = arith.mulf %28, %17 : vector<3x4xf32>
    %72 = vector.shape_cast %71 : vector<3x4xf32> to vector<1x3x4xf32>
    %cst_30 = arith.constant dense<0.000000e+00> : vector<1xf32>
    %73 = vector.multi_reduction <add>, %72, %cst_30 [1, 2] : vector<1x3x4xf32> to vector<1xf32>
    %74 = vector.shape_cast %73 : vector<1xf32> to vector<1x1x1xf32>
    %75 = vector.extract %74[0, 0, 0] : f32 from vector<1x1x1xf32>
    %c0_i32_31 = arith.constant 0 : i32
    %76 = vector.broadcast %c0_i32_31 : i32 to vector<3x3xi32>
    %77 = arith.cmpi eq, %54, %76 : vector<3x3xi32>
    %c1_i32 = arith.constant 1 : i32
    %78 = vector.broadcast %c1_i32 : i32 to vector<3x3xi32>
    %79 = arith.cmpi eq, %55, %78 : vector<3x3xi32>
    %80 = arith.andi %77, %79 : vector<3x3xi1>
    %cst_32 = arith.constant 0.000000e+00 : f32
    %81 = vector.broadcast %75 : f32 to vector<3x3xf32>
    %82 = vector.broadcast %cst_32 : f32 to vector<3x3xf32>
    %83 = arith.select %80, %81, %82 : vector<3x3xi1>, vector<3x3xf32>
    %84 = arith.addf %70, %83 : vector<3x3xf32>
    %85 = arith.mulf %46, %17 : vector<3x4xf32>
    %86 = vector.shape_cast %85 : vector<3x4xf32> to vector<1x3x4xf32>
    %cst_33 = arith.constant dense<0.000000e+00> : vector<1xf32>
    %87 = vector.multi_reduction <add>, %86, %cst_33 [1, 2] : vector<1x3x4xf32> to vector<1xf32>
    %88 = vector.shape_cast %87 : vector<1xf32> to vector<1x1x1xf32>
    %89 = vector.extract %88[0, 0, 0] : f32 from vector<1x1x1xf32>
    %c0_i32_34 = arith.constant 0 : i32
    %90 = vector.broadcast %c0_i32_34 : i32 to vector<3x3xi32>
    %91 = arith.cmpi eq, %54, %90 : vector<3x3xi32>
    %c2_i32 = arith.constant 2 : i32
    %92 = vector.broadcast %c2_i32 : i32 to vector<3x3xi32>
    %93 = arith.cmpi eq, %55, %92 : vector<3x3xi32>
    %94 = arith.andi %91, %93 : vector<3x3xi1>
    %cst_35 = arith.constant 0.000000e+00 : f32
    %95 = vector.broadcast %89 : f32 to vector<3x3xf32>
    %96 = vector.broadcast %cst_35 : f32 to vector<3x3xf32>
    %97 = arith.select %94, %95, %96 : vector<3x3xi1>, vector<3x3xf32>
    %98 = arith.addf %84, %97 : vector<3x3xf32>
    %99 = arith.mulf %10, %35 : vector<3x4xf32>
    %100 = vector.shape_cast %99 : vector<3x4xf32> to vector<1x3x4xf32>
    %cst_36 = arith.constant dense<0.000000e+00> : vector<1xf32>
    %101 = vector.multi_reduction <add>, %100, %cst_36 [1, 2] : vector<1x3x4xf32> to vector<1xf32>
    %102 = vector.shape_cast %101 : vector<1xf32> to vector<1x1x1xf32>
    %103 = vector.extract %102[0, 0, 0] : f32 from vector<1x1x1xf32>
    %c1_i32_37 = arith.constant 1 : i32
    %104 = vector.broadcast %c1_i32_37 : i32 to vector<3x3xi32>
    %105 = arith.cmpi eq, %54, %104 : vector<3x3xi32>
    %c0_i32_38 = arith.constant 0 : i32
    %106 = vector.broadcast %c0_i32_38 : i32 to vector<3x3xi32>
    %107 = arith.cmpi eq, %55, %106 : vector<3x3xi32>
    %108 = arith.andi %105, %107 : vector<3x3xi1>
    %cst_39 = arith.constant 0.000000e+00 : f32
    %109 = vector.broadcast %103 : f32 to vector<3x3xf32>
    %110 = vector.broadcast %cst_39 : f32 to vector<3x3xf32>
    %111 = arith.select %108, %109, %110 : vector<3x3xi1>, vector<3x3xf32>
    %112 = arith.addf %98, %111 : vector<3x3xf32>
    %113 = arith.mulf %28, %35 : vector<3x4xf32>
    %114 = vector.shape_cast %113 : vector<3x4xf32> to vector<1x3x4xf32>
    %cst_40 = arith.constant dense<0.000000e+00> : vector<1xf32>
    %115 = vector.multi_reduction <add>, %114, %cst_40 [1, 2] : vector<1x3x4xf32> to vector<1xf32>
    %116 = vector.shape_cast %115 : vector<1xf32> to vector<1x1x1xf32>
    %117 = vector.extract %116[0, 0, 0] : f32 from vector<1x1x1xf32>
    %c1_i32_41 = arith.constant 1 : i32
    %118 = vector.broadcast %c1_i32_41 : i32 to vector<3x3xi32>
    %119 = arith.cmpi eq, %54, %118 : vector<3x3xi32>
    %c1_i32_42 = arith.constant 1 : i32
    %120 = vector.broadcast %c1_i32_42 : i32 to vector<3x3xi32>
    %121 = arith.cmpi eq, %55, %120 : vector<3x3xi32>
    %122 = arith.andi %119, %121 : vector<3x3xi1>
    %cst_43 = arith.constant 0.000000e+00 : f32
    %123 = vector.broadcast %117 : f32 to vector<3x3xf32>
    %124 = vector.broadcast %cst_43 : f32 to vector<3x3xf32>
    %125 = arith.select %122, %123, %124 : vector<3x3xi1>, vector<3x3xf32>
    %126 = arith.addf %112, %125 : vector<3x3xf32>
    %127 = arith.mulf %46, %35 : vector<3x4xf32>
    %128 = vector.shape_cast %127 : vector<3x4xf32> to vector<1x3x4xf32>
    %cst_44 = arith.constant dense<0.000000e+00> : vector<1xf32>
    %129 = vector.multi_reduction <add>, %128, %cst_44 [1, 2] : vector<1x3x4xf32> to vector<1xf32>
    %130 = vector.shape_cast %129 : vector<1xf32> to vector<1x1x1xf32>
    %131 = vector.extract %130[0, 0, 0] : f32 from vector<1x1x1xf32>
    %c1_i32_45 = arith.constant 1 : i32
    %132 = vector.broadcast %c1_i32_45 : i32 to vector<3x3xi32>
    %133 = arith.cmpi eq, %54, %132 : vector<3x3xi32>
    %c2_i32_46 = arith.constant 2 : i32
    %134 = vector.broadcast %c2_i32_46 : i32 to vector<3x3xi32>
    %135 = arith.cmpi eq, %55, %134 : vector<3x3xi32>
    %136 = arith.andi %133, %135 : vector<3x3xi1>
    %cst_47 = arith.constant 0.000000e+00 : f32
    %137 = vector.broadcast %131 : f32 to vector<3x3xf32>
    %138 = vector.broadcast %cst_47 : f32 to vector<3x3xf32>
    %139 = arith.select %136, %137, %138 : vector<3x3xi1>, vector<3x3xf32>
    %140 = arith.addf %126, %139 : vector<3x3xf32>
    %141 = arith.mulf %10, %53 : vector<3x4xf32>
    %142 = vector.shape_cast %141 : vector<3x4xf32> to vector<1x3x4xf32>
    %cst_48 = arith.constant dense<0.000000e+00> : vector<1xf32>
    %143 = vector.multi_reduction <add>, %142, %cst_48 [1, 2] : vector<1x3x4xf32> to vector<1xf32>
    %144 = vector.shape_cast %143 : vector<1xf32> to vector<1x1x1xf32>
    %145 = vector.extract %144[0, 0, 0] : f32 from vector<1x1x1xf32>
    %c2_i32_49 = arith.constant 2 : i32
    %146 = vector.broadcast %c2_i32_49 : i32 to vector<3x3xi32>
    %147 = arith.cmpi eq, %54, %146 : vector<3x3xi32>
    %c0_i32_50 = arith.constant 0 : i32
    %148 = vector.broadcast %c0_i32_50 : i32 to vector<3x3xi32>
    %149 = arith.cmpi eq, %55, %148 : vector<3x3xi32>
    %150 = arith.andi %147, %149 : vector<3x3xi1>
    %cst_51 = arith.constant 0.000000e+00 : f32
    %151 = vector.broadcast %145 : f32 to vector<3x3xf32>
    %152 = vector.broadcast %cst_51 : f32 to vector<3x3xf32>
    %153 = arith.select %150, %151, %152 : vector<3x3xi1>, vector<3x3xf32>
    %154 = arith.addf %140, %153 : vector<3x3xf32>
    %155 = arith.mulf %28, %53 : vector<3x4xf32>
    %156 = vector.shape_cast %155 : vector<3x4xf32> to vector<1x3x4xf32>
    %cst_52 = arith.constant dense<0.000000e+00> : vector<1xf32>
    %157 = vector.multi_reduction <add>, %156, %cst_52 [1, 2] : vector<1x3x4xf32> to vector<1xf32>
    %158 = vector.shape_cast %157 : vector<1xf32> to vector<1x1x1xf32>
    %159 = vector.extract %158[0, 0, 0] : f32 from vector<1x1x1xf32>
    %c2_i32_53 = arith.constant 2 : i32
    %160 = vector.broadcast %c2_i32_53 : i32 to vector<3x3xi32>
    %161 = arith.cmpi eq, %54, %160 : vector<3x3xi32>
    %c1_i32_54 = arith.constant 1 : i32
    %162 = vector.broadcast %c1_i32_54 : i32 to vector<3x3xi32>
    %163 = arith.cmpi eq, %55, %162 : vector<3x3xi32>
    %164 = arith.andi %161, %163 : vector<3x3xi1>
    %cst_55 = arith.constant 0.000000e+00 : f32
    %165 = vector.broadcast %159 : f32 to vector<3x3xf32>
    %166 = vector.broadcast %cst_55 : f32 to vector<3x3xf32>
    %167 = arith.select %164, %165, %166 : vector<3x3xi1>, vector<3x3xf32>
    %168 = arith.addf %154, %167 : vector<3x3xf32>
    %169 = arith.mulf %46, %53 : vector<3x4xf32>
    %170 = vector.shape_cast %169 : vector<3x4xf32> to vector<1x3x4xf32>
    %cst_56 = arith.constant dense<0.000000e+00> : vector<1xf32>
    %171 = vector.multi_reduction <add>, %170, %cst_56 [1, 2] : vector<1x3x4xf32> to vector<1xf32>
    %172 = vector.shape_cast %171 : vector<1xf32> to vector<1x1x1xf32>
    %173 = vector.extract %172[0, 0, 0] : f32 from vector<1x1x1xf32>
    %c2_i32_57 = arith.constant 2 : i32
    %174 = vector.broadcast %c2_i32_57 : i32 to vector<3x3xi32>
    %175 = arith.cmpi eq, %54, %174 : vector<3x3xi32>
    %c2_i32_58 = arith.constant 2 : i32
    %176 = vector.broadcast %c2_i32_58 : i32 to vector<3x3xi32>
    %177 = arith.cmpi eq, %55, %176 : vector<3x3xi32>
    %178 = arith.andi %175, %177 : vector<3x3xi1>
    %cst_59 = arith.constant 0.000000e+00 : f32
    %179 = vector.broadcast %173 : f32 to vector<3x3xf32>
    %180 = vector.broadcast %cst_59 : f32 to vector<3x3xf32>
    %181 = arith.select %178, %179, %180 : vector<3x3xi1>, vector<3x3xf32>
    %182 = arith.addf %168, %181 : vector<3x3xf32>
    %c0_60 = arith.constant 0 : index
    %c0_61 = arith.constant 0 : index
    %c0_62 = arith.constant 0 : index
    %c0_63 = arith.constant 0 : index
    %c0_64 = arith.constant 0 : index
    %183 = vector.load %arg4[%c0_60, %c0_61, %c0_62, %c0_63, %c0_64] : memref<1x1x2x3x3xf32, #tpu.memory_space<vmem>>, vector<1x1x1x3x3xf32>
    %184 = vector.shape_cast %183 : vector<1x1x1x3x3xf32> to vector<3x3xf32>
    %185 = vector.shape_cast %182 : vector<3x3xf32> to vector<1x1x1x3x3xf32>
    tpu.vector_store %arg4[%c0_60, %c0_61, %c0_62, %c0_63, %c0_64], %185 {strides = array<i32>} : memref<1x1x2x3x3xf32, #tpu.memory_space<vmem>>, vector<1x1x1x3x3xf32>,
    %c0_65 = arith.constant 0 : index
    %c0_66 = arith.constant 0 : index
    %c0_67 = arith.constant 0 : index
    %c0_68 = arith.constant 0 : index
    %186 = vector.load %arg2[%c0_65, %c0_66, %c0_67, %c0_68] : memref<1x3x4x4xf32, #tpu.memory_space<vmem>>, vector<1x1x4x4xf32>
    %187 = vector.shape_cast %186 : vector<1x1x4x4xf32> to vector<4x4xf32>
    %c0_69 = arith.constant 0 : index
    %c0_70 = arith.constant 0 : index
    %c0_71 = arith.constant 0 : index
    %c0_72 = arith.constant 0 : index
    %188 = vector.load %arg3[%c0_69, %c0_70, %c0_71, %c0_72] : memref<1x3x4x4xf32, #tpu.memory_space<vmem>>, vector<1x1x4x4xf32>
    %189 = vector.shape_cast %188 : vector<1x1x4x4xf32> to vector<4x4xf32>
    %190 = vector.extract_strided_slice %187 {offsets = [0, 1], sizes = [4, 3], strides = [1, 1]} : vector<4x4xf32> to vector<4x3xf32>
    %191 = vector.extract_strided_slice %187 {offsets = [0, 0], sizes = [4, 3], strides = [1, 1]} : vector<4x4xf32> to vector<4x3xf32>
    %192 = arith.subf %190, %191 : vector<4x3xf32>
    %cst_73 = arith.constant 5.000000e-01 : f32
    %193 = vector.broadcast %cst_73 : f32 to vector<4x3xf32>
    %194 = arith.mulf %193, %192 : vector<4x3xf32>
    %195 = math.tanh %194 : vector<4x3xf32>
    %196 = arith.mulf %195, %195 : vector<4x3xf32>
    %197 = vector.extract_strided_slice %189 {offsets = [0, 1], sizes = [4, 3], strides = [1, 1]} : vector<4x4xf32> to vector<4x3xf32>
    %198 = vector.extract_strided_slice %189 {offsets = [0, 0], sizes = [4, 3], strides = [1, 1]} : vector<4x4xf32> to vector<4x3xf32>
    %199 = arith.subf %197, %198 : vector<4x3xf32>
    %cst_74 = arith.constant 5.000000e-01 : f32
    %200 = vector.broadcast %cst_74 : f32 to vector<4x3xf32>
    %201 = arith.mulf %200, %199 : vector<4x3xf32>
    %202 = math.tanh %201 : vector<4x3xf32>
    %203 = arith.mulf %202, %202 : vector<4x3xf32>
    %c0_75 = arith.constant 0 : index
    %c1_76 = arith.constant 1 : index
    %c0_77 = arith.constant 0 : index
    %c0_78 = arith.constant 0 : index
    %204 = vector.load %arg2[%c0_75, %c1_76, %c0_77, %c0_78] : memref<1x3x4x4xf32, #tpu.memory_space<vmem>>, vector<1x1x4x4xf32>
    %205 = vector.shape_cast %204 : vector<1x1x4x4xf32> to vector<4x4xf32>
    %c0_79 = arith.constant 0 : index
    %c1_80 = arith.constant 1 : index
    %c0_81 = arith.constant 0 : index
    %c0_82 = arith.constant 0 : index
    %206 = vector.load %arg3[%c0_79, %c1_80, %c0_81, %c0_82] : memref<1x3x4x4xf32, #tpu.memory_space<vmem>>, vector<1x1x4x4xf32>
    %207 = vector.shape_cast %206 : vector<1x1x4x4xf32> to vector<4x4xf32>
    %208 = vector.extract_strided_slice %205 {offsets = [0, 1], sizes = [4, 3], strides = [1, 1]} : vector<4x4xf32> to vector<4x3xf32>
    %209 = vector.extract_strided_slice %205 {offsets = [0, 0], sizes = [4, 3], strides = [1, 1]} : vector<4x4xf32> to vector<4x3xf32>
    %210 = arith.subf %208, %209 : vector<4x3xf32>
    %cst_83 = arith.constant 5.000000e-01 : f32
    %211 = vector.broadcast %cst_83 : f32 to vector<4x3xf32>
    %212 = arith.mulf %211, %210 : vector<4x3xf32>
    %213 = math.tanh %212 : vector<4x3xf32>
    %214 = arith.mulf %213, %213 : vector<4x3xf32>
    %215 = vector.extract_strided_slice %207 {offsets = [0, 1], sizes = [4, 3], strides = [1, 1]} : vector<4x4xf32> to vector<4x3xf32>
    %216 = vector.extract_strided_slice %207 {offsets = [0, 0], sizes = [4, 3], strides = [1, 1]} : vector<4x4xf32> to vector<4x3xf32>
    %217 = arith.subf %215, %216 : vector<4x3xf32>
    %cst_84 = arith.constant 5.000000e-01 : f32
    %218 = vector.broadcast %cst_84 : f32 to vector<4x3xf32>
    %219 = arith.mulf %218, %217 : vector<4x3xf32>
    %220 = math.tanh %219 : vector<4x3xf32>
    %221 = arith.mulf %220, %220 : vector<4x3xf32>
    %c0_85 = arith.constant 0 : index
    %c2_86 = arith.constant 2 : index
    %c0_87 = arith.constant 0 : index
    %c0_88 = arith.constant 0 : index
    %222 = vector.load %arg2[%c0_85, %c2_86, %c0_87, %c0_88] : memref<1x3x4x4xf32, #tpu.memory_space<vmem>>, vector<1x1x4x4xf32>
    %223 = vector.shape_cast %222 : vector<1x1x4x4xf32> to vector<4x4xf32>
    %c0_89 = arith.constant 0 : index
    %c2_90 = arith.constant 2 : index
    %c0_91 = arith.constant 0 : index
    %c0_92 = arith.constant 0 : index
    %224 = vector.load %arg3[%c0_89, %c2_90, %c0_91, %c0_92] : memref<1x3x4x4xf32, #tpu.memory_space<vmem>>, vector<1x1x4x4xf32>
    %225 = vector.shape_cast %224 : vector<1x1x4x4xf32> to vector<4x4xf32>
    %226 = vector.extract_strided_slice %223 {offsets = [0, 1], sizes = [4, 3], strides = [1, 1]} : vector<4x4xf32> to vector<4x3xf32>
    %227 = vector.extract_strided_slice %223 {offsets = [0, 0], sizes = [4, 3], strides = [1, 1]} : vector<4x4xf32> to vector<4x3xf32>
    %228 = arith.subf %226, %227 : vector<4x3xf32>
    %cst_93 = arith.constant 5.000000e-01 : f32
    %229 = vector.broadcast %cst_93 : f32 to vector<4x3xf32>
    %230 = arith.mulf %229, %228 : vector<4x3xf32>
    %231 = math.tanh %230 : vector<4x3xf32>
    %232 = arith.mulf %231, %231 : vector<4x3xf32>
    %233 = vector.extract_strided_slice %225 {offsets = [0, 1], sizes = [4, 3], strides = [1, 1]} : vector<4x4xf32> to vector<4x3xf32>
    %234 = vector.extract_strided_slice %225 {offsets = [0, 0], sizes = [4, 3], strides = [1, 1]} : vector<4x4xf32> to vector<4x3xf32>
    %235 = arith.subf %233, %234 : vector<4x3xf32>
    %cst_94 = arith.constant 5.000000e-01 : f32
    %236 = vector.broadcast %cst_94 : f32 to vector<4x3xf32>
    %237 = arith.mulf %236, %235 : vector<4x3xf32>
    %238 = math.tanh %237 : vector<4x3xf32>
    %239 = arith.mulf %238, %238 : vector<4x3xf32>
    %240 = tpu.iota {dimensions = array<i32: 0>} : vector<3x3xi32>
    %241 = tpu.iota {dimensions = array<i32: 1>} : vector<3x3xi32>
    %cst_95 = arith.constant 0.000000e+00 : f32
    %242 = vector.broadcast %cst_95 : f32 to vector<3x3xf32>
    %243 = arith.mulf %196, %203 : vector<4x3xf32>
    %244 = vector.shape_cast %243 : vector<4x3xf32> to vector<1x4x3xf32>
    %cst_96 = arith.constant dense<0.000000e+00> : vector<1xf32>
    %245 = vector.multi_reduction <add>, %244, %cst_96 [1, 2] : vector<1x4x3xf32> to vector<1xf32>
    %246 = vector.shape_cast %245 : vector<1xf32> to vector<1x1x1xf32>
    %247 = vector.extract %246[0, 0, 0] : f32 from vector<1x1x1xf32>
    %c0_i32_97 = arith.constant 0 : i32
    %248 = vector.broadcast %c0_i32_97 : i32 to vector<3x3xi32>
    %249 = arith.cmpi eq, %240, %248 : vector<3x3xi32>
    %c0_i32_98 = arith.constant 0 : i32
    %250 = vector.broadcast %c0_i32_98 : i32 to vector<3x3xi32>
    %251 = arith.cmpi eq, %241, %250 : vector<3x3xi32>
    %252 = arith.andi %249, %251 : vector<3x3xi1>
    %cst_99 = arith.constant 0.000000e+00 : f32
    %253 = vector.broadcast %247 : f32 to vector<3x3xf32>
    %254 = vector.broadcast %cst_99 : f32 to vector<3x3xf32>
    %255 = arith.select %252, %253, %254 : vector<3x3xi1>, vector<3x3xf32>
    %256 = arith.addf %242, %255 : vector<3x3xf32>
    %257 = arith.mulf %214, %203 : vector<4x3xf32>
    %258 = vector.shape_cast %257 : vector<4x3xf32> to vector<1x4x3xf32>
    %cst_100 = arith.constant dense<0.000000e+00> : vector<1xf32>
    %259 = vector.multi_reduction <add>, %258, %cst_100 [1, 2] : vector<1x4x3xf32> to vector<1xf32>
    %260 = vector.shape_cast %259 : vector<1xf32> to vector<1x1x1xf32>
    %261 = vector.extract %260[0, 0, 0] : f32 from vector<1x1x1xf32>
    %c0_i32_101 = arith.constant 0 : i32
    %262 = vector.broadcast %c0_i32_101 : i32 to vector<3x3xi32>
    %263 = arith.cmpi eq, %240, %262 : vector<3x3xi32>
    %c1_i32_102 = arith.constant 1 : i32
    %264 = vector.broadcast %c1_i32_102 : i32 to vector<3x3xi32>
    %265 = arith.cmpi eq, %241, %264 : vector<3x3xi32>
    %266 = arith.andi %263, %265 : vector<3x3xi1>
    %cst_103 = arith.constant 0.000000e+00 : f32
    %267 = vector.broadcast %261 : f32 to vector<3x3xf32>
    %268 = vector.broadcast %cst_103 : f32 to vector<3x3xf32>
    %269 = arith.select %266, %267, %268 : vector<3x3xi1>, vector<3x3xf32>
    %270 = arith.addf %256, %269 : vector<3x3xf32>
    %271 = arith.mulf %232, %203 : vector<4x3xf32>
    %272 = vector.shape_cast %271 : vector<4x3xf32> to vector<1x4x3xf32>
    %cst_104 = arith.constant dense<0.000000e+00> : vector<1xf32>
    %273 = vector.multi_reduction <add>, %272, %cst_104 [1, 2] : vector<1x4x3xf32> to vector<1xf32>
    %274 = vector.shape_cast %273 : vector<1xf32> to vector<1x1x1xf32>
    %275 = vector.extract %274[0, 0, 0] : f32 from vector<1x1x1xf32>
    %c0_i32_105 = arith.constant 0 : i32
    %276 = vector.broadcast %c0_i32_105 : i32 to vector<3x3xi32>
    %277 = arith.cmpi eq, %240, %276 : vector<3x3xi32>
    %c2_i32_106 = arith.constant 2 : i32
    %278 = vector.broadcast %c2_i32_106 : i32 to vector<3x3xi32>
    %279 = arith.cmpi eq, %241, %278 : vector<3x3xi32>
    %280 = arith.andi %277, %279 : vector<3x3xi1>
    %cst_107 = arith.constant 0.000000e+00 : f32
    %281 = vector.broadcast %275 : f32 to vector<3x3xf32>
    %282 = vector.broadcast %cst_107 : f32 to vector<3x3xf32>
    %283 = arith.select %280, %281, %282 : vector<3x3xi1>, vector<3x3xf32>
    %284 = arith.addf %270, %283 : vector<3x3xf32>
    %285 = arith.mulf %196, %221 : vector<4x3xf32>
    %286 = vector.shape_cast %285 : vector<4x3xf32> to vector<1x4x3xf32>
    %cst_108 = arith.constant dense<0.000000e+00> : vector<1xf32>
    %287 = vector.multi_reduction <add>, %286, %cst_108 [1, 2] : vector<1x4x3xf32> to vector<1xf32>
    %288 = vector.shape_cast %287 : vector<1xf32> to vector<1x1x1xf32>
    %289 = vector.extract %288[0, 0, 0] : f32 from vector<1x1x1xf32>
    %c1_i32_109 = arith.constant 1 : i32
    %290 = vector.broadcast %c1_i32_109 : i32 to vector<3x3xi32>
    %291 = arith.cmpi eq, %240, %290 : vector<3x3xi32>
    %c0_i32_110 = arith.constant 0 : i32
    %292 = vector.broadcast %c0_i32_110 : i32 to vector<3x3xi32>
    %293 = arith.cmpi eq, %241, %292 : vector<3x3xi32>
    %294 = arith.andi %291, %293 : vector<3x3xi1>
    %cst_111 = arith.constant 0.000000e+00 : f32
    %295 = vector.broadcast %289 : f32 to vector<3x3xf32>
    %296 = vector.broadcast %cst_111 : f32 to vector<3x3xf32>
    %297 = arith.select %294, %295, %296 : vector<3x3xi1>, vector<3x3xf32>
    %298 = arith.addf %284, %297 : vector<3x3xf32>
    %299 = arith.mulf %214, %221 : vector<4x3xf32>
    %300 = vector.shape_cast %299 : vector<4x3xf32> to vector<1x4x3xf32>
    %cst_112 = arith.constant dense<0.000000e+00> : vector<1xf32>
    %301 = vector.multi_reduction <add>, %300, %cst_112 [1, 2] : vector<1x4x3xf32> to vector<1xf32>
    %302 = vector.shape_cast %301 : vector<1xf32> to vector<1x1x1xf32>
    %303 = vector.extract %302[0, 0, 0] : f32 from vector<1x1x1xf32>
    %c1_i32_113 = arith.constant 1 : i32
    %304 = vector.broadcast %c1_i32_113 : i32 to vector<3x3xi32>
    %305 = arith.cmpi eq, %240, %304 : vector<3x3xi32>
    %c1_i32_114 = arith.constant 1 : i32
    %306 = vector.broadcast %c1_i32_114 : i32 to vector<3x3xi32>
    %307 = arith.cmpi eq, %241, %306 : vector<3x3xi32>
    %308 = arith.andi %305, %307 : vector<3x3xi1>
    %cst_115 = arith.constant 0.000000e+00 : f32
    %309 = vector.broadcast %303 : f32 to vector<3x3xf32>
    %310 = vector.broadcast %cst_115 : f32 to vector<3x3xf32>
    %311 = arith.select %308, %309, %310 : vector<3x3xi1>, vector<3x3xf32>
    %312 = arith.addf %298, %311 : vector<3x3xf32>
    %313 = arith.mulf %232, %221 : vector<4x3xf32>
    %314 = vector.shape_cast %313 : vector<4x3xf32> to vector<1x4x3xf32>
    %cst_116 = arith.constant dense<0.000000e+00> : vector<1xf32>
    %315 = vector.multi_reduction <add>, %314, %cst_116 [1, 2] : vector<1x4x3xf32> to vector<1xf32>
    %316 = vector.shape_cast %315 : vector<1xf32> to vector<1x1x1xf32>
    %317 = vector.extract %316[0, 0, 0] : f32 from vector<1x1x1xf32>
    %c1_i32_117 = arith.constant 1 : i32
    %318 = vector.broadcast %c1_i32_117 : i32 to vector<3x3xi32>
    %319 = arith.cmpi eq, %240, %318 : vector<3x3xi32>
    %c2_i32_118 = arith.constant 2 : i32
    %320 = vector.broadcast %c2_i32_118 : i32 to vector<3x3xi32>
    %321 = arith.cmpi eq, %241, %320 : vector<3x3xi32>
    %322 = arith.andi %319, %321 : vector<3x3xi1>
    %cst_119 = arith.constant 0.000000e+00 : f32
    %323 = vector.broadcast %317 : f32 to vector<3x3xf32>
    %324 = vector.broadcast %cst_119 : f32 to vector<3x3xf32>
    %325 = arith.select %322, %323, %324 : vector<3x3xi1>, vector<3x3xf32>
    %326 = arith.addf %312, %325 : vector<3x3xf32>
    %327 = arith.mulf %196, %239 : vector<4x3xf32>
    %328 = vector.shape_cast %327 : vector<4x3xf32> to vector<1x4x3xf32>
    %cst_120 = arith.constant dense<0.000000e+00> : vector<1xf32>
    %329 = vector.multi_reduction <add>, %328, %cst_120 [1, 2] : vector<1x4x3xf32> to vector<1xf32>
    %330 = vector.shape_cast %329 : vector<1xf32> to vector<1x1x1xf32>
    %331 = vector.extract %330[0, 0, 0] : f32 from vector<1x1x1xf32>
    %c2_i32_121 = arith.constant 2 : i32
    %332 = vector.broadcast %c2_i32_121 : i32 to vector<3x3xi32>
    %333 = arith.cmpi eq, %240, %332 : vector<3x3xi32>
    %c0_i32_122 = arith.constant 0 : i32
    %334 = vector.broadcast %c0_i32_122 : i32 to vector<3x3xi32>
    %335 = arith.cmpi eq, %241, %334 : vector<3x3xi32>
    %336 = arith.andi %333, %335 : vector<3x3xi1>
    %cst_123 = arith.constant 0.000000e+00 : f32
    %337 = vector.broadcast %331 : f32 to vector<3x3xf32>
    %338 = vector.broadcast %cst_123 : f32 to vector<3x3xf32>
    %339 = arith.select %336, %337, %338 : vector<3x3xi1>, vector<3x3xf32>
    %340 = arith.addf %326, %339 : vector<3x3xf32>
    %341 = arith.mulf %214, %239 : vector<4x3xf32>
    %342 = vector.shape_cast %341 : vector<4x3xf32> to vector<1x4x3xf32>
    %cst_124 = arith.constant dense<0.000000e+00> : vector<1xf32>
    %343 = vector.multi_reduction <add>, %342, %cst_124 [1, 2] : vector<1x4x3xf32> to vector<1xf32>
    %344 = vector.shape_cast %343 : vector<1xf32> to vector<1x1x1xf32>
    %345 = vector.extract %344[0, 0, 0] : f32 from vector<1x1x1xf32>
    %c2_i32_125 = arith.constant 2 : i32
    %346 = vector.broadcast %c2_i32_125 : i32 to vector<3x3xi32>
    %347 = arith.cmpi eq, %240, %346 : vector<3x3xi32>
    %c1_i32_126 = arith.constant 1 : i32
    %348 = vector.broadcast %c1_i32_126 : i32 to vector<3x3xi32>
    %349 = arith.cmpi eq, %241, %348 : vector<3x3xi32>
    %350 = arith.andi %347, %349 : vector<3x3xi1>
    %cst_127 = arith.constant 0.000000e+00 : f32
    %351 = vector.broadcast %345 : f32 to vector<3x3xf32>
    %352 = vector.broadcast %cst_127 : f32 to vector<3x3xf32>
    %353 = arith.select %350, %351, %352 : vector<3x3xi1>, vector<3x3xf32>
    %354 = arith.addf %340, %353 : vector<3x3xf32>
    %355 = arith.mulf %232, %239 : vector<4x3xf32>
    %356 = vector.shape_cast %355 : vector<4x3xf32> to vector<1x4x3xf32>
    %cst_128 = arith.constant dense<0.000000e+00> : vector<1xf32>
    %357 = vector.multi_reduction <add>, %356, %cst_128 [1, 2] : vector<1x4x3xf32> to vector<1xf32>
    %358 = vector.shape_cast %357 : vector<1xf32> to vector<1x1x1xf32>
    %359 = vector.extract %358[0, 0, 0] : f32 from vector<1x1x1xf32>
    %c2_i32_129 = arith.constant 2 : i32
    %360 = vector.broadcast %c2_i32_129 : i32 to vector<3x3xi32>
    %361 = arith.cmpi eq, %240, %360 : vector<3x3xi32>
    %c2_i32_130 = arith.constant 2 : i32
    %362 = vector.broadcast %c2_i32_130 : i32 to vector<3x3xi32>
    %363 = arith.cmpi eq, %241, %362 : vector<3x3xi32>
    %364 = arith.andi %361, %363 : vector<3x3xi1>
    %cst_131 = arith.constant 0.000000e+00 : f32
    %365 = vector.broadcast %359 : f32 to vector<3x3xf32>
    %366 = vector.broadcast %cst_131 : f32 to vector<3x3xf32>
    %367 = arith.select %364, %365, %366 : vector<3x3xi1>, vector<3x3xf32>
    %368 = arith.addf %354, %367 : vector<3x3xf32>
    %c0_132 = arith.constant 0 : index
    %c0_133 = arith.constant 0 : index
    %c1_134 = arith.constant 1 : index
    %c0_135 = arith.constant 0 : index
    %c0_136 = arith.constant 0 : index
    %369 = vector.load %arg4[%c0_132, %c0_133, %c1_134, %c0_135, %c0_136] : memref<1x1x2x3x3xf32, #tpu.memory_space<vmem>>, vector<1x1x1x3x3xf32>
    %370 = vector.shape_cast %369 : vector<1x1x1x3x3xf32> to vector<3x3xf32>
    %371 = vector.shape_cast %368 : vector<3x3xf32> to vector<1x1x1x3x3xf32>
    tpu.vector_store %arg4[%c0_132, %c0_133, %c1_134, %c0_135, %c0_136], %371 {strides = array<i32>} : memref<1x1x2x3x3xf32, #tpu.memory_space<vmem>>, vector<1x1x1x3x3xf32>,
    return
  }
  func.func @transform_0(%arg0: i32, %arg1: i32) -> (i32, i32, i32, i32) {
    %c0_i32 = arith.constant 0 : i32
    %c0_i32_0 = arith.constant 0 : i32
    %c0_i32_1 = arith.constant 0 : i32
    return %arg0, %c0_i32, %arg1, %c0_i32_0 : i32, i32, i32, i32
  }
  func.func @transform_1(%arg0: i32, %arg1: i32) -> (i32, i32, i32, i32) {
    %c0_i32 = arith.constant 0 : i32
    %c0_i32_0 = arith.constant 0 : i32
    %c0_i32_1 = arith.constant 0 : i32
    return %arg0, %c0_i32, %arg1, %c0_i32_0 : i32, i32, i32, i32
  }
  func.func @transform_2(%arg0: i32, %arg1: i32) -> (i32, i32, i32, i32, i32) {
    %c0_i32 = arith.constant 0 : i32
    %c0_i32_0 = arith.constant 0 : i32
    %c0_i32_1 = arith.constant 0 : i32
    %c0_i32_2 = arith.constant 0 : i32
    return %arg0, %arg1, %c0_i32, %c0_i32_0, %c0_i32_1 : i32, i32, i32, i32, i32
  }
}

</mosaic_0001>

<llo_original>
// kernel: exclusion_loss.4
$region0: #{exclusion_loss.4}
  #allocation0 [shape = 'u32[]', space=smem, size = 0x4, offset = 0x4, fixed_abs, tag = 'smem constant byte address 0x4 - core index']
  #allocation1 [shape = 'u32[144,128]{1,0:T(1,128)}', space=vmem, size = 0x12000, scoped, tag = 'internal scratch']
  %s0 = inlined_call_operand.vmem [shape: f32[2,3,8,8], index: 0, kind: input, shape index: {}]
  %s1 = inlined_call_operand.vmem [shape: f32[2,3,8,8], index: 1, kind: input, shape index: {}]
  %s2 = inlined_call_operand.vmem [shape: f32[2,1,2,3,3], index: 2, kind: output, shape index: {}]
  %s3 = sld [smem:[#allocation0]]
  $region41: #{exclusion_loss.4} parent=0
    _
  %s5 = ssub.s32 1, %s3
  %s6 = scalar_select 0, %s5, %s3
  loop: start=0, step=1, limit=4
  $region2: #{exclusion_loss.4} parent=0 // loop_pre_header
    _
  $region3: #{exclusion_loss.4} parent=0 // loop_header
    %s8 = sphi 0, %s12
    %p9 = scmp.ge.s32.totalorder %s8, 4
    %s15 = sphi 0, %s27
    %s16 = sphi 0, %s23
    %s17 = sphi 0, %s15
    %s18 = sphi 0, %s16
    %s19 = sphi 0, %s17
    %s20 = sphi 0, %s18
    %s32 = sphi 0, %s34
    %s35 = sphi 0, %s32
    %s36 = sphi 0, %s35
    %s52 = sphi 0, %s36
    %s60 = sphi 0, %s62
    %s63 = sphi 0, %s60
    %s64 = sphi 0, %s63
    %s80 = sphi 0, %s64
    %s88 = sphi 0, %s90
    %s91 = sphi 0, %s88
    %s92 = sphi 0, %s91
    %s108 = sphi 0, %s92
  $region4: #{exclusion_loss.4} parent=0 // loop_header_branch
    %11 = sbr.rel (%p9) target = $region8
  $region5: #{exclusion_loss.4} parent=0 // loop_body
    %s13 = ssub.s32 %s8, 1
    %s14 = ssub.s32 %s8, 2
    %s21 = sadd.s32 1, %s16
    %p22 = scmp.ge.s32.totalorder %s21, 1
    %s23 = scalar_select %p22, 0, %s21
    %s24 = sadd.s32 1, %s15
    %s25 = scalar_select %p22, %s24, %s15
    %p26 = scmp.ge.s32.totalorder %s25, 2
    %s27 = scalar_select %p26, 0, %s25
    %s28 = ssub.s32 %s15, %s27
    %s29 = ssub.s32 %s16, %s23
    %s30 = sor.u32 %s28, %s29
    %p31 = scmp.eq.s32.totalorder %s30, 0
    %s33 = sadd.s32 %s32, 1
    %s34 = scalar_select %p31, %s32, %s33
    %p37 = pneg %p31
    %p38 = scmp.eq.s32.totalorder %s8, 1
    %p39 = por %p37, %p38
    %p40 = scmp.ne.s32.totalorder %s32, %s35
    %p41 = scmp.eq.s32.totalorder %s8, 0
    %p42 = por %p40, %p41
    %p43 = scmp.ne.s32.totalorder %s32, %s35
    %p44 = scmp.eq.s32.totalorder %s13, 1
    %p45 = por %p43, %p44
    %p46 = scmp.ne.s32.totalorder %s35, %s36
    %p47 = scmp.eq.s32.totalorder %s13, 0
    %p48 = por %p46, %p47
    %p49 = scmp.ne.s32.totalorder %s35, %s36
    %p50 = scmp.eq.s32.totalorder %s14, 1
    %p51 = por %p49, %p50
    %p53 = scmp.ne.s32.totalorder %s36, %s52
    %p54 = scmp.eq.s32.totalorder %s14, 0
    %p55 = por %p53, %p54
    %s56 = ssub.s32 %s15, %s27
    %s57 = ssub.s32 %s16, %s23
    %s58 = sor.u32 %s56, %s57
    %p59 = scmp.eq.s32.totalorder %s58, 0
    %s61 = sadd.s32 %s60, 1
    %s62 = scalar_select %p59, %s60, %s61
    %p65 = pneg %p59
    %p66 = scmp.eq.s32.totalorder %s8, 1
    %p67 = por %p65, %p66
    %p68 = scmp.ne.s32.totalorder %s60, %s63
    %p69 = scmp.eq.s32.totalorder %s8, 0
    %p70 = por %p68, %p69
    %p71 = scmp.ne.s32.totalorder %s60, %s63
    %p72 = scmp.eq.s32.totalorder %s13, 1
    %p73 = por %p71, %p72
    %p74 = scmp.ne.s32.totalorder %s63, %s64
    %p75 = scmp.eq.s32.totalorder %s13, 0
    %p76 = por %p74, %p75
    %p77 = scmp.ne.s32.totalorder %s63, %s64
    %p78 = scmp.eq.s32.totalorder %s14, 1
    %p79 = por %p77, %p78
    %p81 = scmp.ne.s32.totalorder %s64, %s80
    %p82 = scmp.eq.s32.totalorder %s14, 0
    %p83 = por %p81, %p82
    %s84 = ssub.s32 %s15, %s27
    %s85 = ssub.s32 %s16, %s23
    %s86 = sor.u32 %s84, %s85
    %p87 = scmp.eq.s32.totalorder %s86, 0
    %s89 = sadd.s32 %s88, 1
    %s90 = scalar_select %p87, %s88, %s89
    %p93 = pneg %p87
    %p94 = scmp.eq.s32.totalorder %s8, 1
    %p95 = por %p93, %p94
    %p96 = scmp.ne.s32.totalorder %s88, %s91
    %p97 = scmp.eq.s32.totalorder %s8, 0
    %p98 = por %p96, %p97
    %p99 = scmp.ne.s32.totalorder %s88, %s91
    %p100 = scmp.eq.s32.totalorder %s13, 1
    %p101 = por %p99, %p100
    %p102 = scmp.ne.s32.totalorder %s91, %s92
    %p103 = scmp.eq.s32.totalorder %s13, 0
    %p104 = por %p102, %p103
    %p105 = scmp.ne.s32.totalorder %s91, %s92
    %p106 = scmp.eq.s32.totalorder %s14, 1
    %p107 = por %p105, %p106
    %p109 = scmp.ne.s32.totalorder %s92, %s108
    %p110 = scmp.eq.s32.totalorder %s14, 0
    %p111 = por %p109, %p110
    %p112 = scmp.le.s32.totalorder 1, %s8
    %p113 = scmp.lt.s32.totalorder %s8, 3
    %p114 = pnand %p112, %p113
    %p115 = pneg %p114
    // Predicated region
    $region9: #{exclusion_loss.4} parent=5 // pred_check
      _
    $region10: #{exclusion_loss.4} parent=5 // pred_check_branch
      %117 = sbr.rel (%p114) target = $region12
    $region11: #{exclusion_loss.4} parent=5 // pred_region
      %s118 = ssub.s32 %s8, 1
    $region12: #{exclusion_loss.4} parent=5 // pred_fallthru
      _
    %p119 = scmp.lt.s32.totalorder %s8, 2
    // Predicated region
    $region13: #{exclusion_loss.4} parent=5 // pred_check
      %p120 = pneg %p119
    $region14: #{exclusion_loss.4} parent=5 // pred_check_branch
      %122 = sbr.rel (%p120) target = $region16
    $region15: #{exclusion_loss.4} parent=5 // pred_region
      // Predicated region
      $region17: #{exclusion_loss.4} parent=15 // pred_check
        %p123 = pneg %p42
      $region18: #{exclusion_loss.4} parent=15 // pred_check_branch
        %125 = sbr.rel (%p123) target = $region20
      $region19: #{exclusion_loss.4} parent=15 // pred_region
        %p126 = scmp.lt.s32.totalorder %s15, 1
        %s127 = scalar_select %p126, %s15, 1
        %p128 = scmp.lt.s32.totalorder %s16, 0
        %s129 = scalar_select %p128, %s16, 0
        %s130 = smul.addr %s127, 3
        %s131 = sadd.s32 %s129, %s130
        %s132 = smul.addr %s131, 8
        %s133 = scalar_lea.vmem %s0, %s132
      $region20: #{exclusion_loss.4} parent=15 // pred_fallthru
        _
      // Predicated region
      $region21: #{exclusion_loss.4} parent=15 // pred_check
        %p134 = pneg %p70
      $region22: #{exclusion_loss.4} parent=15 // pred_check_branch
        %136 = sbr.rel (%p134) target = $region24
      $region23: #{exclusion_loss.4} parent=15 // pred_region
        %p137 = scmp.lt.s32.totalorder %s15, 1
        %s138 = scalar_select %p137, %s15, 1
        %p139 = scmp.lt.s32.totalorder %s16, 0
        %s140 = scalar_select %p139, %s16, 0
        %s141 = smul.addr %s138, 3
        %s142 = sadd.s32 %s140, %s141
        %s143 = smul.addr %s142, 8
        %s144 = scalar_lea.vmem %s1, %s143
      $region24: #{exclusion_loss.4} parent=15 // pred_fallthru
        _
    $region16: #{exclusion_loss.4} parent=5 // pred_fallthru
      _
    %p145 = scmp.le.s32.totalorder 1, %s8
    %p146 = scmp.lt.s32.totalorder %s8, 3
    %p147 = pnand %p145, %p146
    %p148 = pneg %p147
    // Predicated region
    $region25: #{exclusion_loss.4} parent=5 // pred_check
      _
    $region26: #{exclusion_loss.4} parent=5 // pred_check_branch
      %150 = sbr.rel (%p147) target = $region28
    $region27: #{exclusion_loss.4} parent=5 // pred_region
      %s151 = ssub.s32 %s8, 1
      %p152 = scmp.lt.s32.totalorder %s17, 1
      %s153 = scalar_select %p152, %s17, 1
      %p154 = scmp.lt.s32.totalorder %s18, 0
      %s155 = scalar_select %p154, %s18, 0
      %s156 = smul.addr %s153, 3
      %s157 = sadd.s32 %s155, %s156
      %s158 = smul.addr %s157, 8
      %s159 = scalar_lea.vmem %s0, %s158
      %p160 = pneg %p48
      %p161 = pneg %p45
      %p162 = scmp.lt.s32.totalorder %s17, 1
      %s163 = scalar_select %p162, %s17, 1
      %p164 = scmp.lt.s32.totalorder %s18, 0
      %s165 = scalar_select %p164, %s18, 0
      %s166 = smul.addr %s163, 3
      %s167 = sadd.s32 %s165, %s166
      %s168 = smul.addr %s167, 8
      %s169 = scalar_lea.vmem %s1, %s168
      %p170 = pneg %p76
      %p171 = pneg %p73
      %p172 = pneg %p104
      %p173 = pneg %p101
      %p174 = scmp.lt.s32.totalorder %s17, 1
      %s175 = scalar_select %p174, %s17, 1
      %p176 = scmp.lt.s32.totalorder %s18, 0
      %s177 = scalar_select %p176, %s18, 0
      %s178 = smul.addr %s177, 2
      %s179 = smul.addr %s175, 2
      %s180 = sadd.s32 %s178, %s179
      %s181 = smul.addr %s180, 4
      %s182 = scalar_lea.vmem %s2, %s181
      %p183 = scmp.lt.s32.totalorder %s17, 1
      %s184 = scalar_select %p183, %s17, 1
      %p185 = scmp.lt.s32.totalorder %s18, 0
      %s186 = scalar_select %p185, %s18, 0
      %s187 = smul.addr %s184, 3
      %s188 = sadd.s32 %s186, %s187
      %s189 = smul.addr %s188, 8
      %s190 = scalar_lea.vmem %s0, %s189
      %p191 = scmp.lt.s32.totalorder %s17, 1
      %s192 = scalar_select %p191, %s17, 1
      %p193 = scmp.lt.s32.totalorder %s18, 0
      %s194 = scalar_select %p193, %s18, 0
      %s195 = smul.addr %s192, 3
      %s196 = sadd.s32 %s194, %s195
      %s197 = smul.addr %s196, 8
      %s198 = scalar_lea.vmem %s1, %s197
      %p199 = scmp.lt.s32.totalorder %s17, 1
      %s200 = scalar_select %p199, %s17, 1
      %p201 = scmp.lt.s32.totalorder %s18, 0
      %s202 = scalar_select %p201, %s18, 0
      %s203 = smul.addr %s202, 2
      %s204 = smul.addr %s200, 2
      %s205 = sadd.s32 %s203, %s204
      %s206 = smul.addr %s205, 4
      %s207 = scalar_lea.vmem %s2, %s206
      %v208 = vld [vmem:[%s190] sm:$0xff]
      %v209 = vld [vmem:[%s198] sm:$0xff]
      %v211 = vrot.slane %v208, 7
      %v213 = vsub.f32 %v208, %v211
      %v214 = vmul.f32 %v213, 0.5
      %v215 = vtanh.pop %v214
      %v216 = vmul.f32 %v215, %v215
      %v218 = vrot.slane %v209, 7
      %v220 = vsub.f32 %v209, %v218
      %v221 = vmul.f32 %v220, 0.5
      %v222 = vtanh.pop %v221
      %v223 = vmul.f32 %v222, %v222
      %s224 = scalar_lea.vmem %s190, 8
      %v225 = vld [vmem:[%s224] sm:$0xff]
      %s226 = scalar_lea.vmem %s198, 8
      %v227 = vld [vmem:[%s226] sm:$0xff]
      %v229 = vrot.slane %v225, 7
      %v231 = vsub.f32 %v225, %v229
      %v232 = vmul.f32 %v231, 0.5
      %v233 = vtanh.pop %v232
      %v234 = vmul.f32 %v233, %v233
      %v236 = vrot.slane %v227, 7
      %v238 = vsub.f32 %v227, %v236
      %v239 = vmul.f32 %v238, 0.5
      %v240 = vtanh.pop %v239
      %v241 = vmul.f32 %v240, %v240
      %s242 = scalar_lea.vmem %s190, 16
      %v243 = vld [vmem:[%s242] sm:$0xff]
      %s244 = scalar_lea.vmem %s198, 16
      %v245 = vld [vmem:[%s244] sm:$0xff]
      %v247 = vrot.slane %v243, 7
      %v249 = vsub.f32 %v243, %v247
      %v250 = vmul.f32 %v249, 0.5
      %v251 = vtanh.pop %v250
      %v252 = vmul.f32 %v251, %v251
      %v254 = vrot.slane %v245, 7
      %v256 = vsub.f32 %v245, %v254
      %v257 = vmul.f32 %v256, 0.5
      %v258 = vtanh.pop %v257
      %v259 = vmul.f32 %v258, %v258
      %v260 = vlaneseq
      %v261 = vshrl.u32 %v260, 7
      %v262 = vlaneseq
      %v263 = vand.u32 %v262, 127
      %v264 = vmul.f32 %v216, %v223
      %v266 = vrot.slane %v264, 1
      %vm268 = vcmask 63488
      %v269 = vsel %vm268, %v266, 0.0
      %270 = vadd.xlane.f32.xlu0 %v269
      %v271 = vpop.xlane.xlu0 %270
      %v272 = vrot.slane %v271, 4
      %v273 = vadd.f32 %v271, %v272
      %v274 = vrot.slane %v273, 2
      %v275 = vadd.f32 %v273, %v274
      %v276 = vrot.slane %v275, 1
      %v277 = vadd.f32 %v275, %v276
      %s278 = vtos %v277
      %vm279 = vcmp.eq.s32.totalorder %v261, 0
      %vm280 = vcmp.eq.s32.totalorder %v263, 0
      %vm281 = vmand %vm279, %vm280
      %v282 = vstv %s278
      %v283 = vsel %vm281, %v282, 0.0
      %v284 = vadd.f32 %v283, 0.0
      %v285 = vmul.f32 %v234, %v223
      %v287 = vrot.slane %v285, 1
      %v289 = vsel %vm268, %v287, 0.0
      %290 = vadd.xlane.f32.xlu0 %v289
      %v291 = vpop.xlane.xlu0 %290
      %v292 = vrot.slane %v291, 4
      %v293 = vadd.f32 %v291, %v292
      %v294 = vrot.slane %v293, 2
      %v295 = vadd.f32 %v293, %v294
      %v296 = vrot.slane %v295, 1
      %v297 = vadd.f32 %v295, %v296
      %s298 = vtos %v297
      %vm299 = vcmp.eq.s32.totalorder %v263, 1
      %vm300 = vmand %vm279, %vm299
      %v301 = vstv %s298
      %v302 = vsel %vm300, %v301, 0.0
      %v303 = vadd.f32 %v284, %v302
      %v304 = vmul.f32 %v252, %v223
      %v306 = vrot.slane %v304, 1
      %v308 = vsel %vm268, %v306, 0.0
      %309 = vadd.xlane.f32.xlu0 %v308
      %v310 = vpop.xlane.xlu0 %309
      %v311 = vrot.slane %v310, 4
      %v312 = vadd.f32 %v310, %v311
      %v313 = vrot.slane %v312, 2
      %v314 = vadd.f32 %v312, %v313
      %v315 = vrot.slane %v314, 1
      %v316 = vadd.f32 %v314, %v315
      %s317 = vtos %v316
      %vm318 = vcmp.eq.s32.totalorder %v263, 2
      %vm319 = vmand %vm279, %vm318
      %v320 = vstv %s317
      %v321 = vsel %vm319, %v320, 0.0
      %v322 = vadd.f32 %v303, %v321
      %v323 = vmul.f32 %v216, %v241
      %v325 = vrot.slane %v323, 1
      %v327 = vsel %vm268, %v325, 0.0
      %328 = vadd.xlane.f32.xlu0 %v327
      %v329 = vpop.xlane.xlu0 %328
      %v330 = vrot.slane %v329, 4
      %v331 = vadd.f32 %v329, %v330
      %v332 = vrot.slane %v331, 2
      %v333 = vadd.f32 %v331, %v332
      %v334 = vrot.slane %v333, 1
      %v335 = vadd.f32 %v333, %v334
      %s336 = vtos %v335
      %vm337 = vcmp.eq.s32.totalorder %v261, 1
      %vm338 = vmand %vm337, %vm280
      %v339 = vstv %s336
      %v340 = vsel %vm338, %v339, 0.0
      %v341 = vadd.f32 %v322, %v340
      %v342 = vmul.f32 %v234, %v241
      %v344 = vrot.slane %v342, 1
      %v346 = vsel %vm268, %v344, 0.0
      %347 = vadd.xlane.f32.xlu0 %v346
      %v348 = vpop.xlane.xlu0 %347
      %v349 = vrot.slane %v348, 4
      %v350 = vadd.f32 %v348, %v349
      %v351 = vrot.slane %v350, 2
      %v352 = vadd.f32 %v350, %v351
      %v353 = vrot.slane %v352, 1
      %v354 = vadd.f32 %v352, %v353
      %s355 = vtos %v354
      %vm356 = vmand %vm337, %vm299
      %v357 = vstv %s355
      %v358 = vsel %vm356, %v357, 0.0
      %v359 = vadd.f32 %v341, %v358
      %v360 = vmul.f32 %v252, %v241
      %v362 = vrot.slane %v360, 1
      %v364 = vsel %vm268, %v362, 0.0
      %365 = vadd.xlane.f32.xlu0 %v364
      %v366 = vpop.xlane.xlu0 %365
      %v367 = vrot.slane %v366, 4
      %v368 = vadd.f32 %v366, %v367
      %v369 = vrot.slane %v368, 2
      %v370 = vadd.f32 %v368, %v369
      %v371 = vrot.slane %v370, 1
      %v372 = vadd.f32 %v370, %v371
      %s373 = vtos %v372
      %vm374 = vmand %vm337, %vm318
      %v375 = vstv %s373
      %v376 = vsel %vm374, %v375, 0.0
      %v377 = vadd.f32 %v359, %v376
      %v378 = vmul.f32 %v216, %v259
      %v380 = vrot.slane %v378, 1
      %v382 = vsel %vm268, %v380, 0.0
      %383 = vadd.xlane.f32.xlu0 %v382
      %v384 = vpop.xlane.xlu0 %383
      %v385 = vrot.slane %v384, 4
      %v386 = vadd.f32 %v384, %v385
      %v387 = vrot.slane %v386, 2
      %v388 = vadd.f32 %v386, %v387
      %v389 = vrot.slane %v388, 1
      %v390 = vadd.f32 %v388, %v389
      %s391 = vtos %v390
      %vm392 = vcmp.eq.s32.totalorder %v261, 2
      %vm393 = vmand %vm392, %vm280
      %v394 = vstv %s391
      %v395 = vsel %vm393, %v394, 0.0
      %v396 = vadd.f32 %v377, %v395
      %v397 = vmul.f32 %v234, %v259
      %v399 = vrot.slane %v397, 1
      %v401 = vsel %vm268, %v399, 0.0
      %402 = vadd.xlane.f32.xlu0 %v401
      %v403 = vpop.xlane.xlu0 %402
      %v404 = vrot.slane %v403, 4
      %v405 = vadd.f32 %v403, %v404
      %v406 = vrot.slane %v405, 2
      %v407 = vadd.f32 %v405, %v406
      %v408 = vrot.slane %v407, 1
      %v409 = vadd.f32 %v407, %v408
      %s410 = vtos %v409
      %vm411 = vmand %vm392, %vm299
      %v412 = vstv %s410
      %v413 = vsel %vm411, %v412, 0.0
      %v414 = vadd.f32 %v396, %v413
      %v415 = vmul.f32 %v252, %v259
      %v417 = vrot.slane %v415, 1
      %v419 = vsel %vm268, %v417, 0.0
      %420 = vadd.xlane.f32.xlu0 %v419
      %v421 = vpop.xlane.xlu0 %420
      %v422 = vrot.slane %v421, 4
      %v423 = vadd.f32 %v421, %v422
      %v424 = vrot.slane %v423, 2
      %v425 = vadd.f32 %v423, %v424
      %v426 = vrot.slane %v425, 1
      %v427 = vadd.f32 %v425, %v426
      %s428 = vtos %v427
      %vm429 = vmand %vm392, %vm318
      %v430 = vstv %s428
      %v431 = vsel %vm429, %v430, 0.0
      %v432 = vadd.f32 %v414, %v431
      %vm433 = vcmask 18432
      %434 = vst.msk [vmem:[%s207] sm:$0x7] %vm433, %v432
      %v435 = vld [vmem:[%s190] sm:$0xff]
      %v436 = vld [vmem:[%s198] sm:$0xff]
      %438 = vrot.lane.b32.xlu0 %v435, 1
      %v439 = vpop.permute.xlu0 %438
      %v441 = vsub.f32 %v435, %v439
      %v442 = vmul.f32 %v441, 0.5
      %v443 = vtanh.pop %v442
      %v444 = vmul.f32 %v443, %v443
      %446 = vrot.lane.b32.xlu0 %v436, 1
      %v447 = vpop.permute.xlu0 %446
      %v449 = vsub.f32 %v436, %v447
      %v450 = vmul.f32 %v449, 0.5
      %v451 = vtanh.pop %v450
      %v452 = vmul.f32 %v451, %v451
      %v453 = vld [vmem:[%s224] sm:$0xff]
      %v454 = vld [vmem:[%s226] sm:$0xff]
      %456 = vrot.lane.b32.xlu0 %v453, 1
      %v457 = vpop.permute.xlu0 %456
      %v459 = vsub.f32 %v453, %v457
      %v460 = vmul.f32 %v459, 0.5
      %v461 = vtanh.pop %v460
      %v462 = vmul.f32 %v461, %v461
      %464 = vrot.lane.b32.xlu0 %v454, 1
      %v465 = vpop.permute.xlu0 %464
      %v467 = vsub.f32 %v454, %v465
      %v468 = vmul.f32 %v467, 0.5
      %v469 = vtanh.pop %v468
      %v470 = vmul.f32 %v469, %v469
      %v471 = vld [vmem:[%s242] sm:$0xff]
      %v472 = vld [vmem:[%s244] sm:$0xff]
      %474 = vrot.lane.b32.xlu0 %v471, 1
      %v475 = vpop.permute.xlu0 %474
      %v477 = vsub.f32 %v471, %v475
      %v478 = vmul.f32 %v477, 0.5
      %v479 = vtanh.pop %v478
      %v480 = vmul.f32 %v479, %v479
      %482 = vrot.lane.b32.xlu0 %v472, 1
      %v483 = vpop.permute.xlu0 %482
      %v485 = vsub.f32 %v472, %v483
      %v486 = vmul.f32 %v485, 0.5
      %v487 = vtanh.pop %v486
      %v488 = vmul.f32 %v487, %v487
      %v489 = vmul.f32 %v444, %v452
      %491 = vrot.lane.b32.xlu0 %v489, 127
      %v492 = vpop.permute.xlu0 %491
      %vm494 = vcmask 56320
      %v495 = vsel %vm494, %v492, 0.0
      %496 = vadd.xlane.f32.xlu0 %v495
      %v497 = vpop.xlane.xlu0 %496
      %v498 = vrot.slane %v497, 4
      %v499 = vadd.f32 %v497, %v498
      %v500 = vrot.slane %v499, 2
      %v501 = vadd.f32 %v499, %v500
      %v502 = vrot.slane %v501, 1
      %v503 = vadd.f32 %v501, %v502
      %s504 = vtos %v503
      %v505 = vstv %s504
      %v506 = vsel %vm281, %v505, 0.0
      %v507 = vadd.f32 %v506, 0.0
      %v508 = vmul.f32 %v462, %v452
      %510 = vrot.lane.b32.xlu0 %v508, 127
      %v511 = vpop.permute.xlu0 %510
      %v513 = vsel %vm494, %v511, 0.0
      %514 = vadd.xlane.f32.xlu0 %v513
      %v515 = vpop.xlane.xlu0 %514
      %v516 = vrot.slane %v515, 4
      %v517 = vadd.f32 %v515, %v516
      %v518 = vrot.slane %v517, 2
      %v519 = vadd.f32 %v517, %v518
      %v520 = vrot.slane %v519, 1
      %v521 = vadd.f32 %v519, %v520
      %s522 = vtos %v521
      %v523 = vstv %s522
      %v524 = vsel %vm300, %v523, 0.0
      %v525 = vadd.f32 %v507, %v524
      %v526 = vmul.f32 %v480, %v452
      %528 = vrot.lane.b32.xlu0 %v526, 127
      %v529 = vpop.permute.xlu0 %528
      %v531 = vsel %vm494, %v529, 0.0
      %532 = vadd.xlane.f32.xlu0 %v531
      %v533 = vpop.xlane.xlu0 %532
      %v534 = vrot.slane %v533, 4
      %v535 = vadd.f32 %v533, %v534
      %v536 = vrot.slane %v535, 2
      %v537 = vadd.f32 %v535, %v536
      %v538 = vrot.slane %v537, 1
      %v539 = vadd.f32 %v537, %v538
      %s540 = vtos %v539
      %v541 = vstv %s540
      %v542 = vsel %vm319, %v541, 0.0
      %v543 = vadd.f32 %v525, %v542
      %v544 = vmul.f32 %v444, %v470
      %546 = vrot.lane.b32.xlu0 %v544, 127
      %v547 = vpop.permute.xlu0 %546
      %v549 = vsel %vm494, %v547, 0.0
      %550 = vadd.xlane.f32.xlu0 %v549
      %v551 = vpop.xlane.xlu0 %550
      %v552 = vrot.slane %v551, 4
      %v553 = vadd.f32 %v551, %v552
      %v554 = vrot.slane %v553, 2
      %v555 = vadd.f32 %v553, %v554
      %v556 = vrot.slane %v555, 1
      %v557 = vadd.f32 %v555, %v556
      %s558 = vtos %v557
      %v559 = vstv %s558
      %v560 = vsel %vm338, %v559, 0.0
      %v561 = vadd.f32 %v543, %v560
      %v562 = vmul.f32 %v462, %v470
      %564 = vrot.lane.b32.xlu0 %v562, 127
      %v565 = vpop.permute.xlu0 %564
      %v567 = vsel %vm494, %v565, 0.0
      %568 = vadd.xlane.f32.xlu0 %v567
      %v569 = vpop.xlane.xlu0 %568
      %v570 = vrot.slane %v569, 4
      %v571 = vadd.f32 %v569, %v570
      %v572 = vrot.slane %v571, 2
      %v573 = vadd.f32 %v571, %v572
      %v574 = vrot.slane %v573, 1
      %v575 = vadd.f32 %v573, %v574
      %s576 = vtos %v575
      %v577 = vstv %s576
      %v578 = vsel %vm356, %v577, 0.0
      %v579 = vadd.f32 %v561, %v578
      %v580 = vmul.f32 %v480, %v470
      %582 = vrot.lane.b32.xlu0 %v580, 127
      %v583 = vpop.permute.xlu0 %582
      %v585 = vsel %vm494, %v583, 0.0
      %586 = vadd.xlane.f32.xlu0 %v585
      %v587 = vpop.xlane.xlu0 %586
      %v588 = vrot.slane %v587, 4
      %v589 = vadd.f32 %v587, %v588
      %v590 = vrot.slane %v589, 2
      %v591 = vadd.f32 %v589, %v590
      %v592 = vrot.slane %v591, 1
      %v593 = vadd.f32 %v591, %v592
      %s594 = vtos %v593
      %v595 = vstv %s594
      %v596 = vsel %vm374, %v595, 0.0
      %v597 = vadd.f32 %v579, %v596
      %v598 = vmul.f32 %v444, %v488
      %600 = vrot.lane.b32.xlu0 %v598, 127
      %v601 = vpop.permute.xlu0 %600
      %v603 = vsel %vm494, %v601, 0.0
      %604 = vadd.xlane.f32.xlu0 %v603
      %v605 = vpop.xlane.xlu0 %604
      %v606 = vrot.slane %v605, 4
      %v607 = vadd.f32 %v605, %v606
      %v608 = vrot.slane %v607, 2
      %v609 = vadd.f32 %v607, %v608
      %v610 = vrot.slane %v609, 1
      %v611 = vadd.f32 %v609, %v610
      %s612 = vtos %v611
      %v613 = vstv %s612
      %v614 = vsel %vm393, %v613, 0.0
      %v615 = vadd.f32 %v597, %v614
      %v616 = vmul.f32 %v462, %v488
      %618 = vrot.lane.b32.xlu0 %v616, 127
      %v619 = vpop.permute.xlu0 %618
      %v621 = vsel %vm494, %v619, 0.0
      %622 = vadd.xlane.f32.xlu0 %v621
      %v623 = vpop.xlane.xlu0 %622
      %v624 = vrot.slane %v623, 4
      %v625 = vadd.f32 %v623, %v624
      %v626 = vrot.slane %v625, 2
      %v627 = vadd.f32 %v625, %v626
      %v628 = vrot.slane %v627, 1
      %v629 = vadd.f32 %v627, %v628
      %s630 = vtos %v629
      %v631 = vstv %s630
      %v632 = vsel %vm411, %v631, 0.0
      %v633 = vadd.f32 %v615, %v632
      %v634 = vmul.f32 %v480, %v488
      %636 = vrot.lane.b32.xlu0 %v634, 127
      %v637 = vpop.permute.xlu0 %636
      %v639 = vsel %vm494, %v637, 0.0
      %640 = vadd.xlane.f32.xlu0 %v639
      %v641 = vpop.xlane.xlu0 %640
      %v642 = vrot.slane %v641, 4
      %v643 = vadd.f32 %v641, %v642
      %v644 = vrot.slane %v643, 2
      %v645 = vadd.f32 %v643, %v644
      %v646 = vrot.slane %v645, 1
      %v647 = vadd.f32 %v645, %v646
      %s648 = vtos %v647
      %v649 = vstv %s648
      %v650 = vsel %vm429, %v649, 0.0
      %v651 = vadd.f32 %v633, %v650
      %s652 = scalar_lea.vmem %s207, 4
      %653 = vst.msk [vmem:[%s652] sm:$0x7] %vm433, %v651
      %p654 = scmp.lt.s32.totalorder %s17, 1
      %s655 = scalar_select %p654, %s17, 1
      %p656 = scmp.lt.s32.totalorder %s18, 0
      %s657 = scalar_select %p656, %s18, 0
      %s658 = smul.addr %s657, 2
      %s659 = smul.addr %s655, 2
      %s660 = sadd.s32 %s658, %s659
      %s661 = smul.addr %s660, 4
      %s662 = scalar_lea.vmem %s2, %s661
      // Predicated region
      $region29: #{exclusion_loss.4} parent=27 // pred_check
        %p663 = pneg %p101
      $region30: #{exclusion_loss.4} parent=27 // pred_check_branch
        %665 = sbr.rel (%p663) target = $region32
      $region31: #{exclusion_loss.4} parent=27 // pred_region
        _
      $region32: #{exclusion_loss.4} parent=27 // pred_fallthru
        _
    $region28: #{exclusion_loss.4} parent=5 // pred_fallthru
      _
    %p666 = scmp.le.s32.totalorder 2, %s8
    // Predicated region
    $region33: #{exclusion_loss.4} parent=5 // pred_check
      %p667 = pneg %p666
    $region34: #{exclusion_loss.4} parent=5 // pred_check_branch
      %669 = sbr.rel (%p667) target = $region36
    $region35: #{exclusion_loss.4} parent=5 // pred_region
      %s670 = ssub.s32 %s8, 2
      // Predicated region
      $region37: #{exclusion_loss.4} parent=35 // pred_check
        %p671 = pneg %p107
      $region38: #{exclusion_loss.4} parent=35 // pred_check_branch
        %673 = sbr.rel (%p671) target = $region40
      $region39: #{exclusion_loss.4} parent=35 // pred_region
        %p674 = scmp.lt.s32.totalorder %s19, 1
        %s675 = scalar_select %p674, %s19, 1
        %p676 = scmp.lt.s32.totalorder %s20, 0
        %s677 = scalar_select %p676, %s20, 0
        %s678 = smul.addr %s677, 2
        %s679 = smul.addr %s675, 2
        %s680 = sadd.s32 %s678, %s679
        %s681 = smul.addr %s680, 4
        %s682 = scalar_lea.vmem %s2, %s681
      $region40: #{exclusion_loss.4} parent=35 // pred_fallthru
        _
    $region36: #{exclusion_loss.4} parent=5 // pred_fallthru
      _
  $region6: #{exclusion_loss.4} parent=0 // loop_footer
    %s12 = sadd.s32 1, %s8
  $region7: #{exclusion_loss.4} parent=0 // loop_footer_branch
    %7 = sbr.rel target = $region3
  $region8: #{exclusion_loss.4} parent=0 // loop_exit
    _

// kernel: exclusion_loss.3
$region0: #{exclusion_loss.3}
  #allocation0 [shape = 'u32[]', space=smem, size = 0x4, offset = 0x4, fixed_abs, tag = 'smem constant byte address 0x4 - core index']
  #allocation1 [shape = 'u32[144,128]{1,0:T(1,128)}', space=vmem, size = 0x12000, scoped, tag = 'internal scratch']
  %s0 = inlined_call_operand.vmem [shape: f32[2,3,16,16], index: 0, kind: input, shape index: {}]
  %s1 = inlined_call_operand.vmem [shape: f32[2,3,16,16], index: 1, kind: input, shape index: {}]
  %s2 = inlined_call_operand.vmem [shape: f32[2,1,2,3,3], index: 2, kind: output, shape index: {}]
  %s3 = sld [smem:[#allocation0]]
  $region41: #{exclusion_loss.3} parent=0
    _
  %s5 = ssub.s32 1, %s3
  %s6 = scalar_select 0, %s5, %s3
  loop: start=0, step=1, limit=4
  $region2: #{exclusion_loss.3} parent=0 // loop_pre_header
    _
  $region3: #{exclusion_loss.3} parent=0 // loop_header
    %s8 = sphi 0, %s12
    %p9 = scmp.ge.s32.totalorder %s8, 4
    %s15 = sphi 0, %s27
    %s16 = sphi 0, %s23
    %s17 = sphi 0, %s15
    %s18 = sphi 0, %s16
    %s19 = sphi 0, %s17
    %s20 = sphi 0, %s18
    %s32 = sphi 0, %s34
    %s35 = sphi 0, %s32
    %s36 = sphi 0, %s35
    %s52 = sphi 0, %s36
    %s60 = sphi 0, %s62
    %s63 = sphi 0, %s60
    %s64 = sphi 0, %s63
    %s80 = sphi 0, %s64
    %s88 = sphi 0, %s90
    %s91 = sphi 0, %s88
    %s92 = sphi 0, %s91
    %s108 = sphi 0, %s92
  $region4: #{exclusion_loss.3} parent=0 // loop_header_branch
    %11 = sbr.rel (%p9) target = $region8
  $region5: #{exclusion_loss.3} parent=0 // loop_body
    %s13 = ssub.s32 %s8, 1
    %s14 = ssub.s32 %s8, 2
    %s21 = sadd.s32 1, %s16
    %p22 = scmp.ge.s32.totalorder %s21, 1
    %s23 = scalar_select %p22, 0, %s21
    %s24 = sadd.s32 1, %s15
    %s25 = scalar_select %p22, %s24, %s15
    %p26 = scmp.ge.s32.totalorder %s25, 2
    %s27 = scalar_select %p26, 0, %s25
    %s28 = ssub.s32 %s15, %s27
    %s29 = ssub.s32 %s16, %s23
    %s30 = sor.u32 %s28, %s29
    %p31 = scmp.eq.s32.totalorder %s30, 0
    %s33 = sadd.s32 %s32, 1
    %s34 = scalar_select %p31, %s32, %s33
    %p37 = pneg %p31
    %p38 = scmp.eq.s32.totalorder %s8, 1
    %p39 = por %p37, %p38
    %p40 = scmp.ne.s32.totalorder %s32, %s35
    %p41 = scmp.eq.s32.totalorder %s8, 0
    %p42 = por %p40, %p41
    %p43 = scmp.ne.s32.totalorder %s32, %s35
    %p44 = scmp.eq.s32.totalorder %s13, 1
    %p45 = por %p43, %p44
    %p46 = scmp.ne.s32.totalorder %s35, %s36
    %p47 = scmp.eq.s32.totalorder %s13, 0
    %p48 = por %p46, %p47
    %p49 = scmp.ne.s32.totalorder %s35, %s36
    %p50 = scmp.eq.s32.totalorder %s14, 1
    %p51 = por %p49, %p50
    %p53 = scmp.ne.s32.totalorder %s36, %s52
    %p54 = scmp.eq.s32.totalorder %s14, 0
    %p55 = por %p53, %p54
    %s56 = ssub.s32 %s15, %s27
    %s57 = ssub.s32 %s16, %s23
    %s58 = sor.u32 %s56, %s57
    %p59 = scmp.eq.s32.totalorder %s58, 0
    %s61 = sadd.s32 %s60, 1
    %s62 = scalar_select %p59, %s60, %s61
    %p65 = pneg %p59
    %p66 = scmp.eq.s32.totalorder %s8, 1
    %p67 = por %p65, %p66
    %p68 = scmp.ne.s32.totalorder %s60, %s63
    %p69 = scmp.eq.s32.totalorder %s8, 0
    %p70 = por %p68, %p69
    %p71 = scmp.ne.s32.totalorder %s60, %s63
    %p72 = scmp.eq.s32.totalorder %s13, 1
    %p73 = por %p71, %p72
    %p74 = scmp.ne.s32.totalorder %s63, %s64
    %p75 = scmp.eq.s32.totalorder %s13, 0
    %p76 = por %p74, %p75
    %p77 = scmp.ne.s32.totalorder %s63, %s64
    %p78 = scmp.eq.s32.totalorder %s14, 1
    %p79 = por %p77, %p78
    %p81 = scmp.ne.s32.totalorder %s64, %s80
    %p82 = scmp.eq.s32.totalorder %s14, 0
    %p83 = por %p81, %p82
    %s84 = ssub.s32 %s15, %s27
    %s85 = ssub.s32 %s16, %s23
    %s86 = sor.u32 %s84, %s85
    %p87 = scmp.eq.s32.totalorder %s86, 0
    %s89 = sadd.s32 %s88, 1
    %s90 = scalar_select %p87, %s88, %s89
    %p93 = pneg %p87
    %p94 = scmp.eq.s32.totalorder %s8, 1
    %p95 = por %p93, %p94
    %p96 = scmp.ne.s32.totalorder %s88, %s91
    %p97 = scmp.eq.s32.totalorder %s8, 0
    %p98 = por %p96, %p97
    %p99 = scmp.ne.s32.totalorder %s88, %s91
    %p100 = scmp.eq.s32.totalorder %s13, 1
    %p101 = por %p99, %p100
    %p102 = scmp.ne.s32.totalorder %s91, %s92
    %p103 = scmp.eq.s32.totalorder %s13, 0
    %p104 = por %p102, %p103
    %p105 = scmp.ne.s32.totalorder %s91, %s92
    %p106 = scmp.eq.s32.totalorder %s14, 1
    %p107 = por %p105, %p106
    %p109 = scmp.ne.s32.totalorder %s92, %s108
    %p110 = scmp.eq.s32.totalorder %s14, 0
    %p111 = por %p109, %p110
    %p112 = scmp.le.s32.totalorder 1, %s8
    %p113 = scmp.lt.s32.totalorder %s8, 3
    %p114 = pnand %p112, %p113
    %p115 = pneg %p114
    // Predicated region
    $region9: #{exclusion_loss.3} parent=5 // pred_check
      _
    $region10: #{exclusion_loss.3} parent=5 // pred_check_branch
      %117 = sbr.rel (%p114) target = $region12
    $region11: #{exclusion_loss.3} parent=5 // pred_region
      %s118 = ssub.s32 %s8, 1
    $region12: #{exclusion_loss.3} parent=5 // pred_fallthru
      _
    %p119 = scmp.lt.s32.totalorder %s8, 2
    // Predicated region
    $region13: #{exclusion_loss.3} parent=5 // pred_check
      %p120 = pneg %p119
    $region14: #{exclusion_loss.3} parent=5 // pred_check_branch
      %122 = sbr.rel (%p120) target = $region16
    $region15: #{exclusion_loss.3} parent=5 // pred_region
      // Predicated region
      $region17: #{exclusion_loss.3} parent=15 // pred_check
        %p123 = pneg %p42
      $region18: #{exclusion_loss.3} parent=15 // pred_check_branch
        %125 = sbr.rel (%p123) target = $region20
      $region19: #{exclusion_loss.3} parent=15 // pred_region
        %s126 = smul.u32 2, %s16
        %p127 = scmp.lt.s32.totalorder %s15, 1
        %s128 = scalar_select %p127, %s15, 1
        %p129 = scmp.lt.s32.totalorder %s126, 1
        %s130 = scalar_select %p129, %s126, 1
        %s131 = smul.addr %s128, 6
        %s132 = sadd.s32 %s130, %s131
        %s133 = smul.addr %s132, 8
        %s134 = scalar_lea.vmem %s0, %s133
        %s135 = smul.u32 2, %s16
      $region20: #{exclusion_loss.3} parent=15 // pred_fallthru
        _
      // Predicated region
      $region21: #{exclusion_loss.3} parent=15 // pred_check
        %p136 = pneg %p70
      $region22: #{exclusion_loss.3} parent=15 // pred_check_branch
        %138 = sbr.rel (%p136) target = $region24
      $region23: #{exclusion_loss.3} parent=15 // pred_region
        %s139 = smul.u32 2, %s16
        %p140 = scmp.lt.s32.totalorder %s15, 1
        %s141 = scalar_select %p140, %s15, 1
        %p142 = scmp.lt.s32.totalorder %s139, 1
        %s143 = scalar_select %p142, %s139, 1
        %s144 = smul.addr %s141, 6
        %s145 = sadd.s32 %s143, %s144
        %s146 = smul.addr %s145, 8
        %s147 = scalar_lea.vmem %s1, %s146
        %s148 = smul.u32 2, %s16
      $region24: #{exclusion_loss.3} parent=15 // pred_fallthru
        _
    $region16: #{exclusion_loss.3} parent=5 // pred_fallthru
      _
    %p149 = scmp.le.s32.totalorder 1, %s8
    %p150 = scmp.lt.s32.totalorder %s8, 3
    %p151 = pnand %p149, %p150
    %p152 = pneg %p151
    // Predicated region
    $region25: #{exclusion_loss.3} parent=5 // pred_check
      _
    $region26: #{exclusion_loss.3} parent=5 // pred_check_branch
      %154 = sbr.rel (%p151) target = $region28
    $region27: #{exclusion_loss.3} parent=5 // pred_region
      %s155 = ssub.s32 %s8, 1
      %s156 = smul.u32 2, %s18
      %p157 = scmp.lt.s32.totalorder %s17, 1
      %s158 = scalar_select %p157, %s17, 1
      %p159 = scmp.lt.s32.totalorder %s156, 1
      %s160 = scalar_select %p159, %s156, 1
      %s161 = smul.addr %s158, 6
      %s162 = sadd.s32 %s160, %s161
      %s163 = smul.addr %s162, 8
      %s164 = scalar_lea.vmem %s0, %s163
      %p165 = pneg %p48
      %p166 = pneg %p45
      %s167 = smul.u32 2, %s18
      %p168 = scmp.lt.s32.totalorder %s17, 1
      %s169 = scalar_select %p168, %s17, 1
      %p170 = scmp.lt.s32.totalorder %s167, 1
      %s171 = scalar_select %p170, %s167, 1
      %s172 = smul.addr %s169, 6
      %s173 = sadd.s32 %s171, %s172
      %s174 = smul.addr %s173, 8
      %s175 = scalar_lea.vmem %s1, %s174
      %p176 = pneg %p76
      %p177 = pneg %p73
      %p178 = pneg %p104
      %p179 = pneg %p101
      %p180 = scmp.lt.s32.totalorder %s17, 1
      %s181 = scalar_select %p180, %s17, 1
      %p182 = scmp.lt.s32.totalorder %s18, 0
      %s183 = scalar_select %p182, %s18, 0
      %s184 = smul.addr %s183, 2
      %s185 = smul.addr %s181, 2
      %s186 = sadd.s32 %s184, %s185
      %s187 = smul.addr %s186, 4
      %s188 = scalar_lea.vmem %s2, %s187
      %s189 = smul.u32 2, %s18
      %p190 = scmp.lt.s32.totalorder %s17, 1
      %s191 = scalar_select %p190, %s17, 1
      %p192 = scmp.lt.s32.totalorder %s189, 1
      %s193 = scalar_select %p192, %s189, 1
      %s194 = smul.addr %s191, 6
      %s195 = sadd.s32 %s193, %s194
      %s196 = smul.addr %s195, 8
      %s197 = scalar_lea.vmem %s0, %s196
      %s198 = smul.u32 2, %s18
      %s199 = smul.u32 2, %s18
      %p200 = scmp.lt.s32.totalorder %s17, 1
      %s201 = scalar_select %p200, %s17, 1
      %p202 = scmp.lt.s32.totalorder %s199, 1
      %s203 = scalar_select %p202, %s199, 1
      %s204 = smul.addr %s201, 6
      %s205 = sadd.s32 %s203, %s204
      %s206 = smul.addr %s205, 8
      %s207 = scalar_lea.vmem %s1, %s206
      %s208 = smul.u32 2, %s18
      %p209 = scmp.lt.s32.totalorder %s17, 1
      %s210 = scalar_select %p209, %s17, 1
      %p211 = scmp.lt.s32.totalorder %s18, 0
      %s212 = scalar_select %p211, %s18, 0
      %s213 = smul.addr %s212, 2
      %s214 = smul.addr %s210, 2
      %s215 = sadd.s32 %s213, %s214
      %s216 = smul.addr %s215, 4
      %s217 = scalar_lea.vmem %s2, %s216
      %v218 = vld [vmem:[%s197] sm:$0xff]
      %v219 = vld [vmem:[%s197 + $0x8] sm:$0xff]
      %v220 = vld [vmem:[%s207] sm:$0xff]
      %v221 = vld [vmem:[%s207 + $0x8] sm:$0xff]
      %vm224 = vcmask 1040384
      %v225 = vrot.slane %v218, 7
      %v226 = vrot.slane %v219, 7
      %v227 = vsel %vm224, %v225, %v226
      %v230 = vsub.f32 %v218, %v225
      %v231 = vsub.f32 %v219, %v227
      %v232 = vmul.f32 %v230, 0.5
      %v233 = vmul.f32 %v231, 0.5
      %v234 = vtanh.pop %v232
      %v235 = vtanh.pop %v233
      %v236 = vmul.f32 %v234, %v234
      %v237 = vmul.f32 %v235, %v235
      %v240 = vrot.slane %v220, 7
      %v241 = vrot.slane %v221, 7
      %v242 = vsel %vm224, %v240, %v241
      %v245 = vsub.f32 %v220, %v240
      %v246 = vsub.f32 %v221, %v242
      %v247 = vmul.f32 %v245, 0.5
      %v248 = vmul.f32 %v246, 0.5
      %v249 = vtanh.pop %v247
      %v250 = vtanh.pop %v248
      %v251 = vmul.f32 %v249, %v249
      %v252 = vmul.f32 %v250, %v250
      %s253 = scalar_lea.vmem %s197, 16
      %v254 = vld [vmem:[%s253] sm:$0xff]
      %v255 = vld [vmem:[%s253 + $0x8] sm:$0xff]
      %s256 = scalar_lea.vmem %s207, 16
      %v257 = vld [vmem:[%s256] sm:$0xff]
      %v258 = vld [vmem:[%s256 + $0x8] sm:$0xff]
      %v261 = vrot.slane %v254, 7
      %v262 = vrot.slane %v255, 7
      %v263 = vsel %vm224, %v261, %v262
      %v266 = vsub.f32 %v254, %v261
      %v267 = vsub.f32 %v255, %v263
      %v268 = vmul.f32 %v266, 0.5
      %v269 = vmul.f32 %v267, 0.5
      %v270 = vtanh.pop %v268
      %v271 = vtanh.pop %v269
      %v272 = vmul.f32 %v270, %v270
      %v273 = vmul.f32 %v271, %v271
      %v276 = vrot.slane %v257, 7
      %v277 = vrot.slane %v258, 7
      %v278 = vsel %vm224, %v276, %v277
      %v281 = vsub.f32 %v257, %v276
      %v282 = vsub.f32 %v258, %v278
      %v283 = vmul.f32 %v281, 0.5
      %v284 = vmul.f32 %v282, 0.5
      %v285 = vtanh.pop %v283
      %v286 = vtanh.pop %v284
      %v287 = vmul.f32 %v285, %v285
      %v288 = vmul.f32 %v286, %v286
      %s289 = scalar_lea.vmem %s197, 32
      %v290 = vld [vmem:[%s289] sm:$0xff]
      %v291 = vld [vmem:[%s289 + $0x8] sm:$0xff]
      %s292 = scalar_lea.vmem %s207, 32
      %v293 = vld [vmem:[%s292] sm:$0xff]
      %v294 = vld [vmem:[%s292 + $0x8] sm:$0xff]
      %v297 = vrot.slane %v290, 7
      %v298 = vrot.slane %v291, 7
      %v299 = vsel %vm224, %v297, %v298
      %v302 = vsub.f32 %v290, %v297
      %v303 = vsub.f32 %v291, %v299
      %v304 = vmul.f32 %v302, 0.5
      %v305 = vmul.f32 %v303, 0.5
      %v306 = vtanh.pop %v304
      %v307 = vtanh.pop %v305
      %v308 = vmul.f32 %v306, %v306
      %v309 = vmul.f32 %v307, %v307
      %v312 = vrot.slane %v293, 7
      %v313 = vrot.slane %v294, 7
      %v314 = vsel %vm224, %v312, %v313
      %v317 = vsub.f32 %v293, %v312
      %v318 = vsub.f32 %v294, %v314
      %v319 = vmul.f32 %v317, 0.5
      %v320 = vmul.f32 %v318, 0.5
      %v321 = vtanh.pop %v319
      %v322 = vtanh.pop %v320
      %v323 = vmul.f32 %v321, %v321
      %v324 = vmul.f32 %v322, %v322
      %v325 = vlaneseq
      %v326 = vshrl.u32 %v325, 7
      %v327 = vlaneseq
      %v328 = vand.u32 %v327, 127
      %v329 = vmul.f32 %v236, %v251
      %v330 = vmul.f32 %v237, %v252
      %vm333 = vcmask 1046528
      %v334 = vrot.slane %v329, 1
      %v335 = vrot.slane %v330, 1
      %v336 = vsel %vm333, %v334, %v335
      %vm339 = vcmask 130048
      %v340 = vsel %vm339, %v336, 0.0
      %vm341 = vcmask 129024
      %v342 = vsel %vm341, %v335, 0.0
      %v343 = vadd.f32 %v340, %v342
      %344 = vadd.xlane.f32.xlu0 %v343
      %v345 = vpop.xlane.xlu0 %344
      %v346 = vrot.slane %v345, 4
      %v347 = vadd.f32 %v345, %v346
      %v348 = vrot.slane %v347, 2
      %v349 = vadd.f32 %v347, %v348
      %v350 = vrot.slane %v349, 1
      %v351 = vadd.f32 %v349, %v350
      %s352 = vtos %v351
      %vm353 = vcmp.eq.s32.totalorder %v326, 0
      %vm354 = vcmp.eq.s32.totalorder %v328, 0
      %vm355 = vmand %vm353, %vm354
      %v356 = vstv %s352
      %v357 = vsel %vm355, %v356, 0.0
      %v358 = vadd.f32 %v357, 0.0
      %v359 = vmul.f32 %v272, %v251
      %v360 = vmul.f32 %v273, %v252
      %v363 = vrot.slane %v359, 1
      %v364 = vrot.slane %v360, 1
      %v365 = vsel %vm333, %v363, %v364
      %v368 = vsel %vm339, %v365, 0.0
      %v369 = vsel %vm341, %v364, 0.0
      %v370 = vadd.f32 %v368, %v369
      %371 = vadd.xlane.f32.xlu0 %v370
      %v372 = vpop.xlane.xlu0 %371
      %v373 = vrot.slane %v372, 4
      %v374 = vadd.f32 %v372, %v373
      %v375 = vrot.slane %v374, 2
      %v376 = vadd.f32 %v374, %v375
      %v377 = vrot.slane %v376, 1
      %v378 = vadd.f32 %v376, %v377
      %s379 = vtos %v378
      %vm380 = vcmp.eq.s32.totalorder %v328, 1
      %vm381 = vmand %vm353, %vm380
      %v382 = vstv %s379
      %v383 = vsel %vm381, %v382, 0.0
      %v384 = vadd.f32 %v358, %v383
      %v385 = vmul.f32 %v308, %v251
      %v386 = vmul.f32 %v309, %v252
      %v389 = vrot.slane %v385, 1
      %v390 = vrot.slane %v386, 1
      %v391 = vsel %vm333, %v389, %v390
      %v394 = vsel %vm339, %v391, 0.0
      %v395 = vsel %vm341, %v390, 0.0
      %v396 = vadd.f32 %v394, %v395
      %397 = vadd.xlane.f32.xlu0 %v396
      %v398 = vpop.xlane.xlu0 %397
      %v399 = vrot.slane %v398, 4
      %v400 = vadd.f32 %v398, %v399
      %v401 = vrot.slane %v400, 2
      %v402 = vadd.f32 %v400, %v401
      %v403 = vrot.slane %v402, 1
      %v404 = vadd.f32 %v402, %v403
      %s405 = vtos %v404
      %vm406 = vcmp.eq.s32.totalorder %v328, 2
      %vm407 = vmand %vm353, %vm406
      %v408 = vstv %s405
      %v409 = vsel %vm407, %v408, 0.0
      %v410 = vadd.f32 %v384, %v409
      %v411 = vmul.f32 %v236, %v287
      %v412 = vmul.f32 %v237, %v288
      %v415 = vrot.slane %v411, 1
      %v416 = vrot.slane %v412, 1
      %v417 = vsel %vm333, %v415, %v416
      %v420 = vsel %vm339, %v417, 0.0
      %v421 = vsel %vm341, %v416, 0.0
      %v422 = vadd.f32 %v420, %v421
      %423 = vadd.xlane.f32.xlu0 %v422
      %v424 = vpop.xlane.xlu0 %423
      %v425 = vrot.slane %v424, 4
      %v426 = vadd.f32 %v424, %v425
      %v427 = vrot.slane %v426, 2
      %v428 = vadd.f32 %v426, %v427
      %v429 = vrot.slane %v428, 1
      %v430 = vadd.f32 %v428, %v429
      %s431 = vtos %v430
      %vm432 = vcmp.eq.s32.totalorder %v326, 1
      %vm433 = vmand %vm432, %vm354
      %v434 = vstv %s431
      %v435 = vsel %vm433, %v434, 0.0
      %v436 = vadd.f32 %v410, %v435
      %v437 = vmul.f32 %v272, %v287
      %v438 = vmul.f32 %v273, %v288
      %v441 = vrot.slane %v437, 1
      %v442 = vrot.slane %v438, 1
      %v443 = vsel %vm333, %v441, %v442
      %v446 = vsel %vm339, %v443, 0.0
      %v447 = vsel %vm341, %v442, 0.0
      %v448 = vadd.f32 %v446, %v447
      %449 = vadd.xlane.f32.xlu0 %v448
      %v450 = vpop.xlane.xlu0 %449
      %v451 = vrot.slane %v450, 4
      %v452 = vadd.f32 %v450, %v451
      %v453 = vrot.slane %v452, 2
      %v454 = vadd.f32 %v452, %v453
      %v455 = vrot.slane %v454, 1
      %v456 = vadd.f32 %v454, %v455
      %s457 = vtos %v456
      %vm458 = vmand %vm432, %vm380
      %v459 = vstv %s457
      %v460 = vsel %vm458, %v459, 0.0
      %v461 = vadd.f32 %v436, %v460
      %v462 = vmul.f32 %v308, %v287
      %v463 = vmul.f32 %v309, %v288
      %v466 = vrot.slane %v462, 1
      %v467 = vrot.slane %v463, 1
      %v468 = vsel %vm333, %v466, %v467
      %v471 = vsel %vm339, %v468, 0.0
      %v472 = vsel %vm341, %v467, 0.0
      %v473 = vadd.f32 %v471, %v472
      %474 = vadd.xlane.f32.xlu0 %v473
      %v475 = vpop.xlane.xlu0 %474
      %v476 = vrot.slane %v475, 4
      %v477 = vadd.f32 %v475, %v476
      %v478 = vrot.slane %v477, 2
      %v479 = vadd.f32 %v477, %v478
      %v480 = vrot.slane %v479, 1
      %v481 = vadd.f32 %v479, %v480
      %s482 = vtos %v481
      %vm483 = vmand %vm432, %vm406
      %v484 = vstv %s482
      %v485 = vsel %vm483, %v484, 0.0
      %v486 = vadd.f32 %v461, %v485
      %v487 = vmul.f32 %v236, %v323
      %v488 = vmul.f32 %v237, %v324
      %v491 = vrot.slane %v487, 1
      %v492 = vrot.slane %v488, 1
      %v493 = vsel %vm333, %v491, %v492
      %v496 = vsel %vm339, %v493, 0.0
      %v497 = vsel %vm341, %v492, 0.0
      %v498 = vadd.f32 %v496, %v497
      %499 = vadd.xlane.f32.xlu0 %v498
      %v500 = vpop.xlane.xlu0 %499
      %v501 = vrot.slane %v500, 4
      %v502 = vadd.f32 %v500, %v501
      %v503 = vrot.slane %v502, 2
      %v504 = vadd.f32 %v502, %v503
      %v505 = vrot.slane %v504, 1
      %v506 = vadd.f32 %v504, %v505
      %s507 = vtos %v506
      %vm508 = vcmp.eq.s32.totalorder %v326, 2
      %vm509 = vmand %vm508, %vm354
      %v510 = vstv %s507
      %v511 = vsel %vm509, %v510, 0.0
      %v512 = vadd.f32 %v486, %v511
      %v513 = vmul.f32 %v272, %v323
      %v514 = vmul.f32 %v273, %v324
      %v517 = vrot.slane %v513, 1
      %v518 = vrot.slane %v514, 1
      %v519 = vsel %vm333, %v517, %v518
      %v522 = vsel %vm339, %v519, 0.0
      %v523 = vsel %vm341, %v518, 0.0
      %v524 = vadd.f32 %v522, %v523
      %525 = vadd.xlane.f32.xlu0 %v524
      %v526 = vpop.xlane.xlu0 %525
      %v527 = vrot.slane %v526, 4
      %v528 = vadd.f32 %v526, %v527
      %v529 = vrot.slane %v528, 2
      %v530 = vadd.f32 %v528, %v529
      %v531 = vrot.slane %v530, 1
      %v532 = vadd.f32 %v530, %v531
      %s533 = vtos %v532
      %vm534 = vmand %vm508, %vm380
      %v535 = vstv %s533
      %v536 = vsel %vm534, %v535, 0.0
      %v537 = vadd.f32 %v512, %v536
      %v538 = vmul.f32 %v308, %v323
      %v539 = vmul.f32 %v309, %v324
      %v542 = vrot.slane %v538, 1
      %v543 = vrot.slane %v539, 1
      %v544 = vsel %vm333, %v542, %v543
      %v547 = vsel %vm339, %v544, 0.0
      %v548 = vsel %vm341, %v543, 0.0
      %v549 = vadd.f32 %v547, %v548
      %550 = vadd.xlane.f32.xlu0 %v549
      %v551 = vpop.xlane.xlu0 %550
      %v552 = vrot.slane %v551, 4
      %v553 = vadd.f32 %v551, %v552
      %v554 = vrot.slane %v553, 2
      %v555 = vadd.f32 %v553, %v554
      %v556 = vrot.slane %v555, 1
      %v557 = vadd.f32 %v555, %v556
      %s558 = vtos %v557
      %vm559 = vmand %vm508, %vm406
      %v560 = vstv %s558
      %v561 = vsel %vm559, %v560, 0.0
      %v562 = vadd.f32 %v537, %v561
      %vm563 = vcmask 18432
      %564 = vst.msk [vmem:[%s217] sm:$0x7] %vm563, %v562
      %v565 = vld [vmem:[%s197] sm:$0xff]
      %v566 = vld [vmem:[%s197 + $0x8] sm:$0xff]
      %v567 = vld [vmem:[%s207] sm:$0xff]
      %v568 = vld [vmem:[%s207 + $0x8] sm:$0xff]
      %571 = vrot.lane.b32.xlu0 %v565, 1
      %v572 = vpop.permute.xlu0 %571
      %573 = vrot.lane.b32.xlu0 %v566, 1
      %v574 = vpop.permute.xlu0 %573
      %v577 = vsub.f32 %v565, %v572
      %v578 = vsub.f32 %v566, %v574
      %v579 = vmul.f32 %v577, 0.5
      %v580 = vmul.f32 %v578, 0.5
      %v581 = vtanh.pop %v579
      %v582 = vtanh.pop %v580
      %v583 = vmul.f32 %v581, %v581
      %v584 = vmul.f32 %v582, %v582
      %587 = vrot.lane.b32.xlu0 %v567, 1
      %v588 = vpop.permute.xlu0 %587
      %589 = vrot.lane.b32.xlu0 %v568, 1
      %v590 = vpop.permute.xlu0 %589
      %v593 = vsub.f32 %v567, %v588
      %v594 = vsub.f32 %v568, %v590
      %v595 = vmul.f32 %v593, 0.5
      %v596 = vmul.f32 %v594, 0.5
      %v597 = vtanh.pop %v595
      %v598 = vtanh.pop %v596
      %v599 = vmul.f32 %v597, %v597
      %v600 = vmul.f32 %v598, %v598
      %v601 = vld [vmem:[%s253] sm:$0xff]
      %v602 = vld [vmem:[%s253 + $0x8] sm:$0xff]
      %v603 = vld [vmem:[%s256] sm:$0xff]
      %v604 = vld [vmem:[%s256 + $0x8] sm:$0xff]
      %607 = vrot.lane.b32.xlu0 %v601, 1
      %v608 = vpop.permute.xlu0 %607
      %609 = vrot.lane.b32.xlu0 %v602, 1
      %v610 = vpop.permute.xlu0 %609
      %v613 = vsub.f32 %v601, %v608
      %v614 = vsub.f32 %v602, %v610
      %v615 = vmul.f32 %v613, 0.5
      %v616 = vmul.f32 %v614, 0.5
      %v617 = vtanh.pop %v615
      %v618 = vtanh.pop %v616
      %v619 = vmul.f32 %v617, %v617
      %v620 = vmul.f32 %v618, %v618
      %623 = vrot.lane.b32.xlu0 %v603, 1
      %v624 = vpop.permute.xlu0 %623
      %625 = vrot.lane.b32.xlu0 %v604, 1
      %v626 = vpop.permute.xlu0 %625
      %v629 = vsub.f32 %v603, %v624
      %v630 = vsub.f32 %v604, %v626
      %v631 = vmul.f32 %v629, 0.5
      %v632 = vmul.f32 %v630, 0.5
      %v633 = vtanh.pop %v631
      %v634 = vtanh.pop %v632
      %v635 = vmul.f32 %v633, %v633
      %v636 = vmul.f32 %v634, %v634
      %v637 = vld [vmem:[%s289] sm:$0xff]
      %v638 = vld [vmem:[%s289 + $0x8] sm:$0xff]
      %v639 = vld [vmem:[%s292] sm:$0xff]
      %v640 = vld [vmem:[%s292 + $0x8] sm:$0xff]
      %643 = vrot.lane.b32.xlu0 %v637, 1
      %v644 = vpop.permute.xlu0 %643
      %645 = vrot.lane.b32.xlu0 %v638, 1
      %v646 = vpop.permute.xlu0 %645
      %v649 = vsub.f32 %v637, %v644
      %v650 = vsub.f32 %v638, %v646
      %v651 = vmul.f32 %v649, 0.5
      %v652 = vmul.f32 %v650, 0.5
      %v653 = vtanh.pop %v651
      %v654 = vtanh.pop %v652
      %v655 = vmul.f32 %v653, %v653
      %v656 = vmul.f32 %v654, %v654
      %659 = vrot.lane.b32.xlu0 %v639, 1
      %v660 = vpop.permute.xlu0 %659
      %661 = vrot.lane.b32.xlu0 %v640, 1
      %v662 = vpop.permute.xlu0 %661
      %v665 = vsub.f32 %v639, %v660
      %v666 = vsub.f32 %v640, %v662
      %v667 = vmul.f32 %v665, 0.5
      %v668 = vmul.f32 %v666, 0.5
      %v669 = vtanh.pop %v667
      %v670 = vtanh.pop %v668
      %v671 = vmul.f32 %v669, %v669
      %v672 = vmul.f32 %v670, %v670
      %v673 = vmul.f32 %v583, %v599
      %v674 = vmul.f32 %v584, %v600
      %677 = vrot.lane.b32.xlu0 %v673, 127
      %v678 = vpop.permute.xlu0 %677
      %679 = vrot.lane.b32.xlu0 %v674, 127
      %v680 = vpop.permute.xlu0 %679
      %vm683 = vcmask 121856
      %v684 = vsel %vm683, %v678, 0.0
      %v685 = vsel %vm683, %v680, 0.0
      %v686 = vadd.f32 %v684, %v685
      %687 = vadd.xlane.f32.xlu0 %v686
      %v688 = vpop.xlane.xlu0 %687
      %v689 = vrot.slane %v688, 4
      %v690 = vadd.f32 %v688, %v689
      %v691 = vrot.slane %v690, 2
      %v692 = vadd.f32 %v690, %v691
      %v693 = vrot.slane %v692, 1
      %v694 = vadd.f32 %v692, %v693
      %s695 = vtos %v694
      %v696 = vstv %s695
      %v697 = vsel %vm355, %v696, 0.0
      %v698 = vadd.f32 %v697, 0.0
      %v699 = vmul.f32 %v619, %v599
      %v700 = vmul.f32 %v620, %v600
      %703 = vrot.lane.b32.xlu0 %v699, 127
      %v704 = vpop.permute.xlu0 %703
      %705 = vrot.lane.b32.xlu0 %v700, 127
      %v706 = vpop.permute.xlu0 %705
      %v709 = vsel %vm683, %v704, 0.0
      %v710 = vsel %vm683, %v706, 0.0
      %v711 = vadd.f32 %v709, %v710
      %712 = vadd.xlane.f32.xlu0 %v711
      %v713 = vpop.xlane.xlu0 %712
      %v714 = vrot.slane %v713, 4
      %v715 = vadd.f32 %v713, %v714
      %v716 = vrot.slane %v715, 2
      %v717 = vadd.f32 %v715, %v716
      %v718 = vrot.slane %v717, 1
      %v719 = vadd.f32 %v717, %v718
      %s720 = vtos %v719
      %v721 = vstv %s720
      %v722 = vsel %vm381, %v721, 0.0
      %v723 = vadd.f32 %v698, %v722
      %v724 = vmul.f32 %v655, %v599
      %v725 = vmul.f32 %v656, %v600
      %728 = vrot.lane.b32.xlu0 %v724, 127
      %v729 = vpop.permute.xlu0 %728
      %730 = vrot.lane.b32.xlu0 %v725, 127
      %v731 = vpop.permute.xlu0 %730
      %v734 = vsel %vm683, %v729, 0.0
      %v735 = vsel %vm683, %v731, 0.0
      %v736 = vadd.f32 %v734, %v735
      %737 = vadd.xlane.f32.xlu0 %v736
      %v738 = vpop.xlane.xlu0 %737
      %v739 = vrot.slane %v738, 4
      %v740 = vadd.f32 %v738, %v739
      %v741 = vrot.slane %v740, 2
      %v742 = vadd.f32 %v740, %v741
      %v743 = vrot.slane %v742, 1
      %v744 = vadd.f32 %v742, %v743
      %s745 = vtos %v744
      %v746 = vstv %s745
      %v747 = vsel %vm407, %v746, 0.0
      %v748 = vadd.f32 %v723, %v747
      %v749 = vmul.f32 %v583, %v635
      %v750 = vmul.f32 %v584, %v636
      %753 = vrot.lane.b32.xlu0 %v749, 127
      %v754 = vpop.permute.xlu0 %753
      %755 = vrot.lane.b32.xlu0 %v750, 127
      %v756 = vpop.permute.xlu0 %755
      %v759 = vsel %vm683, %v754, 0.0
      %v760 = vsel %vm683, %v756, 0.0
      %v761 = vadd.f32 %v759, %v760
      %762 = vadd.xlane.f32.xlu0 %v761
      %v763 = vpop.xlane.xlu0 %762
      %v764 = vrot.slane %v763, 4
      %v765 = vadd.f32 %v763, %v764
      %v766 = vrot.slane %v765, 2
      %v767 = vadd.f32 %v765, %v766
      %v768 = vrot.slane %v767, 1
      %v769 = vadd.f32 %v767, %v768
      %s770 = vtos %v769
      %v771 = vstv %s770
      %v772 = vsel %vm433, %v771, 0.0
      %v773 = vadd.f32 %v748, %v772
      %v774 = vmul.f32 %v619, %v635
      %v775 = vmul.f32 %v620, %v636
      %778 = vrot.lane.b32.xlu0 %v774, 127
      %v779 = vpop.permute.xlu0 %778
      %780 = vrot.lane.b32.xlu0 %v775, 127
      %v781 = vpop.permute.xlu0 %780
      %v784 = vsel %vm683, %v779, 0.0
      %v785 = vsel %vm683, %v781, 0.0
      %v786 = vadd.f32 %v784, %v785
      %787 = vadd.xlane.f32.xlu0 %v786
      %v788 = vpop.xlane.xlu0 %787
      %v789 = vrot.slane %v788, 4
      %v790 = vadd.f32 %v788, %v789
      %v791 = vrot.slane %v790, 2
      %v792 = vadd.f32 %v790, %v791
      %v793 = vrot.slane %v792, 1
      %v794 = vadd.f32 %v792, %v793
      %s795 = vtos %v794
      %v796 = vstv %s795
      %v797 = vsel %vm458, %v796, 0.0
      %v798 = vadd.f32 %v773, %v797
      %v799 = vmul.f32 %v655, %v635
      %v800 = vmul.f32 %v656, %v636
      %803 = vrot.lane.b32.xlu0 %v799, 127
      %v804 = vpop.permute.xlu0 %803
      %805 = vrot.lane.b32.xlu0 %v800, 127
      %v806 = vpop.permute.xlu0 %805
      %v809 = vsel %vm683, %v804, 0.0
      %v810 = vsel %vm683, %v806, 0.0
      %v811 = vadd.f32 %v809, %v810
      %812 = vadd.xlane.f32.xlu0 %v811
      %v813 = vpop.xlane.xlu0 %812
      %v814 = vrot.slane %v813, 4
      %v815 = vadd.f32 %v813, %v814
      %v816 = vrot.slane %v815, 2
      %v817 = vadd.f32 %v815, %v816
      %v818 = vrot.slane %v817, 1
      %v819 = vadd.f32 %v817, %v818
      %s820 = vtos %v819
      %v821 = vstv %s820
      %v822 = vsel %vm483, %v821, 0.0
      %v823 = vadd.f32 %v798, %v822
      %v824 = vmul.f32 %v583, %v671
      %v825 = vmul.f32 %v584, %v672
      %828 = vrot.lane.b32.xlu0 %v824, 127
      %v829 = vpop.permute.xlu0 %828
      %830 = vrot.lane.b32.xlu0 %v825, 127
      %v831 = vpop.permute.xlu0 %830
      %v834 = vsel %vm683, %v829, 0.0
      %v835 = vsel %vm683, %v831, 0.0
      %v836 = vadd.f32 %v834, %v835
      %837 = vadd.xlane.f32.xlu0 %v836
      %v838 = vpop.xlane.xlu0 %837
      %v839 = vrot.slane %v838, 4
      %v840 = vadd.f32 %v838, %v839
      %v841 = vrot.slane %v840, 2
      %v842 = vadd.f32 %v840, %v841
      %v843 = vrot.slane %v842, 1
      %v844 = vadd.f32 %v842, %v843
      %s845 = vtos %v844
      %v846 = vstv %s845
      %v847 = vsel %vm509, %v846, 0.0
      %v848 = vadd.f32 %v823, %v847
      %v849 = vmul.f32 %v619, %v671
      %v850 = vmul.f32 %v620, %v672
      %853 = vrot.lane.b32.xlu0 %v849, 127
      %v854 = vpop.permute.xlu0 %853
      %855 = vrot.lane.b32.xlu0 %v850, 127
      %v856 = vpop.permute.xlu0 %855
      %v859 = vsel %vm683, %v854, 0.0
      %v860 = vsel %vm683, %v856, 0.0
      %v861 = vadd.f32 %v859, %v860
      %862 = vadd.xlane.f32.xlu0 %v861
      %v863 = vpop.xlane.xlu0 %862
      %v864 = vrot.slane %v863, 4
      %v865 = vadd.f32 %v863, %v864
      %v866 = vrot.slane %v865, 2
      %v867 = vadd.f32 %v865, %v866
      %v868 = vrot.slane %v867, 1
      %v869 = vadd.f32 %v867, %v868
      %s870 = vtos %v869
      %v871 = vstv %s870
      %v872 = vsel %vm534, %v871, 0.0
      %v873 = vadd.f32 %v848, %v872
      %v874 = vmul.f32 %v655, %v671
      %v875 = vmul.f32 %v656, %v672
      %878 = vrot.lane.b32.xlu0 %v874, 127
      %v879 = vpop.permute.xlu0 %878
      %880 = vrot.lane.b32.xlu0 %v875, 127
      %v881 = vpop.permute.xlu0 %880
      %v884 = vsel %vm683, %v879, 0.0
      %v885 = vsel %vm683, %v881, 0.0
      %v886 = vadd.f32 %v884, %v885
      %887 = vadd.xlane.f32.xlu0 %v886
      %v888 = vpop.xlane.xlu0 %887
      %v889 = vrot.slane %v888, 4
      %v890 = vadd.f32 %v888, %v889
      %v891 = vrot.slane %v890, 2
      %v892 = vadd.f32 %v890, %v891
      %v893 = vrot.slane %v892, 1
      %v894 = vadd.f32 %v892, %v893
      %s895 = vtos %v894
      %v896 = vstv %s895
      %v897 = vsel %vm559, %v896, 0.0
      %v898 = vadd.f32 %v873, %v897
      %s899 = scalar_lea.vmem %s217, 4
      %900 = vst.msk [vmem:[%s899] sm:$0x7] %vm563, %v898
      %p901 = scmp.lt.s32.totalorder %s17, 1
      %s902 = scalar_select %p901, %s17, 1
      %p903 = scmp.lt.s32.totalorder %s18, 0
      %s904 = scalar_select %p903, %s18, 0
      %s905 = smul.addr %s904, 2
      %s906 = smul.addr %s902, 2
      %s907 = sadd.s32 %s905, %s906
      %s908 = smul.addr %s907, 4
      %s909 = scalar_lea.vmem %s2, %s908
      // Predicated region
      $region29: #{exclusion_loss.3} parent=27 // pred_check
        %p910 = pneg %p101
      $region30: #{exclusion_loss.3} parent=27 // pred_check_branch
        %912 = sbr.rel (%p910) target = $region32
      $region31: #{exclusion_loss.3} parent=27 // pred_region
        _
      $region32: #{exclusion_loss.3} parent=27 // pred_fallthru
        _
    $region28: #{exclusion_loss.3} parent=5 // pred_fallthru
      _
    %p913 = scmp.le.s32.totalorder 2, %s8
    // Predicated region
    $region33: #{exclusion_loss.3} parent=5 // pred_check
      %p914 = pneg %p913
    $region34: #{exclusion_loss.3} parent=5 // pred_check_branch
      %916 = sbr.rel (%p914) target = $region36
    $region35: #{exclusion_loss.3} parent=5 // pred_region
      %s917 = ssub.s32 %s8, 2
      // Predicated region
      $region37: #{exclusion_loss.3} parent=35 // pred_check
        %p918 = pneg %p107
      $region38: #{exclusion_loss.3} parent=35 // pred_check_branch
        %920 = sbr.rel (%p918) target = $region40
      $region39: #{exclusion_loss.3} parent=35 // pred_region
        %p921 = scmp.lt.s32.totalorder %s19, 1
        %s922 = scalar_select %p921, %s19, 1
        %p923 = scmp.lt.s32.totalorder %s20, 0
        %s924 = scalar_select %p923, %s20, 0
        %s925 = smul.addr %s924, 2
        %s926 = smul.addr %s922, 2
        %s927 = sadd.s32 %s925, %s926
        %s928 = smul.addr %s927, 4
        %s929 = scalar_lea.vmem %s2, %s928
      $region40: #{exclusion_loss.3} parent=35 // pred_fallthru
        _
    $region36: #{exclusion_loss.3} parent=5 // pred_fallthru
      _
  $region6: #{exclusion_loss.3} parent=0 // loop_footer
    %s12 = sadd.s32 1, %s8
  $region7: #{exclusion_loss.3} parent=0 // loop_footer_branch
    %7 = sbr.rel target = $region3
  $region8: #{exclusion_loss.3} parent=0 // loop_exit
    _

// kernel: exclusion_loss.5
$region0: #{exclusion_loss.5}
  #allocation0 [shape = 'u32[]', space=smem, size = 0x4, offset = 0x4, fixed_abs, tag = 'smem constant byte address 0x4 - core index']
  #allocation1 [shape = 'u32[144,128]{1,0:T(1,128)}', space=vmem, size = 0x12000, scoped, tag = 'internal scratch']
  %s0 = inlined_call_operand.vmem [shape: f32[2,3,4,4], index: 0, kind: input, shape index: {}]
  %s1 = inlined_call_operand.vmem [shape: f32[2,3,4,4], index: 1, kind: input, shape index: {}]
  %s2 = inlined_call_operand.vmem [shape: f32[2,1,2,3,3], index: 2, kind: output, shape index: {}]
  %s3 = sld [smem:[#allocation0]]
  $region41: #{exclusion_loss.5} parent=0
    _
  %s5 = ssub.s32 1, %s3
  %s6 = scalar_select 0, %s5, %s3
  loop: start=0, step=1, limit=4
  $region2: #{exclusion_loss.5} parent=0 // loop_pre_header
    _
  $region3: #{exclusion_loss.5} parent=0 // loop_header
    %s8 = sphi 0, %s12
    %p9 = scmp.ge.s32.totalorder %s8, 4
    %s15 = sphi 0, %s27
    %s16 = sphi 0, %s23
    %s17 = sphi 0, %s15
    %s18 = sphi 0, %s16
    %s19 = sphi 0, %s17
    %s20 = sphi 0, %s18
    %s32 = sphi 0, %s34
    %s35 = sphi 0, %s32
    %s36 = sphi 0, %s35
    %s52 = sphi 0, %s36
    %s60 = sphi 0, %s62
    %s63 = sphi 0, %s60
    %s64 = sphi 0, %s63
    %s80 = sphi 0, %s64
    %s88 = sphi 0, %s90
    %s91 = sphi 0, %s88
    %s92 = sphi 0, %s91
    %s108 = sphi 0, %s92
  $region4: #{exclusion_loss.5} parent=0 // loop_header_branch
    %11 = sbr.rel (%p9) target = $region8
  $region5: #{exclusion_loss.5} parent=0 // loop_body
    %s13 = ssub.s32 %s8, 1
    %s14 = ssub.s32 %s8, 2
    %s21 = sadd.s32 1, %s16
    %p22 = scmp.ge.s32.totalorder %s21, 1
    %s23 = scalar_select %p22, 0, %s21
    %s24 = sadd.s32 1, %s15
    %s25 = scalar_select %p22, %s24, %s15
    %p26 = scmp.ge.s32.totalorder %s25, 2
    %s27 = scalar_select %p26, 0, %s25
    %s28 = ssub.s32 %s15, %s27
    %s29 = ssub.s32 %s16, %s23
    %s30 = sor.u32 %s28, %s29
    %p31 = scmp.eq.s32.totalorder %s30, 0
    %s33 = sadd.s32 %s32, 1
    %s34 = scalar_select %p31, %s32, %s33
    %p37 = pneg %p31
    %p38 = scmp.eq.s32.totalorder %s8, 1
    %p39 = por %p37, %p38
    %p40 = scmp.ne.s32.totalorder %s32, %s35
    %p41 = scmp.eq.s32.totalorder %s8, 0
    %p42 = por %p40, %p41
    %p43 = scmp.ne.s32.totalorder %s32, %s35
    %p44 = scmp.eq.s32.totalorder %s13, 1
    %p45 = por %p43, %p44
    %p46 = scmp.ne.s32.totalorder %s35, %s36
    %p47 = scmp.eq.s32.totalorder %s13, 0
    %p48 = por %p46, %p47
    %p49 = scmp.ne.s32.totalorder %s35, %s36
    %p50 = scmp.eq.s32.totalorder %s14, 1
    %p51 = por %p49, %p50
    %p53 = scmp.ne.s32.totalorder %s36, %s52
    %p54 = scmp.eq.s32.totalorder %s14, 0
    %p55 = por %p53, %p54
    %s56 = ssub.s32 %s15, %s27
    %s57 = ssub.s32 %s16, %s23
    %s58 = sor.u32 %s56, %s57
    %p59 = scmp.eq.s32.totalorder %s58, 0
    %s61 = sadd.s32 %s60, 1
    %s62 = scalar_select %p59, %s60, %s61
    %p65 = pneg %p59
    %p66 = scmp.eq.s32.totalorder %s8, 1
    %p67 = por %p65, %p66
    %p68 = scmp.ne.s32.totalorder %s60, %s63
    %p69 = scmp.eq.s32.totalorder %s8, 0
    %p70 = por %p68, %p69
    %p71 = scmp.ne.s32.totalorder %s60, %s63
    %p72 = scmp.eq.s32.totalorder %s13, 1
    %p73 = por %p71, %p72
    %p74 = scmp.ne.s32.totalorder %s63, %s64
    %p75 = scmp.eq.s32.totalorder %s13, 0
    %p76 = por %p74, %p75
    %p77 = scmp.ne.s32.totalorder %s63, %s64
    %p78 = scmp.eq.s32.totalorder %s14, 1
    %p79 = por %p77, %p78
    %p81 = scmp.ne.s32.totalorder %s64, %s80
    %p82 = scmp.eq.s32.totalorder %s14, 0
    %p83 = por %p81, %p82
    %s84 = ssub.s32 %s15, %s27
    %s85 = ssub.s32 %s16, %s23
    %s86 = sor.u32 %s84, %s85
    %p87 = scmp.eq.s32.totalorder %s86, 0
    %s89 = sadd.s32 %s88, 1
    %s90 = scalar_select %p87, %s88, %s89
    %p93 = pneg %p87
    %p94 = scmp.eq.s32.totalorder %s8, 1
    %p95 = por %p93, %p94
    %p96 = scmp.ne.s32.totalorder %s88, %s91
    %p97 = scmp.eq.s32.totalorder %s8, 0
    %p98 = por %p96, %p97
    %p99 = scmp.ne.s32.totalorder %s88, %s91
    %p100 = scmp.eq.s32.totalorder %s13, 1
    %p101 = por %p99, %p100
    %p102 = scmp.ne.s32.totalorder %s91, %s92
    %p103 = scmp.eq.s32.totalorder %s13, 0
    %p104 = por %p102, %p103
    %p105 = scmp.ne.s32.totalorder %s91, %s92
    %p106 = scmp.eq.s32.totalorder %s14, 1
    %p107 = por %p105, %p106
    %p109 = scmp.ne.s32.totalorder %s92, %s108
    %p110 = scmp.eq.s32.totalorder %s14, 0
    %p111 = por %p109, %p110
    %p112 = scmp.le.s32.totalorder 1, %s8
    %p113 = scmp.lt.s32.totalorder %s8, 3
    %p114 = pnand %p112, %p113
    %p115 = pneg %p114
    // Predicated region
    $region9: #{exclusion_loss.5} parent=5 // pred_check
      _
    $region10: #{exclusion_loss.5} parent=5 // pred_check_branch
      %117 = sbr.rel (%p114) target = $region12
    $region11: #{exclusion_loss.5} parent=5 // pred_region
      %s118 = ssub.s32 %s8, 1
    $region12: #{exclusion_loss.5} parent=5 // pred_fallthru
      _
    %p119 = scmp.lt.s32.totalorder %s8, 2
    // Predicated region
    $region13: #{exclusion_loss.5} parent=5 // pred_check
      %p120 = pneg %p119
    $region14: #{exclusion_loss.5} parent=5 // pred_check_branch
      %122 = sbr.rel (%p120) target = $region16
    $region15: #{exclusion_loss.5} parent=5 // pred_region
      // Predicated region
      $region17: #{exclusion_loss.5} parent=15 // pred_check
        %p123 = pneg %p42
      $region18: #{exclusion_loss.5} parent=15 // pred_check_branch
        %125 = sbr.rel (%p123) target = $region20
      $region19: #{exclusion_loss.5} parent=15 // pred_region
        %p126 = scmp.lt.s32.totalorder %s15, 1
        %s127 = scalar_select %p126, %s15, 1
        %p128 = scmp.lt.s32.totalorder %s16, 0
        %s129 = scalar_select %p128, %s16, 0
        %s130 = smul.addr %s127, 3
        %s131 = sadd.s32 %s129, %s130
        %s132 = smul.addr %s131, 4
        %s133 = scalar_lea.vmem %s0, %s132
      $region20: #{exclusion_loss.5} parent=15 // pred_fallthru
        _
      // Predicated region
      $region21: #{exclusion_loss.5} parent=15 // pred_check
        %p134 = pneg %p70
      $region22: #{exclusion_loss.5} parent=15 // pred_check_branch
        %136 = sbr.rel (%p134) target = $region24
      $region23: #{exclusion_loss.5} parent=15 // pred_region
        %p137 = scmp.lt.s32.totalorder %s15, 1
        %s138 = scalar_select %p137, %s15, 1
        %p139 = scmp.lt.s32.totalorder %s16, 0
        %s140 = scalar_select %p139, %s16, 0
        %s141 = smul.addr %s138, 3
        %s142 = sadd.s32 %s140, %s141
        %s143 = smul.addr %s142, 4
        %s144 = scalar_lea.vmem %s1, %s143
      $region24: #{exclusion_loss.5} parent=15 // pred_fallthru
        _
    $region16: #{exclusion_loss.5} parent=5 // pred_fallthru
      _
    %p145 = scmp.le.s32.totalorder 1, %s8
    %p146 = scmp.lt.s32.totalorder %s8, 3
    %p147 = pnand %p145, %p146
    %p148 = pneg %p147
    // Predicated region
    $region25: #{exclusion_loss.5} parent=5 // pred_check
      _
    $region26: #{exclusion_loss.5} parent=5 // pred_check_branch
      %150 = sbr.rel (%p147) target = $region28
    $region27: #{exclusion_loss.5} parent=5 // pred_region
      %s151 = ssub.s32 %s8, 1
      %p152 = scmp.lt.s32.totalorder %s17, 1
      %s153 = scalar_select %p152, %s17, 1
      %p154 = scmp.lt.s32.totalorder %s18, 0
      %s155 = scalar_select %p154, %s18, 0
      %s156 = smul.addr %s153, 3
      %s157 = sadd.s32 %s155, %s156
      %s158 = smul.addr %s157, 4
      %s159 = scalar_lea.vmem %s0, %s158
      %p160 = pneg %p48
      %p161 = pneg %p45
      %p162 = scmp.lt.s32.totalorder %s17, 1
      %s163 = scalar_select %p162, %s17, 1
      %p164 = scmp.lt.s32.totalorder %s18, 0
      %s165 = scalar_select %p164, %s18, 0
      %s166 = smul.addr %s163, 3
      %s167 = sadd.s32 %s165, %s166
      %s168 = smul.addr %s167, 4
      %s169 = scalar_lea.vmem %s1, %s168
      %p170 = pneg %p76
      %p171 = pneg %p73
      %p172 = pneg %p104
      %p173 = pneg %p101
      %p174 = scmp.lt.s32.totalorder %s17, 1
      %s175 = scalar_select %p174, %s17, 1
      %p176 = scmp.lt.s32.totalorder %s18, 0
      %s177 = scalar_select %p176, %s18, 0
      %s178 = smul.addr %s177, 2
      %s179 = smul.addr %s175, 2
      %s180 = sadd.s32 %s178, %s179
      %s181 = smul.addr %s180, 4
      %s182 = scalar_lea.vmem %s2, %s181
      %p183 = scmp.lt.s32.totalorder %s17, 1
      %s184 = scalar_select %p183, %s17, 1
      %p185 = scmp.lt.s32.totalorder %s18, 0
      %s186 = scalar_select %p185, %s18, 0
      %s187 = smul.addr %s184, 3
      %s188 = sadd.s32 %s186, %s187
      %s189 = smul.addr %s188, 4
      %s190 = scalar_lea.vmem %s0, %s189
      %p191 = scmp.lt.s32.totalorder %s17, 1
      %s192 = scalar_select %p191, %s17, 1
      %p193 = scmp.lt.s32.totalorder %s18, 0
      %s194 = scalar_select %p193, %s18, 0
      %s195 = smul.addr %s192, 3
      %s196 = sadd.s32 %s194, %s195
      %s197 = smul.addr %s196, 4
      %s198 = scalar_lea.vmem %s1, %s197
      %p199 = scmp.lt.s32.totalorder %s17, 1
      %s200 = scalar_select %p199, %s17, 1
      %p201 = scmp.lt.s32.totalorder %s18, 0
      %s202 = scalar_select %p201, %s18, 0
      %s203 = smul.addr %s202, 2
      %s204 = smul.addr %s200, 2
      %s205 = sadd.s32 %s203, %s204
      %s206 = smul.addr %s205, 4
      %s207 = scalar_lea.vmem %s2, %s206
      %v208 = vld [vmem:[%s190] sm:$0xf]
      %v209 = vld [vmem:[%s198] sm:$0xf]
      %v211 = vrot.slane %v208, 7
      %v213 = vsub.f32 %v208, %v211
      %v214 = vmul.f32 %v213, 0.5
      %v215 = vtanh.pop %v214
      %v216 = vmul.f32 %v215, %v215
      %v218 = vrot.slane %v209, 7
      %v220 = vsub.f32 %v209, %v218
      %v221 = vmul.f32 %v220, 0.5
      %v222 = vtanh.pop %v221
      %v223 = vmul.f32 %v222, %v222
      %s224 = scalar_lea.vmem %s190, 4
      %v225 = vld [vmem:[%s224] sm:$0xf]
      %s226 = scalar_lea.vmem %s198, 4
      %v227 = vld [vmem:[%s226] sm:$0xf]
      %v229 = vrot.slane %v225, 7
      %v231 = vsub.f32 %v225, %v229
      %v232 = vmul.f32 %v231, 0.5
      %v233 = vtanh.pop %v232
      %v234 = vmul.f32 %v233, %v233
      %v236 = vrot.slane %v227, 7
      %v238 = vsub.f32 %v227, %v236
      %v239 = vmul.f32 %v238, 0.5
      %v240 = vtanh.pop %v239
      %v241 = vmul.f32 %v240, %v240
      %s242 = scalar_lea.vmem %s190, 8
      %v243 = vld [vmem:[%s242] sm:$0xf]
      %s244 = scalar_lea.vmem %s198, 8
      %v245 = vld [vmem:[%s244] sm:$0xf]
      %v247 = vrot.slane %v243, 7
      %v249 = vsub.f32 %v243, %v247
      %v250 = vmul.f32 %v249, 0.5
      %v251 = vtanh.pop %v250
      %v252 = vmul.f32 %v251, %v251
      %v254 = vrot.slane %v245, 7
      %v256 = vsub.f32 %v245, %v254
      %v257 = vmul.f32 %v256, 0.5
      %v258 = vtanh.pop %v257
      %v259 = vmul.f32 %v258, %v258
      %v260 = vlaneseq
      %v261 = vshrl.u32 %v260, 7
      %v262 = vlaneseq
      %v263 = vand.u32 %v262, 127
      %v264 = vmul.f32 %v216, %v223
      %v266 = vrot.slane %v264, 1
      %vm268 = vcmask 26624
      %v269 = vsel %vm268, %v266, 0.0
      %270 = vadd.xlane.f32.xlu0 %v269
      %v271 = vpop.xlane.xlu0 %270
      %v272 = vrot.slane %v271, 4
      %v273 = vadd.f32 %v271, %v272
      %v274 = vrot.slane %v273, 2
      %v275 = vadd.f32 %v273, %v274
      %v276 = vrot.slane %v275, 1
      %v277 = vadd.f32 %v275, %v276
      %s278 = vtos %v277
      %vm279 = vcmp.eq.s32.totalorder %v261, 0
      %vm280 = vcmp.eq.s32.totalorder %v263, 0
      %vm281 = vmand %vm279, %vm280
      %v282 = vstv %s278
      %v283 = vsel %vm281, %v282, 0.0
      %v284 = vadd.f32 %v283, 0.0
      %v285 = vmul.f32 %v234, %v223
      %v287 = vrot.slane %v285, 1
      %v289 = vsel %vm268, %v287, 0.0
      %290 = vadd.xlane.f32.xlu0 %v289
      %v291 = vpop.xlane.xlu0 %290
      %v292 = vrot.slane %v291, 4
      %v293 = vadd.f32 %v291, %v292
      %v294 = vrot.slane %v293, 2
      %v295 = vadd.f32 %v293, %v294
      %v296 = vrot.slane %v295, 1
      %v297 = vadd.f32 %v295, %v296
      %s298 = vtos %v297
      %vm299 = vcmp.eq.s32.totalorder %v263, 1
      %vm300 = vmand %vm279, %vm299
      %v301 = vstv %s298
      %v302 = vsel %vm300, %v301, 0.0
      %v303 = vadd.f32 %v284, %v302
      %v304 = vmul.f32 %v252, %v223
      %v306 = vrot.slane %v304, 1
      %v308 = vsel %vm268, %v306, 0.0
      %309 = vadd.xlane.f32.xlu0 %v308
      %v310 = vpop.xlane.xlu0 %309
      %v311 = vrot.slane %v310, 4
      %v312 = vadd.f32 %v310, %v311
      %v313 = vrot.slane %v312, 2
      %v314 = vadd.f32 %v312, %v313
      %v315 = vrot.slane %v314, 1
      %v316 = vadd.f32 %v314, %v315
      %s317 = vtos %v316
      %vm318 = vcmp.eq.s32.totalorder %v263, 2
      %vm319 = vmand %vm279, %vm318
      %v320 = vstv %s317
      %v321 = vsel %vm319, %v320, 0.0
      %v322 = vadd.f32 %v303, %v321
      %v323 = vmul.f32 %v216, %v241
      %v325 = vrot.slane %v323, 1
      %v327 = vsel %vm268, %v325, 0.0
      %328 = vadd.xlane.f32.xlu0 %v327
      %v329 = vpop.xlane.xlu0 %328
      %v330 = vrot.slane %v329, 4
      %v331 = vadd.f32 %v329, %v330
      %v332 = vrot.slane %v331, 2
      %v333 = vadd.f32 %v331, %v332
      %v334 = vrot.slane %v333, 1
      %v335 = vadd.f32 %v333, %v334
      %s336 = vtos %v335
      %vm337 = vcmp.eq.s32.totalorder %v261, 1
      %vm338 = vmand %vm337, %vm280
      %v339 = vstv %s336
      %v340 = vsel %vm338, %v339, 0.0
      %v341 = vadd.f32 %v322, %v340
      %v342 = vmul.f32 %v234, %v241
      %v344 = vrot.slane %v342, 1
      %v346 = vsel %vm268, %v344, 0.0
      %347 = vadd.xlane.f32.xlu0 %v346
      %v348 = vpop.xlane.xlu0 %347
      %v349 = vrot.slane %v348, 4
      %v350 = vadd.f32 %v348, %v349
      %v351 = vrot.slane %v350, 2
      %v352 = vadd.f32 %v350, %v351
      %v353 = vrot.slane %v352, 1
      %v354 = vadd.f32 %v352, %v353
      %s355 = vtos %v354
      %vm356 = vmand %vm337, %vm299
      %v357 = vstv %s355
      %v358 = vsel %vm356, %v357, 0.0
      %v359 = vadd.f32 %v341, %v358
      %v360 = vmul.f32 %v252, %v241
      %v362 = vrot.slane %v360, 1
      %v364 = vsel %vm268, %v362, 0.0
      %365 = vadd.xlane.f32.xlu0 %v364
      %v366 = vpop.xlane.xlu0 %365
      %v367 = vrot.slane %v366, 4
      %v368 = vadd.f32 %v366, %v367
      %v369 = vrot.slane %v368, 2
      %v370 = vadd.f32 %v368, %v369
      %v371 = vrot.slane %v370, 1
      %v372 = vadd.f32 %v370, %v371
      %s373 = vtos %v372
      %vm374 = vmand %vm337, %vm318
      %v375 = vstv %s373
      %v376 = vsel %vm374, %v375, 0.0
      %v377 = vadd.f32 %v359, %v376
      %v378 = vmul.f32 %v216, %v259
      %v380 = vrot.slane %v378, 1
      %v382 = vsel %vm268, %v380, 0.0
      %383 = vadd.xlane.f32.xlu0 %v382
      %v384 = vpop.xlane.xlu0 %383
      %v385 = vrot.slane %v384, 4
      %v386 = vadd.f32 %v384, %v385
      %v387 = vrot.slane %v386, 2
      %v388 = vadd.f32 %v386, %v387
      %v389 = vrot.slane %v388, 1
      %v390 = vadd.f32 %v388, %v389
      %s391 = vtos %v390
      %vm392 = vcmp.eq.s32.totalorder %v261, 2
      %vm393 = vmand %vm392, %vm280
      %v394 = vstv %s391
      %v395 = vsel %vm393, %v394, 0.0
      %v396 = vadd.f32 %v377, %v395
      %v397 = vmul.f32 %v234, %v259
      %v399 = vrot.slane %v397, 1
      %v401 = vsel %vm268, %v399, 0.0
      %402 = vadd.xlane.f32.xlu0 %v401
      %v403 = vpop.xlane.xlu0 %402
      %v404 = vrot.slane %v403, 4
      %v405 = vadd.f32 %v403, %v404
      %v406 = vrot.slane %v405, 2
      %v407 = vadd.f32 %v405, %v406
      %v408 = vrot.slane %v407, 1
      %v409 = vadd.f32 %v407, %v408
      %s410 = vtos %v409
      %vm411 = vmand %vm392, %vm299
      %v412 = vstv %s410
      %v413 = vsel %vm411, %v412, 0.0
      %v414 = vadd.f32 %v396, %v413
      %v415 = vmul.f32 %v252, %v259
      %v417 = vrot.slane %v415, 1
      %v419 = vsel %vm268, %v417, 0.0
      %420 = vadd.xlane.f32.xlu0 %v419
      %v421 = vpop.xlane.xlu0 %420
      %v422 = vrot.slane %v421, 4
      %v423 = vadd.f32 %v421, %v422
      %v424 = vrot.slane %v423, 2
      %v425 = vadd.f32 %v423, %v424
      %v426 = vrot.slane %v425, 1
      %v427 = vadd.f32 %v425, %v426
      %s428 = vtos %v427
      %vm429 = vmand %vm392, %vm318
      %v430 = vstv %s428
      %v431 = vsel %vm429, %v430, 0.0
      %v432 = vadd.f32 %v414, %v431
      %vm433 = vcmask 18432
      %434 = vst.msk [vmem:[%s207] sm:$0x7] %vm433, %v432
      %v435 = vld [vmem:[%s190] sm:$0xf]
      %v436 = vld [vmem:[%s198] sm:$0xf]
      %438 = vrot.lane.b32.xlu0 %v435, 1
      %v439 = vpop.permute.xlu0 %438
      %v441 = vsub.f32 %v435, %v439
      %v442 = vmul.f32 %v441, 0.5
      %v443 = vtanh.pop %v442
      %v444 = vmul.f32 %v443, %v443
      %446 = vrot.lane.b32.xlu0 %v436, 1
      %v447 = vpop.permute.xlu0 %446
      %v449 = vsub.f32 %v436, %v447
      %v450 = vmul.f32 %v449, 0.5
      %v451 = vtanh.pop %v450
      %v452 = vmul.f32 %v451, %v451
      %v453 = vld [vmem:[%s224] sm:$0xf]
      %v454 = vld [vmem:[%s226] sm:$0xf]
      %456 = vrot.lane.b32.xlu0 %v453, 1
      %v457 = vpop.permute.xlu0 %456
      %v459 = vsub.f32 %v453, %v457
      %v460 = vmul.f32 %v459, 0.5
      %v461 = vtanh.pop %v460
      %v462 = vmul.f32 %v461, %v461
      %464 = vrot.lane.b32.xlu0 %v454, 1
      %v465 = vpop.permute.xlu0 %464
      %v467 = vsub.f32 %v454, %v465
      %v468 = vmul.f32 %v467, 0.5
      %v469 = vtanh.pop %v468
      %v470 = vmul.f32 %v469, %v469
      %v471 = vld [vmem:[%s242] sm:$0xf]
      %v472 = vld [vmem:[%s244] sm:$0xf]
      %474 = vrot.lane.b32.xlu0 %v471, 1
      %v475 = vpop.permute.xlu0 %474
      %v477 = vsub.f32 %v471, %v475
      %v478 = vmul.f32 %v477, 0.5
      %v479 = vtanh.pop %v478
      %v480 = vmul.f32 %v479, %v479
      %482 = vrot.lane.b32.xlu0 %v472, 1
      %v483 = vpop.permute.xlu0 %482
      %v485 = vsub.f32 %v472, %v483
      %v486 = vmul.f32 %v485, 0.5
      %v487 = vtanh.pop %v486
      %v488 = vmul.f32 %v487, %v487
      %v489 = vmul.f32 %v444, %v452
      %491 = vrot.lane.b32.xlu0 %v489, 127
      %v492 = vpop.permute.xlu0 %491
      %vm494 = vcmask 19456
      %v495 = vsel %vm494, %v492, 0.0
      %496 = vadd.xlane.f32.xlu0 %v495
      %v497 = vpop.xlane.xlu0 %496
      %v498 = vrot.slane %v497, 4
      %v499 = vadd.f32 %v497, %v498
      %v500 = vrot.slane %v499, 2
      %v501 = vadd.f32 %v499, %v500
      %v502 = vrot.slane %v501, 1
      %v503 = vadd.f32 %v501, %v502
      %s504 = vtos %v503
      %v505 = vstv %s504
      %v506 = vsel %vm281, %v505, 0.0
      %v507 = vadd.f32 %v506, 0.0
      %v508 = vmul.f32 %v462, %v452
      %510 = vrot.lane.b32.xlu0 %v508, 127
      %v511 = vpop.permute.xlu0 %510
      %v513 = vsel %vm494, %v511, 0.0
      %514 = vadd.xlane.f32.xlu0 %v513
      %v515 = vpop.xlane.xlu0 %514
      %v516 = vrot.slane %v515, 4
      %v517 = vadd.f32 %v515, %v516
      %v518 = vrot.slane %v517, 2
      %v519 = vadd.f32 %v517, %v518
      %v520 = vrot.slane %v519, 1
      %v521 = vadd.f32 %v519, %v520
      %s522 = vtos %v521
      %v523 = vstv %s522
      %v524 = vsel %vm300, %v523, 0.0
      %v525 = vadd.f32 %v507, %v524
      %v526 = vmul.f32 %v480, %v452
      %528 = vrot.lane.b32.xlu0 %v526, 127
      %v529 = vpop.permute.xlu0 %528
      %v531 = vsel %vm494, %v529, 0.0
      %532 = vadd.xlane.f32.xlu0 %v531
      %v533 = vpop.xlane.xlu0 %532
      %v534 = vrot.slane %v533, 4
      %v535 = vadd.f32 %v533, %v534
      %v536 = vrot.slane %v535, 2
      %v537 = vadd.f32 %v535, %v536
      %v538 = vrot.slane %v537, 1
      %v539 = vadd.f32 %v537, %v538
      %s540 = vtos %v539
      %v541 = vstv %s540
      %v542 = vsel %vm319, %v541, 0.0
      %v543 = vadd.f32 %v525, %v542
      %v544 = vmul.f32 %v444, %v470
      %546 = vrot.lane.b32.xlu0 %v544, 127
      %v547 = vpop.permute.xlu0 %546
      %v549 = vsel %vm494, %v547, 0.0
      %550 = vadd.xlane.f32.xlu0 %v549
      %v551 = vpop.xlane.xlu0 %550
      %v552 = vrot.slane %v551, 4
      %v553 = vadd.f32 %v551, %v552
      %v554 = vrot.slane %v553, 2
      %v555 = vadd.f32 %v553, %v554
      %v556 = vrot.slane %v555, 1
      %v557 = vadd.f32 %v555, %v556
      %s558 = vtos %v557
      %v559 = vstv %s558
      %v560 = vsel %vm338, %v559, 0.0
      %v561 = vadd.f32 %v543, %v560
      %v562 = vmul.f32 %v462, %v470
      %564 = vrot.lane.b32.xlu0 %v562, 127
      %v565 = vpop.permute.xlu0 %564
      %v567 = vsel %vm494, %v565, 0.0
      %568 = vadd.xlane.f32.xlu0 %v567
      %v569 = vpop.xlane.xlu0 %568
      %v570 = vrot.slane %v569, 4
      %v571 = vadd.f32 %v569, %v570
      %v572 = vrot.slane %v571, 2
      %v573 = vadd.f32 %v571, %v572
      %v574 = vrot.slane %v573, 1
      %v575 = vadd.f32 %v573, %v574
      %s576 = vtos %v575
      %v577 = vstv %s576
      %v578 = vsel %vm356, %v577, 0.0
      %v579 = vadd.f32 %v561, %v578
      %v580 = vmul.f32 %v480, %v470
      %582 = vrot.lane.b32.xlu0 %v580, 127
      %v583 = vpop.permute.xlu0 %582
      %v585 = vsel %vm494, %v583, 0.0
      %586 = vadd.xlane.f32.xlu0 %v585
      %v587 = vpop.xlane.xlu0 %586
      %v588 = vrot.slane %v587, 4
      %v589 = vadd.f32 %v587, %v588
      %v590 = vrot.slane %v589, 2
      %v591 = vadd.f32 %v589, %v590
      %v592 = vrot.slane %v591, 1
      %v593 = vadd.f32 %v591, %v592
      %s594 = vtos %v593
      %v595 = vstv %s594
      %v596 = vsel %vm374, %v595, 0.0
      %v597 = vadd.f32 %v579, %v596
      %v598 = vmul.f32 %v444, %v488
      %600 = vrot.lane.b32.xlu0 %v598, 127
      %v601 = vpop.permute.xlu0 %600
      %v603 = vsel %vm494, %v601, 0.0
      %604 = vadd.xlane.f32.xlu0 %v603
      %v605 = vpop.xlane.xlu0 %604
      %v606 = vrot.slane %v605, 4
      %v607 = vadd.f32 %v605, %v606
      %v608 = vrot.slane %v607, 2
      %v609 = vadd.f32 %v607, %v608
      %v610 = vrot.slane %v609, 1
      %v611 = vadd.f32 %v609, %v610
      %s612 = vtos %v611
      %v613 = vstv %s612
      %v614 = vsel %vm393, %v613, 0.0
      %v615 = vadd.f32 %v597, %v614
      %v616 = vmul.f32 %v462, %v488
      %618 = vrot.lane.b32.xlu0 %v616, 127
      %v619 = vpop.permute.xlu0 %618
      %v621 = vsel %vm494, %v619, 0.0
      %622 = vadd.xlane.f32.xlu0 %v621
      %v623 = vpop.xlane.xlu0 %622
      %v624 = vrot.slane %v623, 4
      %v625 = vadd.f32 %v623, %v624
      %v626 = vrot.slane %v625, 2
      %v627 = vadd.f32 %v625, %v626
      %v628 = vrot.slane %v627, 1
      %v629 = vadd.f32 %v627, %v628
      %s630 = vtos %v629
      %v631 = vstv %s630
      %v632 = vsel %vm411, %v631, 0.0
      %v633 = vadd.f32 %v615, %v632
      %v634 = vmul.f32 %v480, %v488
      %636 = vrot.lane.b32.xlu0 %v634, 127
      %v637 = vpop.permute.xlu0 %636
      %v639 = vsel %vm494, %v637, 0.0
      %640 = vadd.xlane.f32.xlu0 %v639
      %v641 = vpop.xlane.xlu0 %640
      %v642 = vrot.slane %v641, 4
      %v643 = vadd.f32 %v641, %v642
      %v644 = vrot.slane %v643, 2
      %v645 = vadd.f32 %v643, %v644
      %v646 = vrot.slane %v645, 1
      %v647 = vadd.f32 %v645, %v646
      %s648 = vtos %v647
      %v649 = vstv %s648
      %v650 = vsel %vm429, %v649, 0.0
      %v651 = vadd.f32 %v633, %v650
      %s652 = scalar_lea.vmem %s207, 4
      %653 = vst.msk [vmem:[%s652] sm:$0x7] %vm433, %v651
      %p654 = scmp.lt.s32.totalorder %s17, 1
      %s655 = scalar_select %p654, %s17, 1
      %p656 = scmp.lt.s32.totalorder %s18, 0
      %s657 = scalar_select %p656, %s18, 0
      %s658 = smul.addr %s657, 2
      %s659 = smul.addr %s655, 2
      %s660 = sadd.s32 %s658, %s659
      %s661 = smul.addr %s660, 4
      %s662 = scalar_lea.vmem %s2, %s661
      // Predicated region
      $region29: #{exclusion_loss.5} parent=27 // pred_check
        %p663 = pneg %p101
      $region30: #{exclusion_loss.5} parent=27 // pred_check_branch
        %665 = sbr.rel (%p663) target = $region32
      $region31: #{exclusion_loss.5} parent=27 // pred_region
        _
      $region32: #{exclusion_loss.5} parent=27 // pred_fallthru
        _
    $region28: #{exclusion_loss.5} parent=5 // pred_fallthru
      _
    %p666 = scmp.le.s32.totalorder 2, %s8
    // Predicated region
    $region33: #{exclusion_loss.5} parent=5 // pred_check
      %p667 = pneg %p666
    $region34: #{exclusion_loss.5} parent=5 // pred_check_branch
      %669 = sbr.rel (%p667) target = $region36
    $region35: #{exclusion_loss.5} parent=5 // pred_region
      %s670 = ssub.s32 %s8, 2
      // Predicated region
      $region37: #{exclusion_loss.5} parent=35 // pred_check
        %p671 = pneg %p107
      $region38: #{exclusion_loss.5} parent=35 // pred_check_branch
        %673 = sbr.rel (%p671) target = $region40
      $region39: #{exclusion_loss.5} parent=35 // pred_region
        %p674 = scmp.lt.s32.totalorder %s19, 1
        %s675 = scalar_select %p674, %s19, 1
        %p676 = scmp.lt.s32.totalorder %s20, 0
        %s677 = scalar_select %p676, %s20, 0
        %s678 = smul.addr %s677, 2
        %s679 = smul.addr %s675, 2
        %s680 = sadd.s32 %s678, %s679
        %s681 = smul.addr %s680, 4
        %s682 = scalar_lea.vmem %s2, %s681
      $region40: #{exclusion_loss.5} parent=35 // pred_fallthru
        _
    $region36: #{exclusion_loss.5} parent=5 // pred_fallthru
      _
  $region6: #{exclusion_loss.5} parent=0 // loop_footer
    %s12 = sadd.s32 1, %s8
  $region7: #{exclusion_loss.5} parent=0 // loop_footer_branch
    %7 = sbr.rel target = $region3
  $region8: #{exclusion_loss.5} parent=0 // loop_exit
    _

</llo_original>
